<compile_context>
chip_gen: v5e
topology: v5e:2x2
jax: 0.10.0
libtpu: 0.0.40
codegen_flags: <defaults>
</compile_context>

<pallas_src>
import jax
import jax.numpy as jnp
from jax.experimental import pallas as pl
from jax.experimental.pallas import tpu as pltpu

EPS = 1e-5


def _conv_stats_kernel(x_ref, w_ref, y_ref, sum_ref, ssq_ref):
    # x_ref:   (C_in, HW)  f32   one batch image (batch dim squeezed by BlockSpec)
    # w_ref:   (C_out, C_in) bf16, resident across the whole grid
    # y_ref:   (C_out, HW) f32   conv output for this image
    # sum_ref: (C_out, 1)  f32   per-channel sum   (resident accumulator)
    # ssq_ref: (C_out, 1)  f32   per-channel sumsq (resident accumulator)
    n = pl.program_id(0)

    # relu127 + cast to bf16 so the MXU runs at native rate (f32 accumulation below).
    x = jnp.maximum(x_ref[...], 0.0).astype(jnp.bfloat16)
    # conv2d133: 1x1 conv == (C_out, C_in) @ (C_in, HW); result is already NCHW.
    y = jnp.dot(w_ref[...], x, preferred_element_type=jnp.float32)
    y_ref[...] = y

    @pl.when(n == 0)
    def _():
        sum_ref[...] = jnp.zeros_like(sum_ref)
        ssq_ref[...] = jnp.zeros_like(ssq_ref)

    # Single-pass moments, accumulated across the batch grid axis.
    sum_ref[...] += jnp.sum(y, axis=1, keepdims=True)
    ssq_ref[...] += jnp.sum(y * y, axis=1, keepdims=True)


def _bn_relu_kernel(y_ref, scale_ref, shift_ref, o_ref):
    # y_ref: (C_out, HW) f32; scale/shift: (C_out, 1) f32 (folded BN affine)
    # batchnorm2d133 (normalize + affine, folded) + relu130 => 2 VPU ops/element.
    o_ref[...] = jnp.maximum(y_ref[...] * scale_ref[...] + shift_ref[...], 0.0)


def fused_relu_conv1x1_bn_relu(x_nchw, weight_oi, gamma, beta, eps=EPS):
    """x_nchw: (N, C_in, H, W); weight_oi: (C_out, C_in); gamma/beta: (C_out,)."""
    N, C_in, H, W = x_nchw.shape
    C_out = weight_oi.shape[0]
    HW = H * W
    M = N * HW

    x = x_nchw.reshape(N, C_in, HW)           # free reshape, layout unchanged
    w = weight_oi.astype(jnp.bfloat16)        # (C_out, C_in), resident in VMEM

    # ---------------- Pass 1: ReLU -> 1x1 conv + per-channel moments ----------------
    y, s1, s2 = pl.pallas_call(
        _conv_stats_kernel,
        out_shape=(
            jax.ShapeDtypeStruct((N, C_out, HW), jnp.float32),
            jax.ShapeDtypeStruct((C_out, 1), jnp.float32),
            jax.ShapeDtypeStruct((C_out, 1), jnp.float32),
        ),
        grid_spec=pltpu.PrefetchScalarGridSpec(
            num_scalar_prefetch=0,
            grid=(N,),
            in_specs=[
                pl.BlockSpec((None, C_in, HW), lambda n: (n, 0, 0)),   # x[n]
                pl.BlockSpec((C_out, C_in), lambda n: (0, 0)),         # resident weight
            ],
            out_specs=(
                pl.BlockSpec((None, C_out, HW), lambda n: (n, 0, 0)),  # y[n]
                pl.BlockSpec((C_out, 1), lambda n: (0, 0)),            # resident sum
                pl.BlockSpec((C_out, 1), lambda n: (0, 0)),            # resident sumsq
            ),
        ),
        compiler_params=pltpu.CompilerParams(
            dimension_semantics=("arbitrary",),     # stats accumulate across batch
        ),
        cost_estimate=pl.CostEstimate(
            flops=2 * M * C_in * C_out,
            transcendentals=0,
            bytes_accessed=M * C_in * 4 + C_out * C_in * 2 + M * C_out * 4 + 2 * C_out * 4,
        ),
    )(x, w)

    # ---------- Tiny finalize in plain JAX: fold BN into one scale/shift -----------
    inv_m = 1.0 / float(M)
    mean = s1 * inv_m                                        # (C_out, 1)
    var = jnp.maximum(s2 * inv_m - mean * mean, 0.0)         # biased batch variance
    scale = gamma.reshape(C_out, 1).astype(jnp.float32) * jax.lax.rsqrt(var + eps)
    shift = beta.reshape(C_out, 1).astype(jnp.float32) - mean * scale

    # ---------------- Pass 2: normalize + affine + ReLU (independent per image) -----
    out = pl.pallas_call(
        _bn_relu_kernel,
        out_shape=jax.ShapeDtypeStruct((N, C_out, HW), jnp.float32),
        grid_spec=pltpu.PrefetchScalarGridSpec(
            num_scalar_prefetch=0,
            grid=(N,),
            in_specs=[
                pl.BlockSpec((None, C_out, HW), lambda n: (n, 0, 0)),
                pl.BlockSpec((C_out, 1), lambda n: (0, 0)),
                pl.BlockSpec((C_out, 1), lambda n: (0, 0)),
            ],
            out_specs=pl.BlockSpec((None, C_out, HW), lambda n: (n, 0, 0)),
        ),
        compiler_params=pltpu.CompilerParams(
            dimension_semantics=("parallel",),      # per-image normalize is independent
        ),
        cost_estimate=pl.CostEstimate(
            flops=2 * M * C_out,
            transcendentals=0,
            bytes_accessed=2 * M * C_out * 4 + 2 * C_out * 4,
        ),
    )(y, scale, shift)

    return out.reshape(N, C_out, H, W)


if __name__ == "__main__":
    key = jax.random.PRNGKey(0)
    k_x, k_w = jax.random.split(key)

    # Channel counts fixed by the module (1024 -> 256); spatial matches the spec
    # (14x14); batch=2 exercises the cross-batch stats accumulation.
    N, C_in, H, W = 2, 1024, 14, 14
    C_out = 256

    x = jax.random.normal(k_x, (N, C_in, H, W), dtype=jnp.float32)
    weight = jax.random.normal(k_w, (C_out, C_in), dtype=jnp.float32) * 0.02  # squeezed 1x1 kernel
    gamma = jnp.ones((C_out,), dtype=jnp.float32)    # PyTorch BN defaults
    beta = jnp.zeros((C_out,), dtype=jnp.float32)

    out = fused_relu_conv1x1_bn_relu(x, weight, gamma, beta)
    out = jax.block_until_ready(out)

    # Pure-JAX f32 reference of the same math (train-mode BN, biased batch stats).
    xr = jnp.maximum(x, 0.0)
    yr = jnp.einsum("nchw,oc->nohw", xr, weight)
    mr = jnp.mean(yr, axis=(0, 2, 3), keepdims=True)
    vr = jnp.mean((yr - mr) ** 2, axis=(0, 2, 3), keepdims=True)
    ref = jnp.maximum(
        (yr - mr) * jax.lax.rsqrt(vr + EPS) * gamma[None, :, None, None]
        + beta[None, :, None, None],
        0.0,
    )

    assert out.shape == (N, C_out, H, W)
    err = float(jnp.max(jnp.abs(out - ref)))
    assert err < 5e-2, f"max abs err {err}"  # bf16 matmul operands -> loosened tolerance

    print("KERNEL_OK")
</pallas_src>

<mosaic_0001>
module attributes {stable_mosaic.version = 11 : i64} {
  func.func @_conv_stats_kernel(%arg0: i32, %arg1: memref<1x1024x196xf32, #tpu.memory_space<vmem>>, %arg2: memref<256x1024xbf16, #tpu.memory_space<vmem>>, %arg3: memref<1x256x196xf32, #tpu.memory_space<vmem>>, %arg4: memref<256x1xf32, #tpu.memory_space<vmem>>, %arg5: memref<256x1xf32, #tpu.memory_space<vmem>>) attributes {dimension_semantics = [#tpu.dimension_semantics<arbitrary>], iteration_bounds = array<i64: 2>, scalar_prefetch = 0 : i64, scratch_operands = 0 : i64, tpu.core_type = #tpu.core_type<tc>, window_params = [{transform_indices = @transform_0, window_bounds = array<i64: 1, 1024, 196>}, {pipeline_mode = #tpu.pipeline_mode<synchronous>, transform_indices = @transform_1, window_bounds = array<i64: 256, 1024>}, {transform_indices = @transform_2, window_bounds = array<i64: 1, 256, 196>}, {pipeline_mode = #tpu.pipeline_mode<synchronous>, transform_indices = @transform_3, window_bounds = array<i64: 256, 1>}, {pipeline_mode = #tpu.pipeline_mode<synchronous>, transform_indices = @transform_4, window_bounds = array<i64: 256, 1>}]} {
    %c0 = arith.constant 0 : index
    %c0_0 = arith.constant 0 : index
    %c0_1 = arith.constant 0 : index
    %0 = vector.load %arg1[%c0, %c0_0, %c0_1] : memref<1x1024x196xf32, #tpu.memory_space<vmem>>, vector<1x1024x196xf32>
    %1 = vector.shape_cast %0 : vector<1x1024x196xf32> to vector<1024x196xf32>
    %cst = arith.constant 0.000000e+00 : f32
    %2 = vector.broadcast %cst : f32 to vector<1024x196xf32>
    %3 = arith.maximumf %1, %2 : vector<1024x196xf32>
    %4 = arith.truncf %3 : vector<1024x196xf32> to vector<1024x196xbf16>
    %c0_2 = arith.constant 0 : index
    %c0_3 = arith.constant 0 : index
    %5 = vector.load %arg2[%c0_2, %c0_3] : memref<256x1024xbf16, #tpu.memory_space<vmem>>, vector<256x1024xbf16>
    %cst_4 = arith.constant dense<0.000000e+00> : vector<256x196xf32>
    %6 = tpu.matmul %5, %4, %cst_4 {dimension_numbers = #tpu.dot_dimension_numbers<[1], [0], [0], [1], [0, 0, 1, 1], [], []>} : vector<256x1024xbf16>, vector<1024x196xbf16>, vector<256x196xf32> -> vector<256x196xf32>
    %c0_5 = arith.constant 0 : index
    %c0_6 = arith.constant 0 : index
    %c0_7 = arith.constant 0 : index
    %7 = vector.load %arg3[%c0_5, %c0_6, %c0_7] : memref<1x256x196xf32, #tpu.memory_space<vmem>>, vector<1x256x196xf32>
    %8 = vector.shape_cast %7 : vector<1x256x196xf32> to vector<256x196xf32>
    %9 = vector.shape_cast %6 : vector<256x196xf32> to vector<1x256x196xf32>
    tpu.vector_store %arg3[%c0_5, %c0_6, %c0_7], %9 {strides = array<i32>} : memref<1x256x196xf32, #tpu.memory_space<vmem>>, vector<1x256x196xf32>,
    %c0_i32 = arith.constant 0 : i32
    %10 = arith.cmpi eq, %arg0, %c0_i32 : i32
    %11 = arith.extui %10 : i1 to i32
    %c0_i32_8 = arith.constant 0 : i32
    %12 = arith.cmpi ne, %11, %c0_i32_8 : i32
    scf.if %12 {
      %cst_19 = arith.constant 0.000000e+00 : f32
      %24 = vector.broadcast %cst_19 : f32 to vector<256x1xf32>
      %c0_20 = arith.constant 0 : index
      %c0_21 = arith.constant 0 : index
      %25 = vector.load %arg4[%c0_20, %c0_21] : memref<256x1xf32, #tpu.memory_space<vmem>>, vector<256x1xf32>
      tpu.vector_store %arg4[%c0_20, %c0_21], %24 {strides = array<i32>} : memref<256x1xf32, #tpu.memory_space<vmem>>, vector<256x1xf32>,
      %cst_22 = arith.constant 0.000000e+00 : f32
      %26 = vector.broadcast %cst_22 : f32 to vector<256x1xf32>
      %c0_23 = arith.constant 0 : index
      %c0_24 = arith.constant 0 : index
      %27 = vector.load %arg5[%c0_23, %c0_24] : memref<256x1xf32, #tpu.memory_space<vmem>>, vector<256x1xf32>
      tpu.vector_store %arg5[%c0_23, %c0_24], %26 {strides = array<i32>} : memref<256x1xf32, #tpu.memory_space<vmem>>, vector<256x1xf32>,
    } else {
    }
    %c0_9 = arith.constant 0 : index
    %c0_10 = arith.constant 0 : index
    %13 = vector.load %arg4[%c0_9, %c0_10] : memref<256x1xf32, #tpu.memory_space<vmem>>, vector<256x1xf32>
    %cst_11 = arith.constant dense<0.000000e+00> : vector<256xf32>
    %14 = vector.multi_reduction <add>, %6, %cst_11 [1] : vector<256x196xf32> to vector<256xf32>
    %15 = vector.shape_cast %14 : vector<256xf32> to vector<256x1xf32>
    %16 = arith.addf %13, %15 : vector<256x1xf32>
    %c0_12 = arith.constant 0 : index
    %c0_13 = arith.constant 0 : index
    %17 = vector.load %arg4[%c0_12, %c0_13] : memref<256x1xf32, #tpu.memory_space<vmem>>, vector<256x1xf32>
    tpu.vector_store %arg4[%c0_12, %c0_13], %16 {strides = array<i32>} : memref<256x1xf32, #tpu.memory_space<vmem>>, vector<256x1xf32>,
    %c0_14 = arith.constant 0 : index
    %c0_15 = arith.constant 0 : index
    %18 = vector.load %arg5[%c0_14, %c0_15] : memref<256x1xf32, #tpu.memory_space<vmem>>, vector<256x1xf32>
    %19 = arith.mulf %6, %6 : vector<256x196xf32>
    %cst_16 = arith.constant dense<0.000000e+00> : vector<256xf32>
    %20 = vector.multi_reduction <add>, %19, %cst_16 [1] : vector<256x196xf32> to vector<256xf32>
    %21 = vector.shape_cast %20 : vector<256xf32> to vector<256x1xf32>
    %22 = arith.addf %18, %21 : vector<256x1xf32>
    %c0_17 = arith.constant 0 : index
    %c0_18 = arith.constant 0 : index
    %23 = vector.load %arg5[%c0_17, %c0_18] : memref<256x1xf32, #tpu.memory_space<vmem>>, vector<256x1xf32>
    tpu.vector_store %arg5[%c0_17, %c0_18], %22 {strides = array<i32>} : memref<256x1xf32, #tpu.memory_space<vmem>>, vector<256x1xf32>,
    return
  }
  func.func @transform_0(%arg0: i32) -> (i32, i32, i32) {
    %c0_i32 = arith.constant 0 : i32
    %c0_i32_0 = arith.constant 0 : i32
    %c0_i32_1 = arith.constant 0 : i32
    return %arg0, %c0_i32, %c0_i32_0 : i32, i32, i32
  }
  func.func @transform_1(%arg0: i32) -> (i32, i32) {
    %c0_i32 = arith.constant 0 : i32
    %c0_i32_0 = arith.constant 0 : i32
    %c0_i32_1 = arith.constant 0 : i32
    return %c0_i32, %c0_i32_0 : i32, i32
  }
  func.func @transform_2(%arg0: i32) -> (i32, i32, i32) {
    %c0_i32 = arith.constant 0 : i32
    %c0_i32_0 = arith.constant 0 : i32
    %c0_i32_1 = arith.constant 0 : i32
    return %arg0, %c0_i32, %c0_i32_0 : i32, i32, i32
  }
  func.func @transform_3(%arg0: i32) -> (i32, i32) {
    %c0_i32 = arith.constant 0 : i32
    %c0_i32_0 = arith.constant 0 : i32
    %c0_i32_1 = arith.constant 0 : i32
    return %c0_i32, %c0_i32_0 : i32, i32
  }
  func.func @transform_4(%arg0: i32) -> (i32, i32) {
    %c0_i32 = arith.constant 0 : i32
    %c0_i32_0 = arith.constant 0 : i32
    %c0_i32_1 = arith.constant 0 : i32
    return %c0_i32, %c0_i32_0 : i32, i32
  }
}

</mosaic_0001>

<llo_original>
// kernel: tpu_custom_call.1
$region0: #{tpu_custom_call.1}
  #allocation0 [shape = 'u32[]', space=smem, size = 0x4, offset = 0x4, fixed_abs, tag = 'smem constant byte address 0x4 - core index']
  #allocation1 [shape = 'u32[72,128]{1,0:T(1,128)}', space=vmem, size = 0x9000, scoped, tag = 'internal scratch']
  %s0 = inlined_call_operand.vmem [shape: f32[2,1024,196], index: 0, kind: input, shape index: {}]
  %s1 = inlined_call_operand.vmem [shape: bf16[256,1024], index: 1, kind: input, shape index: {}]
  %s2 = inlined_call_operand.vmem [shape: f32[2,256,196], index: 2, kind: output, shape index: {0}]
  %s3 = inlined_call_operand.vmem [shape: f32[256,1], index: 3, kind: output, shape index: {1}]
  %s4 = inlined_call_operand.vmem [shape: f32[256,1], index: 4, kind: output, shape index: {2}]
  %5 = xla_tuple %s2, %s3, %s4
  %s6 = sld [smem:[#allocation0]]
  $region61: #{tpu_custom_call.1} parent=0
    _
  %s8 = ssub.s32 1, %s6
  %s9 = scalar_select 0, %s8, %s6
  loop: start=0, step=1, limit=4
  $region2: #{tpu_custom_call.1} parent=0 // loop_pre_header
    _
  $region3: #{tpu_custom_call.1} parent=0 // loop_header
    %s11 = sphi 0, %s15
    %p12 = scmp.ge.s32.totalorder %s11, 4
    %s21 = sphi 0, %s23
    %s24 = sphi 0, %s21
    %s25 = sphi 0, %s24
    %s41 = sphi 0, %s25
    %s45 = sphi 0, %s45
    %s47 = sphi 0, %s45
    %s48 = sphi 0, %s47
    %s62 = sphi 0, %s48
    %s68 = sphi 0, %s70
    %s71 = sphi 0, %s68
    %s72 = sphi 0, %s71
    %s88 = sphi 0, %s72
    %s92 = sphi 0, %s92
    %s94 = sphi 0, %s92
    %s95 = sphi 0, %s94
    %s109 = sphi 0, %s95
    %s113 = sphi 0, %s113
    %s115 = sphi 0, %s113
    %s116 = sphi 0, %s115
    %s130 = sphi 0, %s116
  $region4: #{tpu_custom_call.1} parent=0 // loop_header_branch
    %14 = sbr.rel (%p12) target = $region8
  $region5: #{tpu_custom_call.1} parent=0 // loop_body
    %s16 = ssub.s32 %s11, 1
    %s17 = ssub.s32 %s11, 2
    %s18 = sadd.s32 %s11, 1
    %s19 = ssub.s32 %s11, %s18
    %p20 = scmp.eq.s32.totalorder %s19, 0
    %s22 = sadd.s32 %s21, 1
    %s23 = scalar_select %p20, %s21, %s22
    %p26 = pneg %p20
    %p27 = scmp.eq.s32.totalorder %s11, 1
    %p28 = por %p26, %p27
    %p29 = scmp.ne.s32.totalorder %s21, %s24
    %p30 = scmp.eq.s32.totalorder %s11, 0
    %p31 = por %p29, %p30
    %p32 = scmp.ne.s32.totalorder %s21, %s24
    %p33 = scmp.eq.s32.totalorder %s16, 1
    %p34 = por %p32, %p33
    %p35 = scmp.ne.s32.totalorder %s24, %s25
    %p36 = scmp.eq.s32.totalorder %s16, 0
    %p37 = por %p35, %p36
    %p38 = scmp.ne.s32.totalorder %s24, %s25
    %p39 = scmp.eq.s32.totalorder %s17, 1
    %p40 = por %p38, %p39
    %p42 = scmp.ne.s32.totalorder %s25, %s41
    %p43 = scmp.eq.s32.totalorder %s17, 0
    %p44 = por %p42, %p43
    %s46 = sadd.s32 %s45, 1
    %p49 = scmp.eq.s32.totalorder %s11, 1
    %p50 = scmp.ne.s32.totalorder %s45, %s47
    %p51 = scmp.eq.s32.totalorder %s11, 0
    %p52 = por %p50, %p51
    %p53 = scmp.ne.s32.totalorder %s45, %s47
    %p54 = scmp.eq.s32.totalorder %s16, 1
    %p55 = por %p53, %p54
    %p56 = scmp.ne.s32.totalorder %s47, %s48
    %p57 = scmp.eq.s32.totalorder %s16, 0
    %p58 = por %p56, %p57
    %p59 = scmp.ne.s32.totalorder %s47, %s48
    %p60 = scmp.eq.s32.totalorder %s17, 1
    %p61 = por %p59, %p60
    %p63 = scmp.ne.s32.totalorder %s48, %s62
    %p64 = scmp.eq.s32.totalorder %s17, 0
    %p65 = por %p63, %p64
    %s66 = ssub.s32 %s11, %s18
    %p67 = scmp.eq.s32.totalorder %s66, 0
    %s69 = sadd.s32 %s68, 1
    %s70 = scalar_select %p67, %s68, %s69
    %p73 = pneg %p67
    %p74 = scmp.eq.s32.totalorder %s11, 1
    %p75 = por %p73, %p74
    %p76 = scmp.ne.s32.totalorder %s68, %s71
    %p77 = scmp.eq.s32.totalorder %s11, 0
    %p78 = por %p76, %p77
    %p79 = scmp.ne.s32.totalorder %s68, %s71
    %p80 = scmp.eq.s32.totalorder %s16, 1
    %p81 = por %p79, %p80
    %p82 = scmp.ne.s32.totalorder %s71, %s72
    %p83 = scmp.eq.s32.totalorder %s16, 0
    %p84 = por %p82, %p83
    %p85 = scmp.ne.s32.totalorder %s71, %s72
    %p86 = scmp.eq.s32.totalorder %s17, 1
    %p87 = por %p85, %p86
    %p89 = scmp.ne.s32.totalorder %s72, %s88
    %p90 = scmp.eq.s32.totalorder %s17, 0
    %p91 = por %p89, %p90
    %s93 = sadd.s32 %s92, 1
    %p96 = scmp.eq.s32.totalorder %s11, 1
    %p97 = scmp.ne.s32.totalorder %s92, %s94
    %p98 = scmp.eq.s32.totalorder %s11, 0
    %p99 = por %p97, %p98
    %p100 = scmp.ne.s32.totalorder %s92, %s94
    %p101 = scmp.eq.s32.totalorder %s16, 1
    %p102 = por %p100, %p101
    %p103 = scmp.ne.s32.totalorder %s94, %s95
    %p104 = scmp.eq.s32.totalorder %s16, 0
    %p105 = por %p103, %p104
    %p106 = scmp.ne.s32.totalorder %s94, %s95
    %p107 = scmp.eq.s32.totalorder %s17, 1
    %p108 = por %p106, %p107
    %p110 = scmp.ne.s32.totalorder %s95, %s109
    %p111 = scmp.eq.s32.totalorder %s17, 0
    %p112 = por %p110, %p111
    %s114 = sadd.s32 %s113, 1
    %p117 = scmp.eq.s32.totalorder %s11, 1
    %p118 = scmp.ne.s32.totalorder %s113, %s115
    %p119 = scmp.eq.s32.totalorder %s11, 0
    %p120 = por %p118, %p119
    %p121 = scmp.ne.s32.totalorder %s113, %s115
    %p122 = scmp.eq.s32.totalorder %s16, 1
    %p123 = por %p121, %p122
    %p124 = scmp.ne.s32.totalorder %s115, %s116
    %p125 = scmp.eq.s32.totalorder %s16, 0
    %p126 = por %p124, %p125
    %p127 = scmp.ne.s32.totalorder %s115, %s116
    %p128 = scmp.eq.s32.totalorder %s17, 1
    %p129 = por %p127, %p128
    %p131 = scmp.ne.s32.totalorder %s116, %s130
    %p132 = scmp.eq.s32.totalorder %s17, 0
    %p133 = por %p131, %p132
    %p134 = scmp.le.s32.totalorder 1, %s11
    %p135 = scmp.lt.s32.totalorder %s11, 3
    %p136 = pnand %p134, %p135
    %p137 = pneg %p136
    // Predicated region
    $region9: #{tpu_custom_call.1} parent=5 // pred_check
      _
    $region10: #{tpu_custom_call.1} parent=5 // pred_check_branch
      %139 = sbr.rel (%p136) target = $region12
    $region11: #{tpu_custom_call.1} parent=5 // pred_region
      %s140 = ssub.s32 %s11, 1
      // Predicated region
      $region13: #{tpu_custom_call.1} parent=11 // pred_check
        %p141 = pneg %p58
      $region14: #{tpu_custom_call.1} parent=11 // pred_check_branch
        %143 = sbr.rel (%p141) target = $region16
      $region15: #{tpu_custom_call.1} parent=11 // pred_region
        _
      $region16: #{tpu_custom_call.1} parent=11 // pred_fallthru
        _
    $region12: #{tpu_custom_call.1} parent=5 // pred_fallthru
      _
    %p144 = scmp.lt.s32.totalorder %s11, 2
    // Predicated region
    $region17: #{tpu_custom_call.1} parent=5 // pred_check
      %p145 = pneg %p144
    $region18: #{tpu_custom_call.1} parent=5 // pred_check_branch
      %147 = sbr.rel (%p145) target = $region20
    $region19: #{tpu_custom_call.1} parent=5 // pred_region
      // Predicated region
      $region21: #{tpu_custom_call.1} parent=19 // pred_check
        %p148 = pneg %p31
      $region22: #{tpu_custom_call.1} parent=19 // pred_check_branch
        %150 = sbr.rel (%p148) target = $region24
      $region23: #{tpu_custom_call.1} parent=19 // pred_region
        %p151 = scmp.lt.s32.totalorder %s11, 1
        %s152 = scalar_select %p151, %s11, 1
        %s153 = smul.addr %s152, 256
        %s154 = smul.addr %s153, 8
        %s155 = scalar_lea.vmem %s0, %s154
      $region24: #{tpu_custom_call.1} parent=19 // pred_fallthru
        _
    $region20: #{tpu_custom_call.1} parent=5 // pred_fallthru
      _
    %p156 = scmp.le.s32.totalorder 1, %s11
    %p157 = scmp.lt.s32.totalorder %s11, 3
    %p158 = pnand %p156, %p157
    %p159 = pneg %p158
    // Predicated region
    $region25: #{tpu_custom_call.1} parent=5 // pred_check
      _
    $region26: #{tpu_custom_call.1} parent=5 // pred_check_branch
      %161 = sbr.rel (%p158) target = $region28
    $region27: #{tpu_custom_call.1} parent=5 // pred_region
      %s162 = ssub.s32 %s11, 1
      %p163 = scmp.lt.s32.totalorder %s16, 1
      %s164 = scalar_select %p163, %s16, 1
      %s165 = smul.addr %s164, 256
      %s166 = smul.addr %s165, 8
      %s167 = scalar_lea.vmem %s0, %s166
      %p168 = pneg %p37
      %p169 = pneg %p34
      %p170 = pneg %p58
      %p171 = pneg %p55
      %p172 = pneg %p84
      %p173 = pneg %p81
      %p174 = scmp.lt.s32.totalorder %s16, 1
      %s175 = scalar_select %p174, %s16, 1
      %s176 = smul.addr %s175, 64
      %s177 = smul.addr %s176, 8
      %s178 = scalar_lea.vmem %s2, %s177
      %p179 = pneg %p105
      %p180 = pneg %p102
      %p181 = pneg %p126
      %p182 = pneg %p123
      %p183 = scmp.lt.s32.totalorder %s16, 1
      %s184 = scalar_select %p183, %s16, 1
      %s185 = smul.addr %s184, 256
      %s186 = smul.addr %s185, 8
      %s187 = scalar_lea.vmem %s0, %s186
      %p188 = scmp.lt.s32.totalorder %s16, 1
      %s189 = scalar_select %p188, %s16, 1
      %s190 = smul.addr %s189, 64
      %s191 = smul.addr %s190, 8
      %s192 = scalar_lea.vmem %s2, %s191
      %v193 = vld [vmem:[%s187] sm:$0xff]
      %v194 = vld [vmem:[%s187 + $0x8] sm:$0xff]
      %v195 = vld [vmem:[%s187 + $0x10] sm:$0xff]
      %v196 = vld [vmem:[%s187 + $0x18] sm:$0xff]
      %v197 = vld [vmem:[%s187 + $0x20] sm:$0xff]
      %v198 = vld [vmem:[%s187 + $0x28] sm:$0xff]
      %v199 = vld [vmem:[%s187 + $0x30] sm:$0xff]
      %v200 = vld [vmem:[%s187 + $0x38] sm:$0xff]
      %v201 = vld [vmem:[%s187 + $0x40] sm:$0xff]
      %v202 = vld [vmem:[%s187 + $0x48] sm:$0xff]
      %v203 = vld [vmem:[%s187 + $0x50] sm:$0xff]
      %v204 = vld [vmem:[%s187 + $0x58] sm:$0xff]
      %v205 = vld [vmem:[%s187 + $0x60] sm:$0xff]
      %v206 = vld [vmem:[%s187 + $0x68] sm:$0xff]
      %v207 = vld [vmem:[%s187 + $0x70] sm:$0xff]
      %v208 = vld [vmem:[%s187 + $0x78] sm:$0xff]
      %v209 = vld [vmem:[%s187 + $0x80] sm:$0xff]
      %v210 = vld [vmem:[%s187 + $0x88] sm:$0xff]
      %v211 = vld [vmem:[%s187 + $0x90] sm:$0xff]
      %v212 = vld [vmem:[%s187 + $0x98] sm:$0xff]
      %v213 = vld [vmem:[%s187 + $0xa0] sm:$0xff]
      %v214 = vld [vmem:[%s187 + $0xa8] sm:$0xff]
      %v215 = vld [vmem:[%s187 + $0xb0] sm:$0xff]
      %v216 = vld [vmem:[%s187 + $0xb8] sm:$0xff]
      %v217 = vld [vmem:[%s187 + $0xc0] sm:$0xff]
      %v218 = vld [vmem:[%s187 + $0xc8] sm:$0xff]
      %v219 = vld [vmem:[%s187 + $0xd0] sm:$0xff]
      %v220 = vld [vmem:[%s187 + $0xd8] sm:$0xff]
      %v221 = vld [vmem:[%s187 + $0xe0] sm:$0xff]
      %v222 = vld [vmem:[%s187 + $0xe8] sm:$0xff]
      %v223 = vld [vmem:[%s187 + $0xf0] sm:$0xff]
      %v224 = vld [vmem:[%s187 + $0xf8] sm:$0xff]
      %v225 = vld [vmem:[%s187 + $0x100] sm:$0xff]
      %v226 = vld [vmem:[%s187 + $0x108] sm:$0xff]
      %v227 = vld [vmem:[%s187 + $0x110] sm:$0xff]
      %v228 = vld [vmem:[%s187 + $0x118] sm:$0xff]
      %v229 = vld [vmem:[%s187 + $0x120] sm:$0xff]
      %v230 = vld [vmem:[%s187 + $0x128] sm:$0xff]
      %v231 = vld [vmem:[%s187 + $0x130] sm:$0xff]
      %v232 = vld [vmem:[%s187 + $0x138] sm:$0xff]
      %v233 = vld [vmem:[%s187 + $0x140] sm:$0xff]
      %v234 = vld [vmem:[%s187 + $0x148] sm:$0xff]
      %v235 = vld [vmem:[%s187 + $0x150] sm:$0xff]
      %v236 = vld [vmem:[%s187 + $0x158] sm:$0xff]
      %v237 = vld [vmem:[%s187 + $0x160] sm:$0xff]
      %v238 = vld [vmem:[%s187 + $0x168] sm:$0xff]
      %v239 = vld [vmem:[%s187 + $0x170] sm:$0xff]
      %v240 = vld [vmem:[%s187 + $0x178] sm:$0xff]
      %v241 = vld [vmem:[%s187 + $0x180] sm:$0xff]
      %v242 = vld [vmem:[%s187 + $0x188] sm:$0xff]
      %v243 = vld [vmem:[%s187 + $0x190] sm:$0xff]
      %v244 = vld [vmem:[%s187 + $0x198] sm:$0xff]
      %v245 = vld [vmem:[%s187 + $0x1a0] sm:$0xff]
      %v246 = vld [vmem:[%s187 + $0x1a8] sm:$0xff]
      %v247 = vld [vmem:[%s187 + $0x1b0] sm:$0xff]
      %v248 = vld [vmem:[%s187 + $0x1b8] sm:$0xff]
      %v249 = vld [vmem:[%s187 + $0x1c0] sm:$0xff]
      %v250 = vld [vmem:[%s187 + $0x1c8] sm:$0xff]
      %v251 = vld [vmem:[%s187 + $0x1d0] sm:$0xff]
      %v252 = vld [vmem:[%s187 + $0x1d8] sm:$0xff]
      %v253 = vld [vmem:[%s187 + $0x1e0] sm:$0xff]
      %v254 = vld [vmem:[%s187 + $0x1e8] sm:$0xff]
      %v255 = vld [vmem:[%s187 + $0x1f0] sm:$0xff]
      %v256 = vld [vmem:[%s187 + $0x1f8] sm:$0xff]
      %v257 = vld [vmem:[%s187 + $0x200] sm:$0xff]
      %v258 = vld [vmem:[%s187 + $0x208] sm:$0xff]
      %v259 = vld [vmem:[%s187 + $0x210] sm:$0xff]
      %v260 = vld [vmem:[%s187 + $0x218] sm:$0xff]
      %v261 = vld [vmem:[%s187 + $0x220] sm:$0xff]
      %v262 = vld [vmem:[%s187 + $0x228] sm:$0xff]
      %v263 = vld [vmem:[%s187 + $0x230] sm:$0xff]
      %v264 = vld [vmem:[%s187 + $0x238] sm:$0xff]
      %v265 = vld [vmem:[%s187 + $0x240] sm:$0xff]
      %v266 = vld [vmem:[%s187 + $0x248] sm:$0xff]
      %v267 = vld [vmem:[%s187 + $0x250] sm:$0xff]
      %v268 = vld [vmem:[%s187 + $0x258] sm:$0xff]
      %v269 = vld [vmem:[%s187 + $0x260] sm:$0xff]
      %v270 = vld [vmem:[%s187 + $0x268] sm:$0xff]
      %v271 = vld [vmem:[%s187 + $0x270] sm:$0xff]
      %v272 = vld [vmem:[%s187 + $0x278] sm:$0xff]
      %v273 = vld [vmem:[%s187 + $0x280] sm:$0xff]
      %v274 = vld [vmem:[%s187 + $0x288] sm:$0xff]
      %v275 = vld [vmem:[%s187 + $0x290] sm:$0xff]
      %v276 = vld [vmem:[%s187 + $0x298] sm:$0xff]
      %v277 = vld [vmem:[%s187 + $0x2a0] sm:$0xff]
      %v278 = vld [vmem:[%s187 + $0x2a8] sm:$0xff]
      %v279 = vld [vmem:[%s187 + $0x2b0] sm:$0xff]
      %v280 = vld [vmem:[%s187 + $0x2b8] sm:$0xff]
      %v281 = vld [vmem:[%s187 + $0x2c0] sm:$0xff]
      %v282 = vld [vmem:[%s187 + $0x2c8] sm:$0xff]
      %v283 = vld [vmem:[%s187 + $0x2d0] sm:$0xff]
      %v284 = vld [vmem:[%s187 + $0x2d8] sm:$0xff]
      %v285 = vld [vmem:[%s187 + $0x2e0] sm:$0xff]
      %v286 = vld [vmem:[%s187 + $0x2e8] sm:$0xff]
      %v287 = vld [vmem:[%s187 + $0x2f0] sm:$0xff]
      %v288 = vld [vmem:[%s187 + $0x2f8] sm:$0xff]
      %v289 = vld [vmem:[%s187 + $0x300] sm:$0xff]
      %v290 = vld [vmem:[%s187 + $0x308] sm:$0xff]
      %v291 = vld [vmem:[%s187 + $0x310] sm:$0xff]
      %v292 = vld [vmem:[%s187 + $0x318] sm:$0xff]
      %v293 = vld [vmem:[%s187 + $0x320] sm:$0xff]
      %v294 = vld [vmem:[%s187 + $0x328] sm:$0xff]
      %v295 = vld [vmem:[%s187 + $0x330] sm:$0xff]
      %v296 = vld [vmem:[%s187 + $0x338] sm:$0xff]
      %v297 = vld [vmem:[%s187 + $0x340] sm:$0xff]
      %v298 = vld [vmem:[%s187 + $0x348] sm:$0xff]
      %v299 = vld [vmem:[%s187 + $0x350] sm:$0xff]
      %v300 = vld [vmem:[%s187 + $0x358] sm:$0xff]
      %v301 = vld [vmem:[%s187 + $0x360] sm:$0xff]
      %v302 = vld [vmem:[%s187 + $0x368] sm:$0xff]
      %v303 = vld [vmem:[%s187 + $0x370] sm:$0xff]
      %v304 = vld [vmem:[%s187 + $0x378] sm:$0xff]
      %v305 = vld [vmem:[%s187 + $0x380] sm:$0xff]
      %v306 = vld [vmem:[%s187 + $0x388] sm:$0xff]
      %v307 = vld [vmem:[%s187 + $0x390] sm:$0xff]
      %v308 = vld [vmem:[%s187 + $0x398] sm:$0xff]
      %v309 = vld [vmem:[%s187 + $0x3a0] sm:$0xff]
      %v310 = vld [vmem:[%s187 + $0x3a8] sm:$0xff]
      %v311 = vld [vmem:[%s187 + $0x3b0] sm:$0xff]
      %v312 = vld [vmem:[%s187 + $0x3b8] sm:$0xff]
      %v313 = vld [vmem:[%s187 + $0x3c0] sm:$0xff]
      %v314 = vld [vmem:[%s187 + $0x3c8] sm:$0xff]
      %v315 = vld [vmem:[%s187 + $0x3d0] sm:$0xff]
      %v316 = vld [vmem:[%s187 + $0x3d8] sm:$0xff]
      %v317 = vld [vmem:[%s187 + $0x3e0] sm:$0xff]
      %v318 = vld [vmem:[%s187 + $0x3e8] sm:$0xff]
      %v319 = vld [vmem:[%s187 + $0x3f0] sm:$0xff]
      %v320 = vld [vmem:[%s187 + $0x3f8] sm:$0xff]
      %v321 = vld [vmem:[%s187 + $0x400] sm:$0xff]
      %v322 = vld [vmem:[%s187 + $0x408] sm:$0xff]
      %v323 = vld [vmem:[%s187 + $0x410] sm:$0xff]
      %v324 = vld [vmem:[%s187 + $0x418] sm:$0xff]
      %v325 = vld [vmem:[%s187 + $0x420] sm:$0xff]
      %v326 = vld [vmem:[%s187 + $0x428] sm:$0xff]
      %v327 = vld [vmem:[%s187 + $0x430] sm:$0xff]
      %v328 = vld [vmem:[%s187 + $0x438] sm:$0xff]
      %v329 = vld [vmem:[%s187 + $0x440] sm:$0xff]
      %v330 = vld [vmem:[%s187 + $0x448] sm:$0xff]
      %v331 = vld [vmem:[%s187 + $0x450] sm:$0xff]
      %v332 = vld [vmem:[%s187 + $0x458] sm:$0xff]
      %v333 = vld [vmem:[%s187 + $0x460] sm:$0xff]
      %v334 = vld [vmem:[%s187 + $0x468] sm:$0xff]
      %v335 = vld [vmem:[%s187 + $0x470] sm:$0xff]
      %v336 = vld [vmem:[%s187 + $0x478] sm:$0xff]
      %v337 = vld [vmem:[%s187 + $0x480] sm:$0xff]
      %v338 = vld [vmem:[%s187 + $0x488] sm:$0xff]
      %v339 = vld [vmem:[%s187 + $0x490] sm:$0xff]
      %v340 = vld [vmem:[%s187 + $0x498] sm:$0xff]
      %v341 = vld [vmem:[%s187 + $0x4a0] sm:$0xff]
      %v342 = vld [vmem:[%s187 + $0x4a8] sm:$0xff]
      %v343 = vld [vmem:[%s187 + $0x4b0] sm:$0xff]
      %v344 = vld [vmem:[%s187 + $0x4b8] sm:$0xff]
      %v345 = vld [vmem:[%s187 + $0x4c0] sm:$0xff]
      %v346 = vld [vmem:[%s187 + $0x4c8] sm:$0xff]
      %v347 = vld [vmem:[%s187 + $0x4d0] sm:$0xff]
      %v348 = vld [vmem:[%s187 + $0x4d8] sm:$0xff]
      %v349 = vld [vmem:[%s187 + $0x4e0] sm:$0xff]
      %v350 = vld [vmem:[%s187 + $0x4e8] sm:$0xff]
      %v351 = vld [vmem:[%s187 + $0x4f0] sm:$0xff]
      %v352 = vld [vmem:[%s187 + $0x4f8] sm:$0xff]
      %v353 = vld [vmem:[%s187 + $0x500] sm:$0xff]
      %v354 = vld [vmem:[%s187 + $0x508] sm:$0xff]
      %v355 = vld [vmem:[%s187 + $0x510] sm:$0xff]
      %v356 = vld [vmem:[%s187 + $0x518] sm:$0xff]
      %v357 = vld [vmem:[%s187 + $0x520] sm:$0xff]
      %v358 = vld [vmem:[%s187 + $0x528] sm:$0xff]
      %v359 = vld [vmem:[%s187 + $0x530] sm:$0xff]
      %v360 = vld [vmem:[%s187 + $0x538] sm:$0xff]
      %v361 = vld [vmem:[%s187 + $0x540] sm:$0xff]
      %v362 = vld [vmem:[%s187 + $0x548] sm:$0xff]
      %v363 = vld [vmem:[%s187 + $0x550] sm:$0xff]
      %v364 = vld [vmem:[%s187 + $0x558] sm:$0xff]
      %v365 = vld [vmem:[%s187 + $0x560] sm:$0xff]
      %v366 = vld [vmem:[%s187 + $0x568] sm:$0xff]
      %v367 = vld [vmem:[%s187 + $0x570] sm:$0xff]
      %v368 = vld [vmem:[%s187 + $0x578] sm:$0xff]
      %v369 = vld [vmem:[%s187 + $0x580] sm:$0xff]
      %v370 = vld [vmem:[%s187 + $0x588] sm:$0xff]
      %v371 = vld [vmem:[%s187 + $0x590] sm:$0xff]
      %v372 = vld [vmem:[%s187 + $0x598] sm:$0xff]
      %v373 = vld [vmem:[%s187 + $0x5a0] sm:$0xff]
      %v374 = vld [vmem:[%s187 + $0x5a8] sm:$0xff]
      %v375 = vld [vmem:[%s187 + $0x5b0] sm:$0xff]
      %v376 = vld [vmem:[%s187 + $0x5b8] sm:$0xff]
      %v377 = vld [vmem:[%s187 + $0x5c0] sm:$0xff]
      %v378 = vld [vmem:[%s187 + $0x5c8] sm:$0xff]
      %v379 = vld [vmem:[%s187 + $0x5d0] sm:$0xff]
      %v380 = vld [vmem:[%s187 + $0x5d8] sm:$0xff]
      %v381 = vld [vmem:[%s187 + $0x5e0] sm:$0xff]
      %v382 = vld [vmem:[%s187 + $0x5e8] sm:$0xff]
      %v383 = vld [vmem:[%s187 + $0x5f0] sm:$0xff]
      %v384 = vld [vmem:[%s187 + $0x5f8] sm:$0xff]
      %v385 = vld [vmem:[%s187 + $0x600] sm:$0xff]
      %v386 = vld [vmem:[%s187 + $0x608] sm:$0xff]
      %v387 = vld [vmem:[%s187 + $0x610] sm:$0xff]
      %v388 = vld [vmem:[%s187 + $0x618] sm:$0xff]
      %v389 = vld [vmem:[%s187 + $0x620] sm:$0xff]
      %v390 = vld [vmem:[%s187 + $0x628] sm:$0xff]
      %v391 = vld [vmem:[%s187 + $0x630] sm:$0xff]
      %v392 = vld [vmem:[%s187 + $0x638] sm:$0xff]
      %v393 = vld [vmem:[%s187 + $0x640] sm:$0xff]
      %v394 = vld [vmem:[%s187 + $0x648] sm:$0xff]
      %v395 = vld [vmem:[%s187 + $0x650] sm:$0xff]
      %v396 = vld [vmem:[%s187 + $0x658] sm:$0xff]
      %v397 = vld [vmem:[%s187 + $0x660] sm:$0xff]
      %v398 = vld [vmem:[%s187 + $0x668] sm:$0xff]
      %v399 = vld [vmem:[%s187 + $0x670] sm:$0xff]
      %v400 = vld [vmem:[%s187 + $0x678] sm:$0xff]
      %v401 = vld [vmem:[%s187 + $0x680] sm:$0xff]
      %v402 = vld [vmem:[%s187 + $0x688] sm:$0xff]
      %v403 = vld [vmem:[%s187 + $0x690] sm:$0xff]
      %v404 = vld [vmem:[%s187 + $0x698] sm:$0xff]
      %v405 = vld [vmem:[%s187 + $0x6a0] sm:$0xff]
      %v406 = vld [vmem:[%s187 + $0x6a8] sm:$0xff]
      %v407 = vld [vmem:[%s187 + $0x6b0] sm:$0xff]
      %v408 = vld [vmem:[%s187 + $0x6b8] sm:$0xff]
      %v409 = vld [vmem:[%s187 + $0x6c0] sm:$0xff]
      %v410 = vld [vmem:[%s187 + $0x6c8] sm:$0xff]
      %v411 = vld [vmem:[%s187 + $0x6d0] sm:$0xff]
      %v412 = vld [vmem:[%s187 + $0x6d8] sm:$0xff]
      %v413 = vld [vmem:[%s187 + $0x6e0] sm:$0xff]
      %v414 = vld [vmem:[%s187 + $0x6e8] sm:$0xff]
      %v415 = vld [vmem:[%s187 + $0x6f0] sm:$0xff]
      %v416 = vld [vmem:[%s187 + $0x6f8] sm:$0xff]
      %v417 = vld [vmem:[%s187 + $0x700] sm:$0xff]
      %v418 = vld [vmem:[%s187 + $0x708] sm:$0xff]
      %v419 = vld [vmem:[%s187 + $0x710] sm:$0xff]
      %v420 = vld [vmem:[%s187 + $0x718] sm:$0xff]
      %v421 = vld [vmem:[%s187 + $0x720] sm:$0xff]
      %v422 = vld [vmem:[%s187 + $0x728] sm:$0xff]
      %v423 = vld [vmem:[%s187 + $0x730] sm:$0xff]
      %v424 = vld [vmem:[%s187 + $0x738] sm:$0xff]
      %v425 = vld [vmem:[%s187 + $0x740] sm:$0xff]
      %v426 = vld [vmem:[%s187 + $0x748] sm:$0xff]
      %v427 = vld [vmem:[%s187 + $0x750] sm:$0xff]
      %v428 = vld [vmem:[%s187 + $0x758] sm:$0xff]
      %v429 = vld [vmem:[%s187 + $0x760] sm:$0xff]
      %v430 = vld [vmem:[%s187 + $0x768] sm:$0xff]
      %v431 = vld [vmem:[%s187 + $0x770] sm:$0xff]
      %v432 = vld [vmem:[%s187 + $0x778] sm:$0xff]
      %v433 = vld [vmem:[%s187 + $0x780] sm:$0xff]
      %v434 = vld [vmem:[%s187 + $0x788] sm:$0xff]
      %v435 = vld [vmem:[%s187 + $0x790] sm:$0xff]
      %v436 = vld [vmem:[%s187 + $0x798] sm:$0xff]
      %v437 = vld [vmem:[%s187 + $0x7a0] sm:$0xff]
      %v438 = vld [vmem:[%s187 + $0x7a8] sm:$0xff]
      %v439 = vld [vmem:[%s187 + $0x7b0] sm:$0xff]
      %v440 = vld [vmem:[%s187 + $0x7b8] sm:$0xff]
      %v441 = vld [vmem:[%s187 + $0x7c0] sm:$0xff]
      %v442 = vld [vmem:[%s187 + $0x7c8] sm:$0xff]
      %v443 = vld [vmem:[%s187 + $0x7d0] sm:$0xff]
      %v444 = vld [vmem:[%s187 + $0x7d8] sm:$0xff]
      %v445 = vld [vmem:[%s187 + $0x7e0] sm:$0xff]
      %v446 = vld [vmem:[%s187 + $0x7e8] sm:$0xff]
      %v447 = vld [vmem:[%s187 + $0x7f0] sm:$0xff]
      %v448 = vld [vmem:[%s187 + $0x7f8] sm:$0xff]
      %v449 = vmax.f32 %v193, 0.0
      %v450 = vmax.f32 %v194, 0.0
      %v451 = vmax.f32 %v195, 0.0
      %v452 = vmax.f32 %v196, 0.0
      %v453 = vmax.f32 %v197, 0.0
      %v454 = vmax.f32 %v198, 0.0
      %v455 = vmax.f32 %v199, 0.0
      %v456 = vmax.f32 %v200, 0.0
      %v457 = vmax.f32 %v201, 0.0
      %v458 = vmax.f32 %v202, 0.0
      %v459 = vmax.f32 %v203, 0.0
      %v460 = vmax.f32 %v204, 0.0
      %v461 = vmax.f32 %v205, 0.0
      %v462 = vmax.f32 %v206, 0.0
      %v463 = vmax.f32 %v207, 0.0
      %v464 = vmax.f32 %v208, 0.0
      %v465 = vmax.f32 %v209, 0.0
      %v466 = vmax.f32 %v210, 0.0
      %v467 = vmax.f32 %v211, 0.0
      %v468 = vmax.f32 %v212, 0.0
      %v469 = vmax.f32 %v213, 0.0
      %v470 = vmax.f32 %v214, 0.0
      %v471 = vmax.f32 %v215, 0.0
      %v472 = vmax.f32 %v216, 0.0
      %v473 = vmax.f32 %v217, 0.0
      %v474 = vmax.f32 %v218, 0.0
      %v475 = vmax.f32 %v219, 0.0
      %v476 = vmax.f32 %v220, 0.0
      %v477 = vmax.f32 %v221, 0.0
      %v478 = vmax.f32 %v222, 0.0
      %v479 = vmax.f32 %v223, 0.0
      %v480 = vmax.f32 %v224, 0.0
      %v481 = vmax.f32 %v225, 0.0
      %v482 = vmax.f32 %v226, 0.0
      %v483 = vmax.f32 %v227, 0.0
      %v484 = vmax.f32 %v228, 0.0
      %v485 = vmax.f32 %v229, 0.0
      %v486 = vmax.f32 %v230, 0.0
      %v487 = vmax.f32 %v231, 0.0
      %v488 = vmax.f32 %v232, 0.0
      %v489 = vmax.f32 %v233, 0.0
      %v490 = vmax.f32 %v234, 0.0
      %v491 = vmax.f32 %v235, 0.0
      %v492 = vmax.f32 %v236, 0.0
      %v493 = vmax.f32 %v237, 0.0
      %v494 = vmax.f32 %v238, 0.0
      %v495 = vmax.f32 %v239, 0.0
      %v496 = vmax.f32 %v240, 0.0
      %v497 = vmax.f32 %v241, 0.0
      %v498 = vmax.f32 %v242, 0.0
      %v499 = vmax.f32 %v243, 0.0
      %v500 = vmax.f32 %v244, 0.0
      %v501 = vmax.f32 %v245, 0.0
      %v502 = vmax.f32 %v246, 0.0
      %v503 = vmax.f32 %v247, 0.0
      %v504 = vmax.f32 %v248, 0.0
      %v505 = vmax.f32 %v249, 0.0
      %v506 = vmax.f32 %v250, 0.0
      %v507 = vmax.f32 %v251, 0.0
      %v508 = vmax.f32 %v252, 0.0
      %v509 = vmax.f32 %v253, 0.0
      %v510 = vmax.f32 %v254, 0.0
      %v511 = vmax.f32 %v255, 0.0
      %v512 = vmax.f32 %v256, 0.0
      %v513 = vmax.f32 %v257, 0.0
      %v514 = vmax.f32 %v258, 0.0
      %v515 = vmax.f32 %v259, 0.0
      %v516 = vmax.f32 %v260, 0.0
      %v517 = vmax.f32 %v261, 0.0
      %v518 = vmax.f32 %v262, 0.0
      %v519 = vmax.f32 %v263, 0.0
      %v520 = vmax.f32 %v264, 0.0
      %v521 = vmax.f32 %v265, 0.0
      %v522 = vmax.f32 %v266, 0.0
      %v523 = vmax.f32 %v267, 0.0
      %v524 = vmax.f32 %v268, 0.0
      %v525 = vmax.f32 %v269, 0.0
      %v526 = vmax.f32 %v270, 0.0
      %v527 = vmax.f32 %v271, 0.0
      %v528 = vmax.f32 %v272, 0.0
      %v529 = vmax.f32 %v273, 0.0
      %v530 = vmax.f32 %v274, 0.0
      %v531 = vmax.f32 %v275, 0.0
      %v532 = vmax.f32 %v276, 0.0
      %v533 = vmax.f32 %v277, 0.0
      %v534 = vmax.f32 %v278, 0.0
      %v535 = vmax.f32 %v279, 0.0
      %v536 = vmax.f32 %v280, 0.0
      %v537 = vmax.f32 %v281, 0.0
      %v538 = vmax.f32 %v282, 0.0
      %v539 = vmax.f32 %v283, 0.0
      %v540 = vmax.f32 %v284, 0.0
      %v541 = vmax.f32 %v285, 0.0
      %v542 = vmax.f32 %v286, 0.0
      %v543 = vmax.f32 %v287, 0.0
      %v544 = vmax.f32 %v288, 0.0
      %v545 = vmax.f32 %v289, 0.0
      %v546 = vmax.f32 %v290, 0.0
      %v547 = vmax.f32 %v291, 0.0
      %v548 = vmax.f32 %v292, 0.0
      %v549 = vmax.f32 %v293, 0.0
      %v550 = vmax.f32 %v294, 0.0
      %v551 = vmax.f32 %v295, 0.0
      %v552 = vmax.f32 %v296, 0.0
      %v553 = vmax.f32 %v297, 0.0
      %v554 = vmax.f32 %v298, 0.0
      %v555 = vmax.f32 %v299, 0.0
      %v556 = vmax.f32 %v300, 0.0
      %v557 = vmax.f32 %v301, 0.0
      %v558 = vmax.f32 %v302, 0.0
      %v559 = vmax.f32 %v303, 0.0
      %v560 = vmax.f32 %v304, 0.0
      %v561 = vmax.f32 %v305, 0.0
      %v562 = vmax.f32 %v306, 0.0
      %v563 = vmax.f32 %v307, 0.0
      %v564 = vmax.f32 %v308, 0.0
      %v565 = vmax.f32 %v309, 0.0
      %v566 = vmax.f32 %v310, 0.0
      %v567 = vmax.f32 %v311, 0.0
      %v568 = vmax.f32 %v312, 0.0
      %v569 = vmax.f32 %v313, 0.0
      %v570 = vmax.f32 %v314, 0.0
      %v571 = vmax.f32 %v315, 0.0
      %v572 = vmax.f32 %v316, 0.0
      %v573 = vmax.f32 %v317, 0.0
      %v574 = vmax.f32 %v318, 0.0
      %v575 = vmax.f32 %v319, 0.0
      %v576 = vmax.f32 %v320, 0.0
      %v577 = vmax.f32 %v321, 0.0
      %v578 = vmax.f32 %v322, 0.0
      %v579 = vmax.f32 %v323, 0.0
      %v580 = vmax.f32 %v324, 0.0
      %v581 = vmax.f32 %v325, 0.0
      %v582 = vmax.f32 %v326, 0.0
      %v583 = vmax.f32 %v327, 0.0
      %v584 = vmax.f32 %v328, 0.0
      %v585 = vmax.f32 %v329, 0.0
      %v586 = vmax.f32 %v330, 0.0
      %v587 = vmax.f32 %v331, 0.0
      %v588 = vmax.f32 %v332, 0.0
      %v589 = vmax.f32 %v333, 0.0
      %v590 = vmax.f32 %v334, 0.0
      %v591 = vmax.f32 %v335, 0.0
      %v592 = vmax.f32 %v336, 0.0
      %v593 = vmax.f32 %v337, 0.0
      %v594 = vmax.f32 %v338, 0.0
      %v595 = vmax.f32 %v339, 0.0
      %v596 = vmax.f32 %v340, 0.0
      %v597 = vmax.f32 %v341, 0.0
      %v598 = vmax.f32 %v342, 0.0
      %v599 = vmax.f32 %v343, 0.0
      %v600 = vmax.f32 %v344, 0.0
      %v601 = vmax.f32 %v345, 0.0
      %v602 = vmax.f32 %v346, 0.0
      %v603 = vmax.f32 %v347, 0.0
      %v604 = vmax.f32 %v348, 0.0
      %v605 = vmax.f32 %v349, 0.0
      %v606 = vmax.f32 %v350, 0.0
      %v607 = vmax.f32 %v351, 0.0
      %v608 = vmax.f32 %v352, 0.0
      %v609 = vmax.f32 %v353, 0.0
      %v610 = vmax.f32 %v354, 0.0
      %v611 = vmax.f32 %v355, 0.0
      %v612 = vmax.f32 %v356, 0.0
      %v613 = vmax.f32 %v357, 0.0
      %v614 = vmax.f32 %v358, 0.0
      %v615 = vmax.f32 %v359, 0.0
      %v616 = vmax.f32 %v360, 0.0
      %v617 = vmax.f32 %v361, 0.0
      %v618 = vmax.f32 %v362, 0.0
      %v619 = vmax.f32 %v363, 0.0
      %v620 = vmax.f32 %v364, 0.0
      %v621 = vmax.f32 %v365, 0.0
      %v622 = vmax.f32 %v366, 0.0
      %v623 = vmax.f32 %v367, 0.0
      %v624 = vmax.f32 %v368, 0.0
      %v625 = vmax.f32 %v369, 0.0
      %v626 = vmax.f32 %v370, 0.0
      %v627 = vmax.f32 %v371, 0.0
      %v628 = vmax.f32 %v372, 0.0
      %v629 = vmax.f32 %v373, 0.0
      %v630 = vmax.f32 %v374, 0.0
      %v631 = vmax.f32 %v375, 0.0
      %v632 = vmax.f32 %v376, 0.0
      %v633 = vmax.f32 %v377, 0.0
      %v634 = vmax.f32 %v378, 0.0
      %v635 = vmax.f32 %v379, 0.0
      %v636 = vmax.f32 %v380, 0.0
      %v637 = vmax.f32 %v381, 0.0
      %v638 = vmax.f32 %v382, 0.0
      %v639 = vmax.f32 %v383, 0.0
      %v640 = vmax.f32 %v384, 0.0
      %v641 = vmax.f32 %v385, 0.0
      %v642 = vmax.f32 %v386, 0.0
      %v643 = vmax.f32 %v387, 0.0
      %v644 = vmax.f32 %v388, 0.0
      %v645 = vmax.f32 %v389, 0.0
      %v646 = vmax.f32 %v390, 0.0
      %v647 = vmax.f32 %v391, 0.0
      %v648 = vmax.f32 %v392, 0.0
      %v649 = vmax.f32 %v393, 0.0
      %v650 = vmax.f32 %v394, 0.0
      %v651 = vmax.f32 %v395, 0.0
      %v652 = vmax.f32 %v396, 0.0
      %v653 = vmax.f32 %v397, 0.0
      %v654 = vmax.f32 %v398, 0.0
      %v655 = vmax.f32 %v399, 0.0
      %v656 = vmax.f32 %v400, 0.0
      %v657 = vmax.f32 %v401, 0.0
      %v658 = vmax.f32 %v402, 0.0
      %v659 = vmax.f32 %v403, 0.0
      %v660 = vmax.f32 %v404, 0.0
      %v661 = vmax.f32 %v405, 0.0
      %v662 = vmax.f32 %v406, 0.0
      %v663 = vmax.f32 %v407, 0.0
      %v664 = vmax.f32 %v408, 0.0
      %v665 = vmax.f32 %v409, 0.0
      %v666 = vmax.f32 %v410, 0.0
      %v667 = vmax.f32 %v411, 0.0
      %v668 = vmax.f32 %v412, 0.0
      %v669 = vmax.f32 %v413, 0.0
      %v670 = vmax.f32 %v414, 0.0
      %v671 = vmax.f32 %v415, 0.0
      %v672 = vmax.f32 %v416, 0.0
      %v673 = vmax.f32 %v417, 0.0
      %v674 = vmax.f32 %v418, 0.0
      %v675 = vmax.f32 %v419, 0.0
      %v676 = vmax.f32 %v420, 0.0
      %v677 = vmax.f32 %v421, 0.0
      %v678 = vmax.f32 %v422, 0.0
      %v679 = vmax.f32 %v423, 0.0
      %v680 = vmax.f32 %v424, 0.0
      %v681 = vmax.f32 %v425, 0.0
      %v682 = vmax.f32 %v426, 0.0
      %v683 = vmax.f32 %v427, 0.0
      %v684 = vmax.f32 %v428, 0.0
      %v685 = vmax.f32 %v429, 0.0
      %v686 = vmax.f32 %v430, 0.0
      %v687 = vmax.f32 %v431, 0.0
      %v688 = vmax.f32 %v432, 0.0
      %v689 = vmax.f32 %v433, 0.0
      %v690 = vmax.f32 %v434, 0.0
      %v691 = vmax.f32 %v435, 0.0
      %v692 = vmax.f32 %v436, 0.0
      %v693 = vmax.f32 %v437, 0.0
      %v694 = vmax.f32 %v438, 0.0
      %v695 = vmax.f32 %v439, 0.0
      %v696 = vmax.f32 %v440, 0.0
      %v697 = vmax.f32 %v441, 0.0
      %v698 = vmax.f32 %v442, 0.0
      %v699 = vmax.f32 %v443, 0.0
      %v700 = vmax.f32 %v444, 0.0
      %v701 = vmax.f32 %v445, 0.0
      %v702 = vmax.f32 %v446, 0.0
      %v703 = vmax.f32 %v447, 0.0
      %v704 = vmax.f32 %v448, 0.0
      %v705 = vpack.c.bf16 %v451, %v449
      %v706 = vpack.c.bf16 %v452, %v450
      %v707 = vpack.c.bf16 %v455, %v453
      %v708 = vpack.c.bf16 %v456, %v454
      %v709 = vpack.c.bf16 %v459, %v457
      %v710 = vpack.c.bf16 %v460, %v458
      %v711 = vpack.c.bf16 %v463, %v461
      %v712 = vpack.c.bf16 %v464, %v462
      %v713 = vpack.c.bf16 %v467, %v465
      %v714 = vpack.c.bf16 %v468, %v466
      %v715 = vpack.c.bf16 %v471, %v469
      %v716 = vpack.c.bf16 %v472, %v470
      %v717 = vpack.c.bf16 %v475, %v473
      %v718 = vpack.c.bf16 %v476, %v474
      %v719 = vpack.c.bf16 %v479, %v477
      %v720 = vpack.c.bf16 %v480, %v478
      %v721 = vpack.c.bf16 %v483, %v481
      %v722 = vpack.c.bf16 %v484, %v482
      %v723 = vpack.c.bf16 %v487, %v485
      %v724 = vpack.c.bf16 %v488, %v486
      %v725 = vpack.c.bf16 %v491, %v489
      %v726 = vpack.c.bf16 %v492, %v490
      %v727 = vpack.c.bf16 %v495, %v493
      %v728 = vpack.c.bf16 %v496, %v494
      %v729 = vpack.c.bf16 %v499, %v497
      %v730 = vpack.c.bf16 %v500, %v498
      %v731 = vpack.c.bf16 %v503, %v501
      %v732 = vpack.c.bf16 %v504, %v502
      %v733 = vpack.c.bf16 %v507, %v505
      %v734 = vpack.c.bf16 %v508, %v506
      %v735 = vpack.c.bf16 %v511, %v509
      %v736 = vpack.c.bf16 %v512, %v510
      %v737 = vpack.c.bf16 %v515, %v513
      %v738 = vpack.c.bf16 %v516, %v514
      %v739 = vpack.c.bf16 %v519, %v517
      %v740 = vpack.c.bf16 %v520, %v518
      %v741 = vpack.c.bf16 %v523, %v521
      %v742 = vpack.c.bf16 %v524, %v522
      %v743 = vpack.c.bf16 %v527, %v525
      %v744 = vpack.c.bf16 %v528, %v526
      %v745 = vpack.c.bf16 %v531, %v529
      %v746 = vpack.c.bf16 %v532, %v530
      %v747 = vpack.c.bf16 %v535, %v533
      %v748 = vpack.c.bf16 %v536, %v534
      %v749 = vpack.c.bf16 %v539, %v537
      %v750 = vpack.c.bf16 %v540, %v538
      %v751 = vpack.c.bf16 %v543, %v541
      %v752 = vpack.c.bf16 %v544, %v542
      %v753 = vpack.c.bf16 %v547, %v545
      %v754 = vpack.c.bf16 %v548, %v546
      %v755 = vpack.c.bf16 %v551, %v549
      %v756 = vpack.c.bf16 %v552, %v550
      %v757 = vpack.c.bf16 %v555, %v553
      %v758 = vpack.c.bf16 %v556, %v554
      %v759 = vpack.c.bf16 %v559, %v557
      %v760 = vpack.c.bf16 %v560, %v558
      %v761 = vpack.c.bf16 %v563, %v561
      %v762 = vpack.c.bf16 %v564, %v562
      %v763 = vpack.c.bf16 %v567, %v565
      %v764 = vpack.c.bf16 %v568, %v566
      %v765 = vpack.c.bf16 %v571, %v569
      %v766 = vpack.c.bf16 %v572, %v570
      %v767 = vpack.c.bf16 %v575, %v573
      %v768 = vpack.c.bf16 %v576, %v574
      %v769 = vpack.c.bf16 %v579, %v577
      %v770 = vpack.c.bf16 %v580, %v578
      %v771 = vpack.c.bf16 %v583, %v581
      %v772 = vpack.c.bf16 %v584, %v582
      %v773 = vpack.c.bf16 %v587, %v585
      %v774 = vpack.c.bf16 %v588, %v586
      %v775 = vpack.c.bf16 %v591, %v589
      %v776 = vpack.c.bf16 %v592, %v590
      %v777 = vpack.c.bf16 %v595, %v593
      %v778 = vpack.c.bf16 %v596, %v594
      %v779 = vpack.c.bf16 %v599, %v597
      %v780 = vpack.c.bf16 %v600, %v598
      %v781 = vpack.c.bf16 %v603, %v601
      %v782 = vpack.c.bf16 %v604, %v602
      %v783 = vpack.c.bf16 %v607, %v605
      %v784 = vpack.c.bf16 %v608, %v606
      %v785 = vpack.c.bf16 %v611, %v609
      %v786 = vpack.c.bf16 %v612, %v610
      %v787 = vpack.c.bf16 %v615, %v613
      %v788 = vpack.c.bf16 %v616, %v614
      %v789 = vpack.c.bf16 %v619, %v617
      %v790 = vpack.c.bf16 %v620, %v618
      %v791 = vpack.c.bf16 %v623, %v621
      %v792 = vpack.c.bf16 %v624, %v622
      %v793 = vpack.c.bf16 %v627, %v625
      %v794 = vpack.c.bf16 %v628, %v626
      %v795 = vpack.c.bf16 %v631, %v629
      %v796 = vpack.c.bf16 %v632, %v630
      %v797 = vpack.c.bf16 %v635, %v633
      %v798 = vpack.c.bf16 %v636, %v634
      %v799 = vpack.c.bf16 %v639, %v637
      %v800 = vpack.c.bf16 %v640, %v638
      %v801 = vpack.c.bf16 %v643, %v641
      %v802 = vpack.c.bf16 %v644, %v642
      %v803 = vpack.c.bf16 %v647, %v645
      %v804 = vpack.c.bf16 %v648, %v646
      %v805 = vpack.c.bf16 %v651, %v649
      %v806 = vpack.c.bf16 %v652, %v650
      %v807 = vpack.c.bf16 %v655, %v653
      %v808 = vpack.c.bf16 %v656, %v654
      %v809 = vpack.c.bf16 %v659, %v657
      %v810 = vpack.c.bf16 %v660, %v658
      %v811 = vpack.c.bf16 %v663, %v661
      %v812 = vpack.c.bf16 %v664, %v662
      %v813 = vpack.c.bf16 %v667, %v665
      %v814 = vpack.c.bf16 %v668, %v666
      %v815 = vpack.c.bf16 %v671, %v669
      %v816 = vpack.c.bf16 %v672, %v670
      %v817 = vpack.c.bf16 %v675, %v673
      %v818 = vpack.c.bf16 %v676, %v674
      %v819 = vpack.c.bf16 %v679, %v677
      %v820 = vpack.c.bf16 %v680, %v678
      %v821 = vpack.c.bf16 %v683, %v681
      %v822 = vpack.c.bf16 %v684, %v682
      %v823 = vpack.c.bf16 %v687, %v685
      %v824 = vpack.c.bf16 %v688, %v686
      %v825 = vpack.c.bf16 %v691, %v689
      %v826 = vpack.c.bf16 %v692, %v690
      %v827 = vpack.c.bf16 %v695, %v693
      %v828 = vpack.c.bf16 %v696, %v694
      %v829 = vpack.c.bf16 %v699, %v697
      %v830 = vpack.c.bf16 %v700, %v698
      %v831 = vpack.c.bf16 %v703, %v701
      %v832 = vpack.c.bf16 %v704, %v702
      %v833 = vld [vmem:[%s1] sm:$0xff]
      %v834 = vld [vmem:[%s1 + $0x8] sm:$0xff]
      %v835 = vld [vmem:[%s1 + $0x10] sm:$0xff]
      %v836 = vld [vmem:[%s1 + $0x18] sm:$0xff]
      %v837 = vld [vmem:[%s1 + $0x20] sm:$0xff]
      %v838 = vld [vmem:[%s1 + $0x28] sm:$0xff]
      %v839 = vld [vmem:[%s1 + $0x30] sm:$0xff]
      %v840 = vld [vmem:[%s1 + $0x38] sm:$0xff]
      %v841 = vld [vmem:[%s1 + $0x40] sm:$0xff]
      %v842 = vld [vmem:[%s1 + $0x48] sm:$0xff]
      %v843 = vld [vmem:[%s1 + $0x50] sm:$0xff]
      %v844 = vld [vmem:[%s1 + $0x58] sm:$0xff]
      %v845 = vld [vmem:[%s1 + $0x60] sm:$0xff]
      %v846 = vld [vmem:[%s1 + $0x68] sm:$0xff]
      %v847 = vld [vmem:[%s1 + $0x70] sm:$0xff]
      %v848 = vld [vmem:[%s1 + $0x78] sm:$0xff]
      %v849 = vld [vmem:[%s1 + $0x80] sm:$0xff]
      %v850 = vld [vmem:[%s1 + $0x88] sm:$0xff]
      %v851 = vld [vmem:[%s1 + $0x90] sm:$0xff]
      %v852 = vld [vmem:[%s1 + $0x98] sm:$0xff]
      %v853 = vld [vmem:[%s1 + $0xa0] sm:$0xff]
      %v854 = vld [vmem:[%s1 + $0xa8] sm:$0xff]
      %v855 = vld [vmem:[%s1 + $0xb0] sm:$0xff]
      %v856 = vld [vmem:[%s1 + $0xb8] sm:$0xff]
      %v857 = vld [vmem:[%s1 + $0xc0] sm:$0xff]
      %v858 = vld [vmem:[%s1 + $0xc8] sm:$0xff]
      %v859 = vld [vmem:[%s1 + $0xd0] sm:$0xff]
      %v860 = vld [vmem:[%s1 + $0xd8] sm:$0xff]
      %v861 = vld [vmem:[%s1 + $0xe0] sm:$0xff]
      %v862 = vld [vmem:[%s1 + $0xe8] sm:$0xff]
      %v863 = vld [vmem:[%s1 + $0xf0] sm:$0xff]
      %v864 = vld [vmem:[%s1 + $0xf8] sm:$0xff]
      %v865 = vld [vmem:[%s1 + $0x100] sm:$0xff]
      %v866 = vld [vmem:[%s1 + $0x108] sm:$0xff]
      %v867 = vld [vmem:[%s1 + $0x110] sm:$0xff]
      %v868 = vld [vmem:[%s1 + $0x118] sm:$0xff]
      %v869 = vld [vmem:[%s1 + $0x120] sm:$0xff]
      %v870 = vld [vmem:[%s1 + $0x128] sm:$0xff]
      %v871 = vld [vmem:[%s1 + $0x130] sm:$0xff]
      %v872 = vld [vmem:[%s1 + $0x138] sm:$0xff]
      %v873 = vld [vmem:[%s1 + $0x140] sm:$0xff]
      %v874 = vld [vmem:[%s1 + $0x148] sm:$0xff]
      %v875 = vld [vmem:[%s1 + $0x150] sm:$0xff]
      %v876 = vld [vmem:[%s1 + $0x158] sm:$0xff]
      %v877 = vld [vmem:[%s1 + $0x160] sm:$0xff]
      %v878 = vld [vmem:[%s1 + $0x168] sm:$0xff]
      %v879 = vld [vmem:[%s1 + $0x170] sm:$0xff]
      %v880 = vld [vmem:[%s1 + $0x178] sm:$0xff]
      %v881 = vld [vmem:[%s1 + $0x180] sm:$0xff]
      %v882 = vld [vmem:[%s1 + $0x188] sm:$0xff]
      %v883 = vld [vmem:[%s1 + $0x190] sm:$0xff]
      %v884 = vld [vmem:[%s1 + $0x198] sm:$0xff]
      %v885 = vld [vmem:[%s1 + $0x1a0] sm:$0xff]
      %v886 = vld [vmem:[%s1 + $0x1a8] sm:$0xff]
      %v887 = vld [vmem:[%s1 + $0x1b0] sm:$0xff]
      %v888 = vld [vmem:[%s1 + $0x1b8] sm:$0xff]
      %v889 = vld [vmem:[%s1 + $0x1c0] sm:$0xff]
      %v890 = vld [vmem:[%s1 + $0x1c8] sm:$0xff]
      %v891 = vld [vmem:[%s1 + $0x1d0] sm:$0xff]
      %v892 = vld [vmem:[%s1 + $0x1d8] sm:$0xff]
      %v893 = vld [vmem:[%s1 + $0x1e0] sm:$0xff]
      %v894 = vld [vmem:[%s1 + $0x1e8] sm:$0xff]
      %v895 = vld [vmem:[%s1 + $0x1f0] sm:$0xff]
      %v896 = vld [vmem:[%s1 + $0x1f8] sm:$0xff]
      %v897 = vld [vmem:[%s1 + $0x200] sm:$0xff]
      %v898 = vld [vmem:[%s1 + $0x208] sm:$0xff]
      %v899 = vld [vmem:[%s1 + $0x210] sm:$0xff]
      %v900 = vld [vmem:[%s1 + $0x218] sm:$0xff]
      %v901 = vld [vmem:[%s1 + $0x220] sm:$0xff]
      %v902 = vld [vmem:[%s1 + $0x228] sm:$0xff]
      %v903 = vld [vmem:[%s1 + $0x230] sm:$0xff]
      %v904 = vld [vmem:[%s1 + $0x238] sm:$0xff]
      %v905 = vld [vmem:[%s1 + $0x240] sm:$0xff]
      %v906 = vld [vmem:[%s1 + $0x248] sm:$0xff]
      %v907 = vld [vmem:[%s1 + $0x250] sm:$0xff]
      %v908 = vld [vmem:[%s1 + $0x258] sm:$0xff]
      %v909 = vld [vmem:[%s1 + $0x260] sm:$0xff]
      %v910 = vld [vmem:[%s1 + $0x268] sm:$0xff]
      %v911 = vld [vmem:[%s1 + $0x270] sm:$0xff]
      %v912 = vld [vmem:[%s1 + $0x278] sm:$0xff]
      %v913 = vld [vmem:[%s1 + $0x280] sm:$0xff]
      %v914 = vld [vmem:[%s1 + $0x288] sm:$0xff]
      %v915 = vld [vmem:[%s1 + $0x290] sm:$0xff]
      %v916 = vld [vmem:[%s1 + $0x298] sm:$0xff]
      %v917 = vld [vmem:[%s1 + $0x2a0] sm:$0xff]
      %v918 = vld [vmem:[%s1 + $0x2a8] sm:$0xff]
      %v919 = vld [vmem:[%s1 + $0x2b0] sm:$0xff]
      %v920 = vld [vmem:[%s1 + $0x2b8] sm:$0xff]
      %v921 = vld [vmem:[%s1 + $0x2c0] sm:$0xff]
      %v922 = vld [vmem:[%s1 + $0x2c8] sm:$0xff]
      %v923 = vld [vmem:[%s1 + $0x2d0] sm:$0xff]
      %v924 = vld [vmem:[%s1 + $0x2d8] sm:$0xff]
      %v925 = vld [vmem:[%s1 + $0x2e0] sm:$0xff]
      %v926 = vld [vmem:[%s1 + $0x2e8] sm:$0xff]
      %v927 = vld [vmem:[%s1 + $0x2f0] sm:$0xff]
      %v928 = vld [vmem:[%s1 + $0x2f8] sm:$0xff]
      %v929 = vld [vmem:[%s1 + $0x300] sm:$0xff]
      %v930 = vld [vmem:[%s1 + $0x308] sm:$0xff]
      %v931 = vld [vmem:[%s1 + $0x310] sm:$0xff]
      %v932 = vld [vmem:[%s1 + $0x318] sm:$0xff]
      %v933 = vld [vmem:[%s1 + $0x320] sm:$0xff]
      %v934 = vld [vmem:[%s1 + $0x328] sm:$0xff]
      %v935 = vld [vmem:[%s1 + $0x330] sm:$0xff]
      %v936 = vld [vmem:[%s1 + $0x338] sm:$0xff]
      %v937 = vld [vmem:[%s1 + $0x340] sm:$0xff]
      %v938 = vld [vmem:[%s1 + $0x348] sm:$0xff]
      %v939 = vld [vmem:[%s1 + $0x350] sm:$0xff]
      %v940 = vld [vmem:[%s1 + $0x358] sm:$0xff]
      %v941 = vld [vmem:[%s1 + $0x360] sm:$0xff]
      %v942 = vld [vmem:[%s1 + $0x368] sm:$0xff]
      %v943 = vld [vmem:[%s1 + $0x370] sm:$0xff]
      %v944 = vld [vmem:[%s1 + $0x378] sm:$0xff]
      %v945 = vld [vmem:[%s1 + $0x380] sm:$0xff]
      %v946 = vld [vmem:[%s1 + $0x388] sm:$0xff]
      %v947 = vld [vmem:[%s1 + $0x390] sm:$0xff]
      %v948 = vld [vmem:[%s1 + $0x398] sm:$0xff]
      %v949 = vld [vmem:[%s1 + $0x3a0] sm:$0xff]
      %v950 = vld [vmem:[%s1 + $0x3a8] sm:$0xff]
      %v951 = vld [vmem:[%s1 + $0x3b0] sm:$0xff]
      %v952 = vld [vmem:[%s1 + $0x3b8] sm:$0xff]
      %v953 = vld [vmem:[%s1 + $0x3c0] sm:$0xff]
      %v954 = vld [vmem:[%s1 + $0x3c8] sm:$0xff]
      %v955 = vld [vmem:[%s1 + $0x3d0] sm:$0xff]
      %v956 = vld [vmem:[%s1 + $0x3d8] sm:$0xff]
      %v957 = vld [vmem:[%s1 + $0x3e0] sm:$0xff]
      %v958 = vld [vmem:[%s1 + $0x3e8] sm:$0xff]
      %v959 = vld [vmem:[%s1 + $0x3f0] sm:$0xff]
      %v960 = vld [vmem:[%s1 + $0x3f8] sm:$0xff]
      %v1089 = vunpack.c.l.b16 %v833
      %v1090 = vunpack.c.h.b16 %v833
      %v1091 = vunpack.c.l.b16 %v834
      %v1092 = vunpack.c.h.b16 %v834
      %v1093 = vunpack.c.l.b16 %v835
      %v1094 = vunpack.c.h.b16 %v835
      %v1095 = vunpack.c.l.b16 %v836
      %v1096 = vunpack.c.h.b16 %v836
      %v1097 = vunpack.c.l.b16 %v837
      %v1098 = vunpack.c.h.b16 %v837
      %v1099 = vunpack.c.l.b16 %v838
      %v1100 = vunpack.c.h.b16 %v838
      %v1101 = vunpack.c.l.b16 %v839
      %v1102 = vunpack.c.h.b16 %v839
      %v1103 = vunpack.c.l.b16 %v840
      %v1104 = vunpack.c.h.b16 %v840
      %v1105 = vunpack.c.l.b16 %v841
      %v1106 = vunpack.c.h.b16 %v841
      %v1107 = vunpack.c.l.b16 %v842
      %v1108 = vunpack.c.h.b16 %v842
      %v1109 = vunpack.c.l.b16 %v843
      %v1110 = vunpack.c.h.b16 %v843
      %v1111 = vunpack.c.l.b16 %v844
      %v1112 = vunpack.c.h.b16 %v844
      %v1113 = vunpack.c.l.b16 %v845
      %v1114 = vunpack.c.h.b16 %v845
      %v1115 = vunpack.c.l.b16 %v846
      %v1116 = vunpack.c.h.b16 %v846
      %v1117 = vunpack.c.l.b16 %v847
      %v1118 = vunpack.c.h.b16 %v847
      %v1119 = vunpack.c.l.b16 %v848
      %v1120 = vunpack.c.h.b16 %v848
      %v1121 = vunpack.c.l.b16 %v849
      %v1122 = vunpack.c.h.b16 %v849
      %v1123 = vunpack.c.l.b16 %v850
      %v1124 = vunpack.c.h.b16 %v850
      %v1125 = vunpack.c.l.b16 %v851
      %v1126 = vunpack.c.h.b16 %v851
      %v1127 = vunpack.c.l.b16 %v852
      %v1128 = vunpack.c.h.b16 %v852
      %v1129 = vunpack.c.l.b16 %v853
      %v1130 = vunpack.c.h.b16 %v853
      %v1131 = vunpack.c.l.b16 %v854
      %v1132 = vunpack.c.h.b16 %v854
      %v1133 = vunpack.c.l.b16 %v855
      %v1134 = vunpack.c.h.b16 %v855
      %v1135 = vunpack.c.l.b16 %v856
      %v1136 = vunpack.c.h.b16 %v856
      %v1137 = vunpack.c.l.b16 %v857
      %v1138 = vunpack.c.h.b16 %v857
      %v1139 = vunpack.c.l.b16 %v858
      %v1140 = vunpack.c.h.b16 %v858
      %v1141 = vunpack.c.l.b16 %v859
      %v1142 = vunpack.c.h.b16 %v859
      %v1143 = vunpack.c.l.b16 %v860
      %v1144 = vunpack.c.h.b16 %v860
      %v1145 = vunpack.c.l.b16 %v861
      %v1146 = vunpack.c.h.b16 %v861
      %v1147 = vunpack.c.l.b16 %v862
      %v1148 = vunpack.c.h.b16 %v862
      %v1149 = vunpack.c.l.b16 %v863
      %v1150 = vunpack.c.h.b16 %v863
      %v1151 = vunpack.c.l.b16 %v864
      %v1152 = vunpack.c.h.b16 %v864
      %v1153 = vunpack.c.l.b16 %v865
      %v1154 = vunpack.c.h.b16 %v865
      %v1155 = vunpack.c.l.b16 %v866
      %v1156 = vunpack.c.h.b16 %v866
      %v1157 = vunpack.c.l.b16 %v867
      %v1158 = vunpack.c.h.b16 %v867
      %v1159 = vunpack.c.l.b16 %v868
      %v1160 = vunpack.c.h.b16 %v868
      %v1161 = vunpack.c.l.b16 %v869
      %v1162 = vunpack.c.h.b16 %v869
      %v1163 = vunpack.c.l.b16 %v870
      %v1164 = vunpack.c.h.b16 %v870
      %v1165 = vunpack.c.l.b16 %v871
      %v1166 = vunpack.c.h.b16 %v871
      %v1167 = vunpack.c.l.b16 %v872
      %v1168 = vunpack.c.h.b16 %v872
      %v1169 = vunpack.c.l.b16 %v873
      %v1170 = vunpack.c.h.b16 %v873
      %v1171 = vunpack.c.l.b16 %v874
      %v1172 = vunpack.c.h.b16 %v874
      %v1173 = vunpack.c.l.b16 %v875
      %v1174 = vunpack.c.h.b16 %v875
      %v1175 = vunpack.c.l.b16 %v876
      %v1176 = vunpack.c.h.b16 %v876
      %v1177 = vunpack.c.l.b16 %v877
      %v1178 = vunpack.c.h.b16 %v877
      %v1179 = vunpack.c.l.b16 %v878
      %v1180 = vunpack.c.h.b16 %v878
      %v1181 = vunpack.c.l.b16 %v879
      %v1182 = vunpack.c.h.b16 %v879
      %v1183 = vunpack.c.l.b16 %v880
      %v1184 = vunpack.c.h.b16 %v880
      %v1185 = vunpack.c.l.b16 %v881
      %v1186 = vunpack.c.h.b16 %v881
      %v1187 = vunpack.c.l.b16 %v882
      %v1188 = vunpack.c.h.b16 %v882
      %v1189 = vunpack.c.l.b16 %v883
      %v1190 = vunpack.c.h.b16 %v883
      %v1191 = vunpack.c.l.b16 %v884
      %v1192 = vunpack.c.h.b16 %v884
      %v1193 = vunpack.c.l.b16 %v885
      %v1194 = vunpack.c.h.b16 %v885
      %v1195 = vunpack.c.l.b16 %v886
      %v1196 = vunpack.c.h.b16 %v886
      %v1197 = vunpack.c.l.b16 %v887
      %v1198 = vunpack.c.h.b16 %v887
      %v1199 = vunpack.c.l.b16 %v888
      %v1200 = vunpack.c.h.b16 %v888
      %v1201 = vunpack.c.l.b16 %v889
      %v1202 = vunpack.c.h.b16 %v889
      %v1203 = vunpack.c.l.b16 %v890
      %v1204 = vunpack.c.h.b16 %v890
      %v1205 = vunpack.c.l.b16 %v891
      %v1206 = vunpack.c.h.b16 %v891
      %v1207 = vunpack.c.l.b16 %v892
      %v1208 = vunpack.c.h.b16 %v892
      %v1209 = vunpack.c.l.b16 %v893
      %v1210 = vunpack.c.h.b16 %v893
      %v1211 = vunpack.c.l.b16 %v894
      %v1212 = vunpack.c.h.b16 %v894
      %v1213 = vunpack.c.l.b16 %v895
      %v1214 = vunpack.c.h.b16 %v895
      %v1215 = vunpack.c.l.b16 %v896
      %v1216 = vunpack.c.h.b16 %v896
      %v1217 = vunpack.c.l.b16 %v897
      %v1218 = vunpack.c.h.b16 %v897
      %v1219 = vunpack.c.l.b16 %v898
      %v1220 = vunpack.c.h.b16 %v898
      %v1221 = vunpack.c.l.b16 %v899
      %v1222 = vunpack.c.h.b16 %v899
      %v1223 = vunpack.c.l.b16 %v900
      %v1224 = vunpack.c.h.b16 %v900
      %v1225 = vunpack.c.l.b16 %v901
      %v1226 = vunpack.c.h.b16 %v901
      %v1227 = vunpack.c.l.b16 %v902
      %v1228 = vunpack.c.h.b16 %v902
      %v1229 = vunpack.c.l.b16 %v903
      %v1230 = vunpack.c.h.b16 %v903
      %v1231 = vunpack.c.l.b16 %v904
      %v1232 = vunpack.c.h.b16 %v904
      %v1233 = vunpack.c.l.b16 %v905
      %v1234 = vunpack.c.h.b16 %v905
      %v1235 = vunpack.c.l.b16 %v906
      %v1236 = vunpack.c.h.b16 %v906
      %v1237 = vunpack.c.l.b16 %v907
      %v1238 = vunpack.c.h.b16 %v907
      %v1239 = vunpack.c.l.b16 %v908
      %v1240 = vunpack.c.h.b16 %v908
      %v1241 = vunpack.c.l.b16 %v909
      %v1242 = vunpack.c.h.b16 %v909
      %v1243 = vunpack.c.l.b16 %v910
      %v1244 = vunpack.c.h.b16 %v910
      %v1245 = vunpack.c.l.b16 %v911
      %v1246 = vunpack.c.h.b16 %v911
      %v1247 = vunpack.c.l.b16 %v912
      %v1248 = vunpack.c.h.b16 %v912
      %v1249 = vunpack.c.l.b16 %v913
      %v1250 = vunpack.c.h.b16 %v913
      %v1251 = vunpack.c.l.b16 %v914
      %v1252 = vunpack.c.h.b16 %v914
      %v1253 = vunpack.c.l.b16 %v915
      %v1254 = vunpack.c.h.b16 %v915
      %v1255 = vunpack.c.l.b16 %v916
      %v1256 = vunpack.c.h.b16 %v916
      %v1257 = vunpack.c.l.b16 %v917
      %v1258 = vunpack.c.h.b16 %v917
      %v1259 = vunpack.c.l.b16 %v918
      %v1260 = vunpack.c.h.b16 %v918
      %v1261 = vunpack.c.l.b16 %v919
      %v1262 = vunpack.c.h.b16 %v919
      %v1263 = vunpack.c.l.b16 %v920
      %v1264 = vunpack.c.h.b16 %v920
      %v1265 = vunpack.c.l.b16 %v921
      %v1266 = vunpack.c.h.b16 %v921
      %v1267 = vunpack.c.l.b16 %v922
      %v1268 = vunpack.c.h.b16 %v922
      %v1269 = vunpack.c.l.b16 %v923
      %v1270 = vunpack.c.h.b16 %v923
      %v1271 = vunpack.c.l.b16 %v924
      %v1272 = vunpack.c.h.b16 %v924
      %v1273 = vunpack.c.l.b16 %v925
      %v1274 = vunpack.c.h.b16 %v925
      %v1275 = vunpack.c.l.b16 %v926
      %v1276 = vunpack.c.h.b16 %v926
      %v1277 = vunpack.c.l.b16 %v927
      %v1278 = vunpack.c.h.b16 %v927
      %v1279 = vunpack.c.l.b16 %v928
      %v1280 = vunpack.c.h.b16 %v928
      %v1281 = vunpack.c.l.b16 %v929
      %v1282 = vunpack.c.h.b16 %v929
      %v1283 = vunpack.c.l.b16 %v930
      %v1284 = vunpack.c.h.b16 %v930
      %v1285 = vunpack.c.l.b16 %v931
      %v1286 = vunpack.c.h.b16 %v931
      %v1287 = vunpack.c.l.b16 %v932
      %v1288 = vunpack.c.h.b16 %v932
      %v1289 = vunpack.c.l.b16 %v933
      %v1290 = vunpack.c.h.b16 %v933
      %v1291 = vunpack.c.l.b16 %v934
      %v1292 = vunpack.c.h.b16 %v934
      %v1293 = vunpack.c.l.b16 %v935
      %v1294 = vunpack.c.h.b16 %v935
      %v1295 = vunpack.c.l.b16 %v936
      %v1296 = vunpack.c.h.b16 %v936
      %v1297 = vunpack.c.l.b16 %v937
      %v1298 = vunpack.c.h.b16 %v937
      %v1299 = vunpack.c.l.b16 %v938
      %v1300 = vunpack.c.h.b16 %v938
      %v1301 = vunpack.c.l.b16 %v939
      %v1302 = vunpack.c.h.b16 %v939
      %v1303 = vunpack.c.l.b16 %v940
      %v1304 = vunpack.c.h.b16 %v940
      %v1305 = vunpack.c.l.b16 %v941
      %v1306 = vunpack.c.h.b16 %v941
      %v1307 = vunpack.c.l.b16 %v942
      %v1308 = vunpack.c.h.b16 %v942
      %v1309 = vunpack.c.l.b16 %v943
      %v1310 = vunpack.c.h.b16 %v943
      %v1311 = vunpack.c.l.b16 %v944
      %v1312 = vunpack.c.h.b16 %v944
      %v1313 = vunpack.c.l.b16 %v945
      %v1314 = vunpack.c.h.b16 %v945
      %v1315 = vunpack.c.l.b16 %v946
      %v1316 = vunpack.c.h.b16 %v946
      %v1317 = vunpack.c.l.b16 %v947
      %v1318 = vunpack.c.h.b16 %v947
      %v1319 = vunpack.c.l.b16 %v948
      %v1320 = vunpack.c.h.b16 %v948
      %v1321 = vunpack.c.l.b16 %v949
      %v1322 = vunpack.c.h.b16 %v949
      %v1323 = vunpack.c.l.b16 %v950
      %v1324 = vunpack.c.h.b16 %v950
      %v1325 = vunpack.c.l.b16 %v951
      %v1326 = vunpack.c.h.b16 %v951
      %v1327 = vunpack.c.l.b16 %v952
      %v1328 = vunpack.c.h.b16 %v952
      %v1329 = vunpack.c.l.b16 %v953
      %v1330 = vunpack.c.h.b16 %v953
      %v1331 = vunpack.c.l.b16 %v954
      %v1332 = vunpack.c.h.b16 %v954
      %v1333 = vunpack.c.l.b16 %v955
      %v1334 = vunpack.c.h.b16 %v955
      %v1335 = vunpack.c.l.b16 %v956
      %v1336 = vunpack.c.h.b16 %v956
      %v1337 = vunpack.c.l.b16 %v957
      %v1338 = vunpack.c.h.b16 %v957
      %v1339 = vunpack.c.l.b16 %v958
      %v1340 = vunpack.c.h.b16 %v958
      %v1341 = vunpack.c.l.b16 %v959
      %v1342 = vunpack.c.h.b16 %v959
      %v1343 = vunpack.c.l.b16 %v960
      %v1344 = vunpack.c.h.b16 %v960
      %v1345 = vpack.c.b16 %v1097, %v1089
      %v1346 = vpack.c.b16 %v1098, %v1090
      %v1347 = vpack.c.b16 %v1099, %v1091
      %v1348 = vpack.c.b16 %v1100, %v1092
      %v1349 = vpack.c.b16 %v1101, %v1093
      %v1350 = vpack.c.b16 %v1102, %v1094
      %v1351 = vpack.c.b16 %v1103, %v1095
      %v1352 = vpack.c.b16 %v1104, %v1096
      %v1353 = vpack.c.b16 %v1113, %v1105
      %v1354 = vpack.c.b16 %v1114, %v1106
      %v1355 = vpack.c.b16 %v1115, %v1107
      %v1356 = vpack.c.b16 %v1116, %v1108
      %v1357 = vpack.c.b16 %v1117, %v1109
      %v1358 = vpack.c.b16 %v1118, %v1110
      %v1359 = vpack.c.b16 %v1119, %v1111
      %v1360 = vpack.c.b16 %v1120, %v1112
      %v1361 = vpack.c.b16 %v1129, %v1121
      %v1362 = vpack.c.b16 %v1130, %v1122
      %v1363 = vpack.c.b16 %v1131, %v1123
      %v1364 = vpack.c.b16 %v1132, %v1124
      %v1365 = vpack.c.b16 %v1133, %v1125
      %v1366 = vpack.c.b16 %v1134, %v1126
      %v1367 = vpack.c.b16 %v1135, %v1127
      %v1368 = vpack.c.b16 %v1136, %v1128
      %v1369 = vpack.c.b16 %v1145, %v1137
      %v1370 = vpack.c.b16 %v1146, %v1138
      %v1371 = vpack.c.b16 %v1147, %v1139
      %v1372 = vpack.c.b16 %v1148, %v1140
      %v1373 = vpack.c.b16 %v1149, %v1141
      %v1374 = vpack.c.b16 %v1150, %v1142
      %v1375 = vpack.c.b16 %v1151, %v1143
      %v1376 = vpack.c.b16 %v1152, %v1144
      %v1377 = vpack.c.b16 %v1161, %v1153
      %v1378 = vpack.c.b16 %v1162, %v1154
      %v1379 = vpack.c.b16 %v1163, %v1155
      %v1380 = vpack.c.b16 %v1164, %v1156
      %v1381 = vpack.c.b16 %v1165, %v1157
      %v1382 = vpack.c.b16 %v1166, %v1158
      %v1383 = vpack.c.b16 %v1167, %v1159
      %v1384 = vpack.c.b16 %v1168, %v1160
      %v1385 = vpack.c.b16 %v1177, %v1169
      %v1386 = vpack.c.b16 %v1178, %v1170
      %v1387 = vpack.c.b16 %v1179, %v1171
      %v1388 = vpack.c.b16 %v1180, %v1172
      %v1389 = vpack.c.b16 %v1181, %v1173
      %v1390 = vpack.c.b16 %v1182, %v1174
      %v1391 = vpack.c.b16 %v1183, %v1175
      %v1392 = vpack.c.b16 %v1184, %v1176
      %v1393 = vpack.c.b16 %v1193, %v1185
      %v1394 = vpack.c.b16 %v1194, %v1186
      %v1395 = vpack.c.b16 %v1195, %v1187
      %v1396 = vpack.c.b16 %v1196, %v1188
      %v1397 = vpack.c.b16 %v1197, %v1189
      %v1398 = vpack.c.b16 %v1198, %v1190
      %v1399 = vpack.c.b16 %v1199, %v1191
      %v1400 = vpack.c.b16 %v1200, %v1192
      %v1401 = vpack.c.b16 %v1209, %v1201
      %v1402 = vpack.c.b16 %v1210, %v1202
      %v1403 = vpack.c.b16 %v1211, %v1203
      %v1404 = vpack.c.b16 %v1212, %v1204
      %v1405 = vpack.c.b16 %v1213, %v1205
      %v1406 = vpack.c.b16 %v1214, %v1206
      %v1407 = vpack.c.b16 %v1215, %v1207
      %v1408 = vpack.c.b16 %v1216, %v1208
      %v1409 = vpack.c.b16 %v1225, %v1217
      %v1410 = vpack.c.b16 %v1226, %v1218
      %v1411 = vpack.c.b16 %v1227, %v1219
      %v1412 = vpack.c.b16 %v1228, %v1220
      %v1413 = vpack.c.b16 %v1229, %v1221
      %v1414 = vpack.c.b16 %v1230, %v1222
      %v1415 = vpack.c.b16 %v1231, %v1223
      %v1416 = vpack.c.b16 %v1232, %v1224
      %v1417 = vpack.c.b16 %v1241, %v1233
      %v1418 = vpack.c.b16 %v1242, %v1234
      %v1419 = vpack.c.b16 %v1243, %v1235
      %v1420 = vpack.c.b16 %v1244, %v1236
      %v1421 = vpack.c.b16 %v1245, %v1237
      %v1422 = vpack.c.b16 %v1246, %v1238
      %v1423 = vpack.c.b16 %v1247, %v1239
      %v1424 = vpack.c.b16 %v1248, %v1240
      %v1425 = vpack.c.b16 %v1257, %v1249
      %v1426 = vpack.c.b16 %v1258, %v1250
      %v1427 = vpack.c.b16 %v1259, %v1251
      %v1428 = vpack.c.b16 %v1260, %v1252
      %v1429 = vpack.c.b16 %v1261, %v1253
      %v1430 = vpack.c.b16 %v1262, %v1254
      %v1431 = vpack.c.b16 %v1263, %v1255
      %v1432 = vpack.c.b16 %v1264, %v1256
      %v1433 = vpack.c.b16 %v1273, %v1265
      %v1434 = vpack.c.b16 %v1274, %v1266
      %v1435 = vpack.c.b16 %v1275, %v1267
      %v1436 = vpack.c.b16 %v1276, %v1268
      %v1437 = vpack.c.b16 %v1277, %v1269
      %v1438 = vpack.c.b16 %v1278, %v1270
      %v1439 = vpack.c.b16 %v1279, %v1271
      %v1440 = vpack.c.b16 %v1280, %v1272
      %v1441 = vpack.c.b16 %v1289, %v1281
      %v1442 = vpack.c.b16 %v1290, %v1282
      %v1443 = vpack.c.b16 %v1291, %v1283
      %v1444 = vpack.c.b16 %v1292, %v1284
      %v1445 = vpack.c.b16 %v1293, %v1285
      %v1446 = vpack.c.b16 %v1294, %v1286
      %v1447 = vpack.c.b16 %v1295, %v1287
      %v1448 = vpack.c.b16 %v1296, %v1288
      %v1449 = vpack.c.b16 %v1305, %v1297
      %v1450 = vpack.c.b16 %v1306, %v1298
      %v1451 = vpack.c.b16 %v1307, %v1299
      %v1452 = vpack.c.b16 %v1308, %v1300
      %v1453 = vpack.c.b16 %v1309, %v1301
      %v1454 = vpack.c.b16 %v1310, %v1302
      %v1455 = vpack.c.b16 %v1311, %v1303
      %v1456 = vpack.c.b16 %v1312, %v1304
      %v1457 = vpack.c.b16 %v1321, %v1313
      %v1458 = vpack.c.b16 %v1322, %v1314
      %v1459 = vpack.c.b16 %v1323, %v1315
      %v1460 = vpack.c.b16 %v1324, %v1316
      %v1461 = vpack.c.b16 %v1325, %v1317
      %v1462 = vpack.c.b16 %v1326, %v1318
      %v1463 = vpack.c.b16 %v1327, %v1319
      %v1464 = vpack.c.b16 %v1328, %v1320
      %v1465 = vpack.c.b16 %v1337, %v1329
      %v1466 = vpack.c.b16 %v1338, %v1330
      %v1467 = vpack.c.b16 %v1339, %v1331
      %v1468 = vpack.c.b16 %v1340, %v1332
      %v1469 = vpack.c.b16 %v1341, %v1333
      %v1470 = vpack.c.b16 %v1342, %v1334
      %v1471 = vpack.c.b16 %v1343, %v1335
      %v1472 = vpack.c.b16 %v1344, %v1336
      %1601 = vmatpush.bf16.msra.mxu0 %v719
      %1602 = vmatpush.bf16.msra.mxu0 %v717
      %1603 = vmatpush.bf16.msra.mxu0 %v715
      %1604 = vmatpush.bf16.msra.mxu0 %v713
      %1605 = vmatpush.bf16.msra.mxu0 %v711
      %1606 = vmatpush.bf16.msra.mxu0 %v709
      %1607 = vmatpush.bf16.msra.mxu0 %v707
      %1608 = vmatpush.bf16.msra.mxu0 %v705
      %1609 = vmatmul.bf16.gmra.mxu0 %v1345
      %v1610 = vpop.f32.mrf.mxu0
      %v1611 = vadd.f32 0.0, %v1610
      %v1612 = vpop.f32.mrf.mxu0
      %v1613 = vadd.f32 0.0, %v1612
      %1614 = vmatmul.bf16.gmra.mxu0 %v1353
      %v1615 = vpop.f32.mrf.mxu0
      %v1616 = vadd.f32 0.0, %v1615
      %v1617 = vpop.f32.mrf.mxu0
      %v1618 = vadd.f32 0.0, %v1617
      %1619 = vmatmul.bf16.gmra.mxu0 %v1361
      %v1620 = vpop.f32.mrf.mxu0
      %v1621 = vadd.f32 0.0, %v1620
      %v1622 = vpop.f32.mrf.mxu0
      %v1623 = vadd.f32 0.0, %v1622
      %1624 = vmatmul.bf16.gmra.mxu0 %v1369
      %v1625 = vpop.f32.mrf.mxu0
      %v1626 = vadd.f32 0.0, %v1625
      %v1627 = vpop.f32.mrf.mxu0
      %v1628 = vadd.f32 0.0, %v1627
      %1629 = vmatmul.bf16.gmra.mxu0 %v1377
      %v1630 = vpop.f32.mrf.mxu0
      %v1631 = vadd.f32 0.0, %v1630
      %v1632 = vpop.f32.mrf.mxu0
      %v1633 = vadd.f32 0.0, %v1632
      %1634 = vmatmul.bf16.gmra.mxu0 %v1385
      %v1635 = vpop.f32.mrf.mxu0
      %v1636 = vadd.f32 0.0, %v1635
      %v1637 = vpop.f32.mrf.mxu0
      %v1638 = vadd.f32 0.0, %v1637
      %1639 = vmatmul.bf16.gmra.mxu0 %v1393
      %v1640 = vpop.f32.mrf.mxu0
      %v1641 = vadd.f32 0.0, %v1640
      %v1642 = vpop.f32.mrf.mxu0
      %v1643 = vadd.f32 0.0, %v1642
      %1644 = vmatmul.bf16.gmra.mxu0 %v1401
      %v1645 = vpop.f32.mrf.mxu0
      %v1646 = vadd.f32 0.0, %v1645
      %v1647 = vpop.f32.mrf.mxu0
      %v1648 = vadd.f32 0.0, %v1647
      %1649 = vmatmul.bf16.gmra.mxu0 %v1409
      %v1650 = vpop.f32.mrf.mxu0
      %v1651 = vadd.f32 0.0, %v1650
      %v1652 = vpop.f32.mrf.mxu0
      %v1653 = vadd.f32 0.0, %v1652
      %1654 = vmatmul.bf16.gmra.mxu0 %v1417
      %v1655 = vpop.f32.mrf.mxu0
      %v1656 = vadd.f32 0.0, %v1655
      %v1657 = vpop.f32.mrf.mxu0
      %v1658 = vadd.f32 0.0, %v1657
      %1659 = vmatmul.bf16.gmra.mxu0 %v1425
      %v1660 = vpop.f32.mrf.mxu0
      %v1661 = vadd.f32 0.0, %v1660
      %v1662 = vpop.f32.mrf.mxu0
      %v1663 = vadd.f32 0.0, %v1662
      %1664 = vmatmul.bf16.gmra.mxu0 %v1433
      %v1665 = vpop.f32.mrf.mxu0
      %v1666 = vadd.f32 0.0, %v1665
      %v1667 = vpop.f32.mrf.mxu0
      %v1668 = vadd.f32 0.0, %v1667
      %1669 = vmatmul.bf16.gmra.mxu0 %v1441
      %v1670 = vpop.f32.mrf.mxu0
      %v1671 = vadd.f32 0.0, %v1670
      %v1672 = vpop.f32.mrf.mxu0
      %v1673 = vadd.f32 0.0, %v1672
      %1674 = vmatmul.bf16.gmra.mxu0 %v1449
      %v1675 = vpop.f32.mrf.mxu0
      %v1676 = vadd.f32 0.0, %v1675
      %v1677 = vpop.f32.mrf.mxu0
      %v1678 = vadd.f32 0.0, %v1677
      %1679 = vmatmul.bf16.gmra.mxu0 %v1457
      %v1680 = vpop.f32.mrf.mxu0
      %v1681 = vadd.f32 0.0, %v1680
      %v1682 = vpop.f32.mrf.mxu0
      %v1683 = vadd.f32 0.0, %v1682
      %1684 = vmatmul.bf16.gmra.mxu0 %v1465
      %v1685 = vpop.f32.mrf.mxu0
      %v1686 = vadd.f32 0.0, %v1685
      %v1687 = vpop.f32.mrf.mxu0
      %v1688 = vadd.f32 0.0, %v1687
      %1689 = vdwg.mxu0
      %1690 = vmatpush.bf16.msra.mxu0 %v735
      %1691 = vmatpush.bf16.msra.mxu0 %v733
      %1692 = vmatpush.bf16.msra.mxu0 %v731
      %1693 = vmatpush.bf16.msra.mxu0 %v729
      %1694 = vmatpush.bf16.msra.mxu0 %v727
      %1695 = vmatpush.bf16.msra.mxu0 %v725
      %1696 = vmatpush.bf16.msra.mxu0 %v723
      %1697 = vmatpush.bf16.msra.mxu0 %v721
      %1698 = vmatmul.bf16.gmra.mxu0 %v1346
      %v1699 = vpop.f32.mrf.mxu0
      %v1700 = vadd.f32 %v1611, %v1699
      %v1701 = vpop.f32.mrf.mxu0
      %v1702 = vadd.f32 %v1613, %v1701
      %1703 = vmatmul.bf16.gmra.mxu0 %v1354
      %v1704 = vpop.f32.mrf.mxu0
      %v1705 = vadd.f32 %v1616, %v1704
      %v1706 = vpop.f32.mrf.mxu0
      %v1707 = vadd.f32 %v1618, %v1706
      %1708 = vmatmul.bf16.gmra.mxu0 %v1362
      %v1709 = vpop.f32.mrf.mxu0
      %v1710 = vadd.f32 %v1621, %v1709
      %v1711 = vpop.f32.mrf.mxu0
      %v1712 = vadd.f32 %v1623, %v1711
      %1713 = vmatmul.bf16.gmra.mxu0 %v1370
      %v1714 = vpop.f32.mrf.mxu0
      %v1715 = vadd.f32 %v1626, %v1714
      %v1716 = vpop.f32.mrf.mxu0
      %v1717 = vadd.f32 %v1628, %v1716
      %1718 = vmatmul.bf16.gmra.mxu0 %v1378
      %v1719 = vpop.f32.mrf.mxu0
      %v1720 = vadd.f32 %v1631, %v1719
      %v1721 = vpop.f32.mrf.mxu0
      %v1722 = vadd.f32 %v1633, %v1721
      %1723 = vmatmul.bf16.gmra.mxu0 %v1386
      %v1724 = vpop.f32.mrf.mxu0
      %v1725 = vadd.f32 %v1636, %v1724
      %v1726 = vpop.f32.mrf.mxu0
      %v1727 = vadd.f32 %v1638, %v1726
      %1728 = vmatmul.bf16.gmra.mxu0 %v1394
      %v1729 = vpop.f32.mrf.mxu0
      %v1730 = vadd.f32 %v1641, %v1729
      %v1731 = vpop.f32.mrf.mxu0
      %v1732 = vadd.f32 %v1643, %v1731
      %1733 = vmatmul.bf16.gmra.mxu0 %v1402
      %v1734 = vpop.f32.mrf.mxu0
      %v1735 = vadd.f32 %v1646, %v1734
      %v1736 = vpop.f32.mrf.mxu0
      %v1737 = vadd.f32 %v1648, %v1736
      %1738 = vmatmul.bf16.gmra.mxu0 %v1410
      %v1739 = vpop.f32.mrf.mxu0
      %v1740 = vadd.f32 %v1651, %v1739
      %v1741 = vpop.f32.mrf.mxu0
      %v1742 = vadd.f32 %v1653, %v1741
      %1743 = vmatmul.bf16.gmra.mxu0 %v1418
      %v1744 = vpop.f32.mrf.mxu0
      %v1745 = vadd.f32 %v1656, %v1744
      %v1746 = vpop.f32.mrf.mxu0
      %v1747 = vadd.f32 %v1658, %v1746
      %1748 = vmatmul.bf16.gmra.mxu0 %v1426
      %v1749 = vpop.f32.mrf.mxu0
      %v1750 = vadd.f32 %v1661, %v1749
      %v1751 = vpop.f32.mrf.mxu0
      %v1752 = vadd.f32 %v1663, %v1751
      %1753 = vmatmul.bf16.gmra.mxu0 %v1434
      %v1754 = vpop.f32.mrf.mxu0
      %v1755 = vadd.f32 %v1666, %v1754
      %v1756 = vpop.f32.mrf.mxu0
      %v1757 = vadd.f32 %v1668, %v1756
      %1758 = vmatmul.bf16.gmra.mxu0 %v1442
      %v1759 = vpop.f32.mrf.mxu0
      %v1760 = vadd.f32 %v1671, %v1759
      %v1761 = vpop.f32.mrf.mxu0
      %v1762 = vadd.f32 %v1673, %v1761
      %1763 = vmatmul.bf16.gmra.mxu0 %v1450
      %v1764 = vpop.f32.mrf.mxu0
      %v1765 = vadd.f32 %v1676, %v1764
      %v1766 = vpop.f32.mrf.mxu0
      %v1767 = vadd.f32 %v1678, %v1766
      %1768 = vmatmul.bf16.gmra.mxu0 %v1458
      %v1769 = vpop.f32.mrf.mxu0
      %v1770 = vadd.f32 %v1681, %v1769
      %v1771 = vpop.f32.mrf.mxu0
      %v1772 = vadd.f32 %v1683, %v1771
      %1773 = vmatmul.bf16.gmra.mxu0 %v1466
      %v1774 = vpop.f32.mrf.mxu0
      %v1775 = vadd.f32 %v1686, %v1774
      %v1776 = vpop.f32.mrf.mxu0
      %v1777 = vadd.f32 %v1688, %v1776
      %1778 = vdwg.mxu0
      %1779 = vmatpush.bf16.msra.mxu0 %v751
      %1780 = vmatpush.bf16.msra.mxu0 %v749
      %1781 = vmatpush.bf16.msra.mxu0 %v747
      %1782 = vmatpush.bf16.msra.mxu0 %v745
      %1783 = vmatpush.bf16.msra.mxu0 %v743
      %1784 = vmatpush.bf16.msra.mxu0 %v741
      %1785 = vmatpush.bf16.msra.mxu0 %v739
      %1786 = vmatpush.bf16.msra.mxu0 %v737
      %1787 = vmatmul.bf16.gmra.mxu0 %v1347
      %v1788 = vpop.f32.mrf.mxu0
      %v1789 = vadd.f32 %v1700, %v1788
      %v1790 = vpop.f32.mrf.mxu0
      %v1791 = vadd.f32 %v1702, %v1790
      %1792 = vmatmul.bf16.gmra.mxu0 %v1355
      %v1793 = vpop.f32.mrf.mxu0
      %v1794 = vadd.f32 %v1705, %v1793
      %v1795 = vpop.f32.mrf.mxu0
      %v1796 = vadd.f32 %v1707, %v1795
      %1797 = vmatmul.bf16.gmra.mxu0 %v1363
      %v1798 = vpop.f32.mrf.mxu0
      %v1799 = vadd.f32 %v1710, %v1798
      %v1800 = vpop.f32.mrf.mxu0
      %v1801 = vadd.f32 %v1712, %v1800
      %1802 = vmatmul.bf16.gmra.mxu0 %v1371
      %v1803 = vpop.f32.mrf.mxu0
      %v1804 = vadd.f32 %v1715, %v1803
      %v1805 = vpop.f32.mrf.mxu0
      %v1806 = vadd.f32 %v1717, %v1805
      %1807 = vmatmul.bf16.gmra.mxu0 %v1379
      %v1808 = vpop.f32.mrf.mxu0
      %v1809 = vadd.f32 %v1720, %v1808
      %v1810 = vpop.f32.mrf.mxu0
      %v1811 = vadd.f32 %v1722, %v1810
      %1812 = vmatmul.bf16.gmra.mxu0 %v1387
      %v1813 = vpop.f32.mrf.mxu0
      %v1814 = vadd.f32 %v1725, %v1813
      %v1815 = vpop.f32.mrf.mxu0
      %v1816 = vadd.f32 %v1727, %v1815
      %1817 = vmatmul.bf16.gmra.mxu0 %v1395
      %v1818 = vpop.f32.mrf.mxu0
      %v1819 = vadd.f32 %v1730, %v1818
      %v1820 = vpop.f32.mrf.mxu0
      %v1821 = vadd.f32 %v1732, %v1820
      %1822 = vmatmul.bf16.gmra.mxu0 %v1403
      %v1823 = vpop.f32.mrf.mxu0
      %v1824 = vadd.f32 %v1735, %v1823
      %v1825 = vpop.f32.mrf.mxu0
      %v1826 = vadd.f32 %v1737, %v1825
      %1827 = vmatmul.bf16.gmra.mxu0 %v1411
      %v1828 = vpop.f32.mrf.mxu0
      %v1829 = vadd.f32 %v1740, %v1828
      %v1830 = vpop.f32.mrf.mxu0
      %v1831 = vadd.f32 %v1742, %v1830
      %1832 = vmatmul.bf16.gmra.mxu0 %v1419
      %v1833 = vpop.f32.mrf.mxu0
      %v1834 = vadd.f32 %v1745, %v1833
      %v1835 = vpop.f32.mrf.mxu0
      %v1836 = vadd.f32 %v1747, %v1835
      %1837 = vmatmul.bf16.gmra.mxu0 %v1427
      %v1838 = vpop.f32.mrf.mxu0
      %v1839 = vadd.f32 %v1750, %v1838
      %v1840 = vpop.f32.mrf.mxu0
      %v1841 = vadd.f32 %v1752, %v1840
      %1842 = vmatmul.bf16.gmra.mxu0 %v1435
      %v1843 = vpop.f32.mrf.mxu0
      %v1844 = vadd.f32 %v1755, %v1843
      %v1845 = vpop.f32.mrf.mxu0
      %v1846 = vadd.f32 %v1757, %v1845
      %1847 = vmatmul.bf16.gmra.mxu0 %v1443
      %v1848 = vpop.f32.mrf.mxu0
      %v1849 = vadd.f32 %v1760, %v1848
      %v1850 = vpop.f32.mrf.mxu0
      %v1851 = vadd.f32 %v1762, %v1850
      %1852 = vmatmul.bf16.gmra.mxu0 %v1451
      %v1853 = vpop.f32.mrf.mxu0
      %v1854 = vadd.f32 %v1765, %v1853
      %v1855 = vpop.f32.mrf.mxu0
      %v1856 = vadd.f32 %v1767, %v1855
      %1857 = vmatmul.bf16.gmra.mxu0 %v1459
      %v1858 = vpop.f32.mrf.mxu0
      %v1859 = vadd.f32 %v1770, %v1858
      %v1860 = vpop.f32.mrf.mxu0
      %v1861 = vadd.f32 %v1772, %v1860
      %1862 = vmatmul.bf16.gmra.mxu0 %v1467
      %v1863 = vpop.f32.mrf.mxu0
      %v1864 = vadd.f32 %v1775, %v1863
      %v1865 = vpop.f32.mrf.mxu0
      %v1866 = vadd.f32 %v1777, %v1865
      %1867 = vdwg.mxu0
      %1868 = vmatpush.bf16.msra.mxu0 %v767
      %1869 = vmatpush.bf16.msra.mxu0 %v765
      %1870 = vmatpush.bf16.msra.mxu0 %v763
      %1871 = vmatpush.bf16.msra.mxu0 %v761
      %1872 = vmatpush.bf16.msra.mxu0 %v759
      %1873 = vmatpush.bf16.msra.mxu0 %v757
      %1874 = vmatpush.bf16.msra.mxu0 %v755
      %1875 = vmatpush.bf16.msra.mxu0 %v753
      %1876 = vmatmul.bf16.gmra.mxu0 %v1348
      %v1877 = vpop.f32.mrf.mxu0
      %v1878 = vadd.f32 %v1789, %v1877
      %v1879 = vpop.f32.mrf.mxu0
      %v1880 = vadd.f32 %v1791, %v1879
      %1881 = vmatmul.bf16.gmra.mxu0 %v1356
      %v1882 = vpop.f32.mrf.mxu0
      %v1883 = vadd.f32 %v1794, %v1882
      %v1884 = vpop.f32.mrf.mxu0
      %v1885 = vadd.f32 %v1796, %v1884
      %1886 = vmatmul.bf16.gmra.mxu0 %v1364
      %v1887 = vpop.f32.mrf.mxu0
      %v1888 = vadd.f32 %v1799, %v1887
      %v1889 = vpop.f32.mrf.mxu0
      %v1890 = vadd.f32 %v1801, %v1889
      %1891 = vmatmul.bf16.gmra.mxu0 %v1372
      %v1892 = vpop.f32.mrf.mxu0
      %v1893 = vadd.f32 %v1804, %v1892
      %v1894 = vpop.f32.mrf.mxu0
      %v1895 = vadd.f32 %v1806, %v1894
      %1896 = vmatmul.bf16.gmra.mxu0 %v1380
      %v1897 = vpop.f32.mrf.mxu0
      %v1898 = vadd.f32 %v1809, %v1897
      %v1899 = vpop.f32.mrf.mxu0
      %v1900 = vadd.f32 %v1811, %v1899
      %1901 = vmatmul.bf16.gmra.mxu0 %v1388
      %v1902 = vpop.f32.mrf.mxu0
      %v1903 = vadd.f32 %v1814, %v1902
      %v1904 = vpop.f32.mrf.mxu0
      %v1905 = vadd.f32 %v1816, %v1904
      %1906 = vmatmul.bf16.gmra.mxu0 %v1396
      %v1907 = vpop.f32.mrf.mxu0
      %v1908 = vadd.f32 %v1819, %v1907
      %v1909 = vpop.f32.mrf.mxu0
      %v1910 = vadd.f32 %v1821, %v1909
      %1911 = vmatmul.bf16.gmra.mxu0 %v1404
      %v1912 = vpop.f32.mrf.mxu0
      %v1913 = vadd.f32 %v1824, %v1912
      %v1914 = vpop.f32.mrf.mxu0
      %v1915 = vadd.f32 %v1826, %v1914
      %1916 = vmatmul.bf16.gmra.mxu0 %v1412
      %v1917 = vpop.f32.mrf.mxu0
      %v1918 = vadd.f32 %v1829, %v1917
      %v1919 = vpop.f32.mrf.mxu0
      %v1920 = vadd.f32 %v1831, %v1919
      %1921 = vmatmul.bf16.gmra.mxu0 %v1420
      %v1922 = vpop.f32.mrf.mxu0
      %v1923 = vadd.f32 %v1834, %v1922
      %v1924 = vpop.f32.mrf.mxu0
      %v1925 = vadd.f32 %v1836, %v1924
      %1926 = vmatmul.bf16.gmra.mxu0 %v1428
      %v1927 = vpop.f32.mrf.mxu0
      %v1928 = vadd.f32 %v1839, %v1927
      %v1929 = vpop.f32.mrf.mxu0
      %v1930 = vadd.f32 %v1841, %v1929
      %1931 = vmatmul.bf16.gmra.mxu0 %v1436
      %v1932 = vpop.f32.mrf.mxu0
      %v1933 = vadd.f32 %v1844, %v1932
      %v1934 = vpop.f32.mrf.mxu0
      %v1935 = vadd.f32 %v1846, %v1934
      %1936 = vmatmul.bf16.gmra.mxu0 %v1444
      %v1937 = vpop.f32.mrf.mxu0
      %v1938 = vadd.f32 %v1849, %v1937
      %v1939 = vpop.f32.mrf.mxu0
      %v1940 = vadd.f32 %v1851, %v1939
      %1941 = vmatmul.bf16.gmra.mxu0 %v1452
      %v1942 = vpop.f32.mrf.mxu0
      %v1943 = vadd.f32 %v1854, %v1942
      %v1944 = vpop.f32.mrf.mxu0
      %v1945 = vadd.f32 %v1856, %v1944
      %1946 = vmatmul.bf16.gmra.mxu0 %v1460
      %v1947 = vpop.f32.mrf.mxu0
      %v1948 = vadd.f32 %v1859, %v1947
      %v1949 = vpop.f32.mrf.mxu0
      %v1950 = vadd.f32 %v1861, %v1949
      %1951 = vmatmul.bf16.gmra.mxu0 %v1468
      %v1952 = vpop.f32.mrf.mxu0
      %v1953 = vadd.f32 %v1864, %v1952
      %v1954 = vpop.f32.mrf.mxu0
      %v1955 = vadd.f32 %v1866, %v1954
      %1956 = vdwg.mxu0
      %1957 = vmatpush.bf16.msra.mxu0 %v783
      %1958 = vmatpush.bf16.msra.mxu0 %v781
      %1959 = vmatpush.bf16.msra.mxu0 %v779
      %1960 = vmatpush.bf16.msra.mxu0 %v777
      %1961 = vmatpush.bf16.msra.mxu0 %v775
      %1962 = vmatpush.bf16.msra.mxu0 %v773
      %1963 = vmatpush.bf16.msra.mxu0 %v771
      %1964 = vmatpush.bf16.msra.mxu0 %v769
      %1965 = vmatmul.bf16.gmra.mxu0 %v1349
      %v1966 = vpop.f32.mrf.mxu0
      %v1967 = vadd.f32 %v1878, %v1966
      %v1968 = vpop.f32.mrf.mxu0
      %v1969 = vadd.f32 %v1880, %v1968
      %1970 = vmatmul.bf16.gmra.mxu0 %v1357
      %v1971 = vpop.f32.mrf.mxu0
      %v1972 = vadd.f32 %v1883, %v1971
      %v1973 = vpop.f32.mrf.mxu0
      %v1974 = vadd.f32 %v1885, %v1973
      %1975 = vmatmul.bf16.gmra.mxu0 %v1365
      %v1976 = vpop.f32.mrf.mxu0
      %v1977 = vadd.f32 %v1888, %v1976
      %v1978 = vpop.f32.mrf.mxu0
      %v1979 = vadd.f32 %v1890, %v1978
      %1980 = vmatmul.bf16.gmra.mxu0 %v1373
      %v1981 = vpop.f32.mrf.mxu0
      %v1982 = vadd.f32 %v1893, %v1981
      %v1983 = vpop.f32.mrf.mxu0
      %v1984 = vadd.f32 %v1895, %v1983
      %1985 = vmatmul.bf16.gmra.mxu0 %v1381
      %v1986 = vpop.f32.mrf.mxu0
      %v1987 = vadd.f32 %v1898, %v1986
      %v1988 = vpop.f32.mrf.mxu0
      %v1989 = vadd.f32 %v1900, %v1988
      %1990 = vmatmul.bf16.gmra.mxu0 %v1389
      %v1991 = vpop.f32.mrf.mxu0
      %v1992 = vadd.f32 %v1903, %v1991
      %v1993 = vpop.f32.mrf.mxu0
      %v1994 = vadd.f32 %v1905, %v1993
      %1995 = vmatmul.bf16.gmra.mxu0 %v1397
      %v1996 = vpop.f32.mrf.mxu0
      %v1997 = vadd.f32 %v1908, %v1996
      %v1998 = vpop.f32.mrf.mxu0
      %v1999 = vadd.f32 %v1910, %v1998
      %2000 = vmatmul.bf16.gmra.mxu0 %v1405
      %v2001 = vpop.f32.mrf.mxu0
      %v2002 = vadd.f32 %v1913, %v2001
      %v2003 = vpop.f32.mrf.mxu0
      %v2004 = vadd.f32 %v1915, %v2003
      %2005 = vmatmul.bf16.gmra.mxu0 %v1413
      %v2006 = vpop.f32.mrf.mxu0
      %v2007 = vadd.f32 %v1918, %v2006
      %v2008 = vpop.f32.mrf.mxu0
      %v2009 = vadd.f32 %v1920, %v2008
      %2010 = vmatmul.bf16.gmra.mxu0 %v1421
      %v2011 = vpop.f32.mrf.mxu0
      %v2012 = vadd.f32 %v1923, %v2011
      %v2013 = vpop.f32.mrf.mxu0
      %v2014 = vadd.f32 %v1925, %v2013
      %2015 = vmatmul.bf16.gmra.mxu0 %v1429
      %v2016 = vpop.f32.mrf.mxu0
      %v2017 = vadd.f32 %v1928, %v2016
      %v2018 = vpop.f32.mrf.mxu0
      %v2019 = vadd.f32 %v1930, %v2018
      %2020 = vmatmul.bf16.gmra.mxu0 %v1437
      %v2021 = vpop.f32.mrf.mxu0
      %v2022 = vadd.f32 %v1933, %v2021
      %v2023 = vpop.f32.mrf.mxu0
      %v2024 = vadd.f32 %v1935, %v2023
      %2025 = vmatmul.bf16.gmra.mxu0 %v1445
      %v2026 = vpop.f32.mrf.mxu0
      %v2027 = vadd.f32 %v1938, %v2026
      %v2028 = vpop.f32.mrf.mxu0
      %v2029 = vadd.f32 %v1940, %v2028
      %2030 = vmatmul.bf16.gmra.mxu0 %v1453
      %v2031 = vpop.f32.mrf.mxu0
      %v2032 = vadd.f32 %v1943, %v2031
      %v2033 = vpop.f32.mrf.mxu0
      %v2034 = vadd.f32 %v1945, %v2033
      %2035 = vmatmul.bf16.gmra.mxu0 %v1461
      %v2036 = vpop.f32.mrf.mxu0
      %v2037 = vadd.f32 %v1948, %v2036
      %v2038 = vpop.f32.mrf.mxu0
      %v2039 = vadd.f32 %v1950, %v2038
      %2040 = vmatmul.bf16.gmra.mxu0 %v1469
      %v2041 = vpop.f32.mrf.mxu0
      %v2042 = vadd.f32 %v1953, %v2041
      %v2043 = vpop.f32.mrf.mxu0
      %v2044 = vadd.f32 %v1955, %v2043
      %2045 = vdwg.mxu0
      %2046 = vmatpush.bf16.msra.mxu0 %v799
      %2047 = vmatpush.bf16.msra.mxu0 %v797
      %2048 = vmatpush.bf16.msra.mxu0 %v795
      %2049 = vmatpush.bf16.msra.mxu0 %v793
      %2050 = vmatpush.bf16.msra.mxu0 %v791
      %2051 = vmatpush.bf16.msra.mxu0 %v789
      %2052 = vmatpush.bf16.msra.mxu0 %v787
      %2053 = vmatpush.bf16.msra.mxu0 %v785
      %2054 = vmatmul.bf16.gmra.mxu0 %v1350
      %v2055 = vpop.f32.mrf.mxu0
      %v2056 = vadd.f32 %v1967, %v2055
      %v2057 = vpop.f32.mrf.mxu0
      %v2058 = vadd.f32 %v1969, %v2057
      %2059 = vmatmul.bf16.gmra.mxu0 %v1358
      %v2060 = vpop.f32.mrf.mxu0
      %v2061 = vadd.f32 %v1972, %v2060
      %v2062 = vpop.f32.mrf.mxu0
      %v2063 = vadd.f32 %v1974, %v2062
      %2064 = vmatmul.bf16.gmra.mxu0 %v1366
      %v2065 = vpop.f32.mrf.mxu0
      %v2066 = vadd.f32 %v1977, %v2065
      %v2067 = vpop.f32.mrf.mxu0
      %v2068 = vadd.f32 %v1979, %v2067
      %2069 = vmatmul.bf16.gmra.mxu0 %v1374
      %v2070 = vpop.f32.mrf.mxu0
      %v2071 = vadd.f32 %v1982, %v2070
      %v2072 = vpop.f32.mrf.mxu0
      %v2073 = vadd.f32 %v1984, %v2072
      %2074 = vmatmul.bf16.gmra.mxu0 %v1382
      %v2075 = vpop.f32.mrf.mxu0
      %v2076 = vadd.f32 %v1987, %v2075
      %v2077 = vpop.f32.mrf.mxu0
      %v2078 = vadd.f32 %v1989, %v2077
      %2079 = vmatmul.bf16.gmra.mxu0 %v1390
      %v2080 = vpop.f32.mrf.mxu0
      %v2081 = vadd.f32 %v1992, %v2080
      %v2082 = vpop.f32.mrf.mxu0
      %v2083 = vadd.f32 %v1994, %v2082
      %2084 = vmatmul.bf16.gmra.mxu0 %v1398
      %v2085 = vpop.f32.mrf.mxu0
      %v2086 = vadd.f32 %v1997, %v2085
      %v2087 = vpop.f32.mrf.mxu0
      %v2088 = vadd.f32 %v1999, %v2087
      %2089 = vmatmul.bf16.gmra.mxu0 %v1406
      %v2090 = vpop.f32.mrf.mxu0
      %v2091 = vadd.f32 %v2002, %v2090
      %v2092 = vpop.f32.mrf.mxu0
      %v2093 = vadd.f32 %v2004, %v2092
      %2094 = vmatmul.bf16.gmra.mxu0 %v1414
      %v2095 = vpop.f32.mrf.mxu0
      %v2096 = vadd.f32 %v2007, %v2095
      %v2097 = vpop.f32.mrf.mxu0
      %v2098 = vadd.f32 %v2009, %v2097
      %2099 = vmatmul.bf16.gmra.mxu0 %v1422
      %v2100 = vpop.f32.mrf.mxu0
      %v2101 = vadd.f32 %v2012, %v2100
      %v2102 = vpop.f32.mrf.mxu0
      %v2103 = vadd.f32 %v2014, %v2102
      %2104 = vmatmul.bf16.gmra.mxu0 %v1430
      %v2105 = vpop.f32.mrf.mxu0
      %v2106 = vadd.f32 %v2017, %v2105
      %v2107 = vpop.f32.mrf.mxu0
      %v2108 = vadd.f32 %v2019, %v2107
      %2109 = vmatmul.bf16.gmra.mxu0 %v1438
      %v2110 = vpop.f32.mrf.mxu0
      %v2111 = vadd.f32 %v2022, %v2110
      %v2112 = vpop.f32.mrf.mxu0
      %v2113 = vadd.f32 %v2024, %v2112
      %2114 = vmatmul.bf16.gmra.mxu0 %v1446
      %v2115 = vpop.f32.mrf.mxu0
      %v2116 = vadd.f32 %v2027, %v2115
      %v2117 = vpop.f32.mrf.mxu0
      %v2118 = vadd.f32 %v2029, %v2117
      %2119 = vmatmul.bf16.gmra.mxu0 %v1454
      %v2120 = vpop.f32.mrf.mxu0
      %v2121 = vadd.f32 %v2032, %v2120
      %v2122 = vpop.f32.mrf.mxu0
      %v2123 = vadd.f32 %v2034, %v2122
      %2124 = vmatmul.bf16.gmra.mxu0 %v1462
      %v2125 = vpop.f32.mrf.mxu0
      %v2126 = vadd.f32 %v2037, %v2125
      %v2127 = vpop.f32.mrf.mxu0
      %v2128 = vadd.f32 %v2039, %v2127
      %2129 = vmatmul.bf16.gmra.mxu0 %v1470
      %v2130 = vpop.f32.mrf.mxu0
      %v2131 = vadd.f32 %v2042, %v2130
      %v2132 = vpop.f32.mrf.mxu0
      %v2133 = vadd.f32 %v2044, %v2132
      %2134 = vdwg.mxu0
      %2135 = vmatpush.bf16.msra.mxu0 %v815
      %2136 = vmatpush.bf16.msra.mxu0 %v813
      %2137 = vmatpush.bf16.msra.mxu0 %v811
      %2138 = vmatpush.bf16.msra.mxu0 %v809
      %2139 = vmatpush.bf16.msra.mxu0 %v807
      %2140 = vmatpush.bf16.msra.mxu0 %v805
      %2141 = vmatpush.bf16.msra.mxu0 %v803
      %2142 = vmatpush.bf16.msra.mxu0 %v801
      %2143 = vmatmul.bf16.gmra.mxu0 %v1351
      %v2144 = vpop.f32.mrf.mxu0
      %v2145 = vadd.f32 %v2056, %v2144
      %v2146 = vpop.f32.mrf.mxu0
      %v2147 = vadd.f32 %v2058, %v2146
      %2148 = vmatmul.bf16.gmra.mxu0 %v1359
      %v2149 = vpop.f32.mrf.mxu0
      %v2150 = vadd.f32 %v2061, %v2149
      %v2151 = vpop.f32.mrf.mxu0
      %v2152 = vadd.f32 %v2063, %v2151
      %2153 = vmatmul.bf16.gmra.mxu0 %v1367
      %v2154 = vpop.f32.mrf.mxu0
      %v2155 = vadd.f32 %v2066, %v2154
      %v2156 = vpop.f32.mrf.mxu0
      %v2157 = vadd.f32 %v2068, %v2156
      %2158 = vmatmul.bf16.gmra.mxu0 %v1375
      %v2159 = vpop.f32.mrf.mxu0
      %v2160 = vadd.f32 %v2071, %v2159
      %v2161 = vpop.f32.mrf.mxu0
      %v2162 = vadd.f32 %v2073, %v2161
      %2163 = vmatmul.bf16.gmra.mxu0 %v1383
      %v2164 = vpop.f32.mrf.mxu0
      %v2165 = vadd.f32 %v2076, %v2164
      %v2166 = vpop.f32.mrf.mxu0
      %v2167 = vadd.f32 %v2078, %v2166
      %2168 = vmatmul.bf16.gmra.mxu0 %v1391
      %v2169 = vpop.f32.mrf.mxu0
      %v2170 = vadd.f32 %v2081, %v2169
      %v2171 = vpop.f32.mrf.mxu0
      %v2172 = vadd.f32 %v2083, %v2171
      %2173 = vmatmul.bf16.gmra.mxu0 %v1399
      %v2174 = vpop.f32.mrf.mxu0
      %v2175 = vadd.f32 %v2086, %v2174
      %v2176 = vpop.f32.mrf.mxu0
      %v2177 = vadd.f32 %v2088, %v2176
      %2178 = vmatmul.bf16.gmra.mxu0 %v1407
      %v2179 = vpop.f32.mrf.mxu0
      %v2180 = vadd.f32 %v2091, %v2179
      %v2181 = vpop.f32.mrf.mxu0
      %v2182 = vadd.f32 %v2093, %v2181
      %2183 = vmatmul.bf16.gmra.mxu0 %v1415
      %v2184 = vpop.f32.mrf.mxu0
      %v2185 = vadd.f32 %v2096, %v2184
      %v2186 = vpop.f32.mrf.mxu0
      %v2187 = vadd.f32 %v2098, %v2186
      %2188 = vmatmul.bf16.gmra.mxu0 %v1423
      %v2189 = vpop.f32.mrf.mxu0
      %v2190 = vadd.f32 %v2101, %v2189
      %v2191 = vpop.f32.mrf.mxu0
      %v2192 = vadd.f32 %v2103, %v2191
      %2193 = vmatmul.bf16.gmra.mxu0 %v1431
      %v2194 = vpop.f32.mrf.mxu0
      %v2195 = vadd.f32 %v2106, %v2194
      %v2196 = vpop.f32.mrf.mxu0
      %v2197 = vadd.f32 %v2108, %v2196
      %2198 = vmatmul.bf16.gmra.mxu0 %v1439
      %v2199 = vpop.f32.mrf.mxu0
      %v2200 = vadd.f32 %v2111, %v2199
      %v2201 = vpop.f32.mrf.mxu0
      %v2202 = vadd.f32 %v2113, %v2201
      %2203 = vmatmul.bf16.gmra.mxu0 %v1447
      %v2204 = vpop.f32.mrf.mxu0
      %v2205 = vadd.f32 %v2116, %v2204
      %v2206 = vpop.f32.mrf.mxu0
      %v2207 = vadd.f32 %v2118, %v2206
      %2208 = vmatmul.bf16.gmra.mxu0 %v1455
      %v2209 = vpop.f32.mrf.mxu0
      %v2210 = vadd.f32 %v2121, %v2209
      %v2211 = vpop.f32.mrf.mxu0
      %v2212 = vadd.f32 %v2123, %v2211
      %2213 = vmatmul.bf16.gmra.mxu0 %v1463
      %v2214 = vpop.f32.mrf.mxu0
      %v2215 = vadd.f32 %v2126, %v2214
      %v2216 = vpop.f32.mrf.mxu0
      %v2217 = vadd.f32 %v2128, %v2216
      %2218 = vmatmul.bf16.gmra.mxu0 %v1471
      %v2219 = vpop.f32.mrf.mxu0
      %v2220 = vadd.f32 %v2131, %v2219
      %v2221 = vpop.f32.mrf.mxu0
      %v2222 = vadd.f32 %v2133, %v2221
      %2223 = vdwg.mxu0
      %2224 = vmatpush.bf16.msra.mxu0 %v831
      %2225 = vmatpush.bf16.msra.mxu0 %v829
      %2226 = vmatpush.bf16.msra.mxu0 %v827
      %2227 = vmatpush.bf16.msra.mxu0 %v825
      %2228 = vmatpush.bf16.msra.mxu0 %v823
      %2229 = vmatpush.bf16.msra.mxu0 %v821
      %2230 = vmatpush.bf16.msra.mxu0 %v819
      %2231 = vmatpush.bf16.msra.mxu0 %v817
      %2232 = vmatmul.bf16.gmra.mxu0 %v1352
      %v2233 = vpop.f32.mrf.mxu0
      %v2234 = vadd.f32 %v2145, %v2233
      %v2235 = vpop.f32.mrf.mxu0
      %v2236 = vadd.f32 %v2147, %v2235
      %2237 = vmatmul.bf16.gmra.mxu0 %v1360
      %v2238 = vpop.f32.mrf.mxu0
      %v2239 = vadd.f32 %v2150, %v2238
      %v2240 = vpop.f32.mrf.mxu0
      %v2241 = vadd.f32 %v2152, %v2240
      %2242 = vmatmul.bf16.gmra.mxu0 %v1368
      %v2243 = vpop.f32.mrf.mxu0
      %v2244 = vadd.f32 %v2155, %v2243
      %v2245 = vpop.f32.mrf.mxu0
      %v2246 = vadd.f32 %v2157, %v2245
      %2247 = vmatmul.bf16.gmra.mxu0 %v1376
      %v2248 = vpop.f32.mrf.mxu0
      %v2249 = vadd.f32 %v2160, %v2248
      %v2250 = vpop.f32.mrf.mxu0
      %v2251 = vadd.f32 %v2162, %v2250
      %2252 = vmatmul.bf16.gmra.mxu0 %v1384
      %v2253 = vpop.f32.mrf.mxu0
      %v2254 = vadd.f32 %v2165, %v2253
      %v2255 = vpop.f32.mrf.mxu0
      %v2256 = vadd.f32 %v2167, %v2255
      %2257 = vmatmul.bf16.gmra.mxu0 %v1392
      %v2258 = vpop.f32.mrf.mxu0
      %v2259 = vadd.f32 %v2170, %v2258
      %v2260 = vpop.f32.mrf.mxu0
      %v2261 = vadd.f32 %v2172, %v2260
      %2262 = vmatmul.bf16.gmra.mxu0 %v1400
      %v2263 = vpop.f32.mrf.mxu0
      %v2264 = vadd.f32 %v2175, %v2263
      %v2265 = vpop.f32.mrf.mxu0
      %v2266 = vadd.f32 %v2177, %v2265
      %2267 = vmatmul.bf16.gmra.mxu0 %v1408
      %v2268 = vpop.f32.mrf.mxu0
      %v2269 = vadd.f32 %v2180, %v2268
      %v2270 = vpop.f32.mrf.mxu0
      %v2271 = vadd.f32 %v2182, %v2270
      %2272 = vmatmul.bf16.gmra.mxu0 %v1416
      %v2273 = vpop.f32.mrf.mxu0
      %v2274 = vadd.f32 %v2185, %v2273
      %v2275 = vpop.f32.mrf.mxu0
      %v2276 = vadd.f32 %v2187, %v2275
      %2277 = vmatmul.bf16.gmra.mxu0 %v1424
      %v2278 = vpop.f32.mrf.mxu0
      %v2279 = vadd.f32 %v2190, %v2278
      %v2280 = vpop.f32.mrf.mxu0
      %v2281 = vadd.f32 %v2192, %v2280
      %2282 = vmatmul.bf16.gmra.mxu0 %v1432
      %v2283 = vpop.f32.mrf.mxu0
      %v2284 = vadd.f32 %v2195, %v2283
      %v2285 = vpop.f32.mrf.mxu0
      %v2286 = vadd.f32 %v2197, %v2285
      %2287 = vmatmul.bf16.gmra.mxu0 %v1440
      %v2288 = vpop.f32.mrf.mxu0
      %v2289 = vadd.f32 %v2200, %v2288
      %v2290 = vpop.f32.mrf.mxu0
      %v2291 = vadd.f32 %v2202, %v2290
      %2292 = vmatmul.bf16.gmra.mxu0 %v1448
      %v2293 = vpop.f32.mrf.mxu0
      %v2294 = vadd.f32 %v2205, %v2293
      %v2295 = vpop.f32.mrf.mxu0
      %v2296 = vadd.f32 %v2207, %v2295
      %2297 = vmatmul.bf16.gmra.mxu0 %v1456
      %v2298 = vpop.f32.mrf.mxu0
      %v2299 = vadd.f32 %v2210, %v2298
      %v2300 = vpop.f32.mrf.mxu0
      %v2301 = vadd.f32 %v2212, %v2300
      %2302 = vmatmul.bf16.gmra.mxu0 %v1464
      %v2303 = vpop.f32.mrf.mxu0
      %v2304 = vadd.f32 %v2215, %v2303
      %v2305 = vpop.f32.mrf.mxu0
      %v2306 = vadd.f32 %v2217, %v2305
      %2307 = vmatmul.bf16.gmra.mxu0 %v1472
      %v2308 = vpop.f32.mrf.mxu0
      %v2309 = vadd.f32 %v2220, %v2308
      %v2310 = vpop.f32.mrf.mxu0
      %v2311 = vadd.f32 %v2222, %v2310
      %2312 = vdwg.mxu0
      %2313 = vmatpush.bf16.msra.mxu0 %v720
      %2314 = vmatpush.bf16.msra.mxu0 %v718
      %2315 = vmatpush.bf16.msra.mxu0 %v716
      %2316 = vmatpush.bf16.msra.mxu0 %v714
      %2317 = vmatpush.bf16.msra.mxu0 %v712
      %2318 = vmatpush.bf16.msra.mxu0 %v710
      %2319 = vmatpush.bf16.msra.mxu0 %v708
      %2320 = vmatpush.bf16.msra.mxu0 %v706
      %2321 = vmatmul.bf16.gmra.mxu0 %v1345
      %v2322 = vpop.f32.mrf.mxu0
      %v2323 = vadd.f32 0.0, %v2322
      %v2324 = vpop.f32.mrf.mxu0
      %v2325 = vadd.f32 0.0, %v2324
      %2326 = vmatmul.bf16.gmra.mxu0 %v1353
      %v2327 = vpop.f32.mrf.mxu0
      %v2328 = vadd.f32 0.0, %v2327
      %v2329 = vpop.f32.mrf.mxu0
      %v2330 = vadd.f32 0.0, %v2329
      %2331 = vmatmul.bf16.gmra.mxu0 %v1361
      %v2332 = vpop.f32.mrf.mxu0
      %v2333 = vadd.f32 0.0, %v2332
      %v2334 = vpop.f32.mrf.mxu0
      %v2335 = vadd.f32 0.0, %v2334
      %2336 = vmatmul.bf16.gmra.mxu0 %v1369
      %v2337 = vpop.f32.mrf.mxu0
      %v2338 = vadd.f32 0.0, %v2337
      %v2339 = vpop.f32.mrf.mxu0
      %v2340 = vadd.f32 0.0, %v2339
      %2341 = vmatmul.bf16.gmra.mxu0 %v1377
      %v2342 = vpop.f32.mrf.mxu0
      %v2343 = vadd.f32 0.0, %v2342
      %v2344 = vpop.f32.mrf.mxu0
      %v2345 = vadd.f32 0.0, %v2344
      %2346 = vmatmul.bf16.gmra.mxu0 %v1385
      %v2347 = vpop.f32.mrf.mxu0
      %v2348 = vadd.f32 0.0, %v2347
      %v2349 = vpop.f32.mrf.mxu0
      %v2350 = vadd.f32 0.0, %v2349
      %2351 = vmatmul.bf16.gmra.mxu0 %v1393
      %v2352 = vpop.f32.mrf.mxu0
      %v2353 = vadd.f32 0.0, %v2352
      %v2354 = vpop.f32.mrf.mxu0
      %v2355 = vadd.f32 0.0, %v2354
      %2356 = vmatmul.bf16.gmra.mxu0 %v1401
      %v2357 = vpop.f32.mrf.mxu0
      %v2358 = vadd.f32 0.0, %v2357
      %v2359 = vpop.f32.mrf.mxu0
      %v2360 = vadd.f32 0.0, %v2359
      %2361 = vmatmul.bf16.gmra.mxu0 %v1409
      %v2362 = vpop.f32.mrf.mxu0
      %v2363 = vadd.f32 0.0, %v2362
      %v2364 = vpop.f32.mrf.mxu0
      %v2365 = vadd.f32 0.0, %v2364
      %2366 = vmatmul.bf16.gmra.mxu0 %v1417
      %v2367 = vpop.f32.mrf.mxu0
      %v2368 = vadd.f32 0.0, %v2367
      %v2369 = vpop.f32.mrf.mxu0
      %v2370 = vadd.f32 0.0, %v2369
      %2371 = vmatmul.bf16.gmra.mxu0 %v1425
      %v2372 = vpop.f32.mrf.mxu0
      %v2373 = vadd.f32 0.0, %v2372
      %v2374 = vpop.f32.mrf.mxu0
      %v2375 = vadd.f32 0.0, %v2374
      %2376 = vmatmul.bf16.gmra.mxu0 %v1433
      %v2377 = vpop.f32.mrf.mxu0
      %v2378 = vadd.f32 0.0, %v2377
      %v2379 = vpop.f32.mrf.mxu0
      %v2380 = vadd.f32 0.0, %v2379
      %2381 = vmatmul.bf16.gmra.mxu0 %v1441
      %v2382 = vpop.f32.mrf.mxu0
      %v2383 = vadd.f32 0.0, %v2382
      %v2384 = vpop.f32.mrf.mxu0
      %v2385 = vadd.f32 0.0, %v2384
      %2386 = vmatmul.bf16.gmra.mxu0 %v1449
      %v2387 = vpop.f32.mrf.mxu0
      %v2388 = vadd.f32 0.0, %v2387
      %v2389 = vpop.f32.mrf.mxu0
      %v2390 = vadd.f32 0.0, %v2389
      %2391 = vmatmul.bf16.gmra.mxu0 %v1457
      %v2392 = vpop.f32.mrf.mxu0
      %v2393 = vadd.f32 0.0, %v2392
      %v2394 = vpop.f32.mrf.mxu0
      %v2395 = vadd.f32 0.0, %v2394
      %2396 = vmatmul.bf16.gmra.mxu0 %v1465
      %v2397 = vpop.f32.mrf.mxu0
      %v2398 = vadd.f32 0.0, %v2397
      %v2399 = vpop.f32.mrf.mxu0
      %v2400 = vadd.f32 0.0, %v2399
      %2401 = vdwg.mxu0
      %2402 = vmatpush.bf16.msra.mxu0 %v736
      %2403 = vmatpush.bf16.msra.mxu0 %v734
      %2404 = vmatpush.bf16.msra.mxu0 %v732
      %2405 = vmatpush.bf16.msra.mxu0 %v730
      %2406 = vmatpush.bf16.msra.mxu0 %v728
      %2407 = vmatpush.bf16.msra.mxu0 %v726
      %2408 = vmatpush.bf16.msra.mxu0 %v724
      %2409 = vmatpush.bf16.msra.mxu0 %v722
      %2410 = vmatmul.bf16.gmra.mxu0 %v1346
      %v2411 = vpop.f32.mrf.mxu0
      %v2412 = vadd.f32 %v2323, %v2411
      %v2413 = vpop.f32.mrf.mxu0
      %v2414 = vadd.f32 %v2325, %v2413
      %2415 = vmatmul.bf16.gmra.mxu0 %v1354
      %v2416 = vpop.f32.mrf.mxu0
      %v2417 = vadd.f32 %v2328, %v2416
      %v2418 = vpop.f32.mrf.mxu0
      %v2419 = vadd.f32 %v2330, %v2418
      %2420 = vmatmul.bf16.gmra.mxu0 %v1362
      %v2421 = vpop.f32.mrf.mxu0
      %v2422 = vadd.f32 %v2333, %v2421
      %v2423 = vpop.f32.mrf.mxu0
      %v2424 = vadd.f32 %v2335, %v2423
      %2425 = vmatmul.bf16.gmra.mxu0 %v1370
      %v2426 = vpop.f32.mrf.mxu0
      %v2427 = vadd.f32 %v2338, %v2426
      %v2428 = vpop.f32.mrf.mxu0
      %v2429 = vadd.f32 %v2340, %v2428
      %2430 = vmatmul.bf16.gmra.mxu0 %v1378
      %v2431 = vpop.f32.mrf.mxu0
      %v2432 = vadd.f32 %v2343, %v2431
      %v2433 = vpop.f32.mrf.mxu0
      %v2434 = vadd.f32 %v2345, %v2433
      %2435 = vmatmul.bf16.gmra.mxu0 %v1386
      %v2436 = vpop.f32.mrf.mxu0
      %v2437 = vadd.f32 %v2348, %v2436
      %v2438 = vpop.f32.mrf.mxu0
      %v2439 = vadd.f32 %v2350, %v2438
      %2440 = vmatmul.bf16.gmra.mxu0 %v1394
      %v2441 = vpop.f32.mrf.mxu0
      %v2442 = vadd.f32 %v2353, %v2441
      %v2443 = vpop.f32.mrf.mxu0
      %v2444 = vadd.f32 %v2355, %v2443
      %2445 = vmatmul.bf16.gmra.mxu0 %v1402
      %v2446 = vpop.f32.mrf.mxu0
      %v2447 = vadd.f32 %v2358, %v2446
      %v2448 = vpop.f32.mrf.mxu0
      %v2449 = vadd.f32 %v2360, %v2448
      %2450 = vmatmul.bf16.gmra.mxu0 %v1410
      %v2451 = vpop.f32.mrf.mxu0
      %v2452 = vadd.f32 %v2363, %v2451
      %v2453 = vpop.f32.mrf.mxu0
      %v2454 = vadd.f32 %v2365, %v2453
      %2455 = vmatmul.bf16.gmra.mxu0 %v1418
      %v2456 = vpop.f32.mrf.mxu0
      %v2457 = vadd.f32 %v2368, %v2456
      %v2458 = vpop.f32.mrf.mxu0
      %v2459 = vadd.f32 %v2370, %v2458
      %2460 = vmatmul.bf16.gmra.mxu0 %v1426
      %v2461 = vpop.f32.mrf.mxu0
      %v2462 = vadd.f32 %v2373, %v2461
      %v2463 = vpop.f32.mrf.mxu0
      %v2464 = vadd.f32 %v2375, %v2463
      %2465 = vmatmul.bf16.gmra.mxu0 %v1434
      %v2466 = vpop.f32.mrf.mxu0
      %v2467 = vadd.f32 %v2378, %v2466
      %v2468 = vpop.f32.mrf.mxu0
      %v2469 = vadd.f32 %v2380, %v2468
      %2470 = vmatmul.bf16.gmra.mxu0 %v1442
      %v2471 = vpop.f32.mrf.mxu0
      %v2472 = vadd.f32 %v2383, %v2471
      %v2473 = vpop.f32.mrf.mxu0
      %v2474 = vadd.f32 %v2385, %v2473
      %2475 = vmatmul.bf16.gmra.mxu0 %v1450
      %v2476 = vpop.f32.mrf.mxu0
      %v2477 = vadd.f32 %v2388, %v2476
      %v2478 = vpop.f32.mrf.mxu0
      %v2479 = vadd.f32 %v2390, %v2478
      %2480 = vmatmul.bf16.gmra.mxu0 %v1458
      %v2481 = vpop.f32.mrf.mxu0
      %v2482 = vadd.f32 %v2393, %v2481
      %v2483 = vpop.f32.mrf.mxu0
      %v2484 = vadd.f32 %v2395, %v2483
      %2485 = vmatmul.bf16.gmra.mxu0 %v1466
      %v2486 = vpop.f32.mrf.mxu0
      %v2487 = vadd.f32 %v2398, %v2486
      %v2488 = vpop.f32.mrf.mxu0
      %v2489 = vadd.f32 %v2400, %v2488
      %2490 = vdwg.mxu0
      %2491 = vmatpush.bf16.msra.mxu0 %v752
      %2492 = vmatpush.bf16.msra.mxu0 %v750
      %2493 = vmatpush.bf16.msra.mxu0 %v748
      %2494 = vmatpush.bf16.msra.mxu0 %v746
      %2495 = vmatpush.bf16.msra.mxu0 %v744
      %2496 = vmatpush.bf16.msra.mxu0 %v742
      %2497 = vmatpush.bf16.msra.mxu0 %v740
      %2498 = vmatpush.bf16.msra.mxu0 %v738
      %2499 = vmatmul.bf16.gmra.mxu0 %v1347
      %v2500 = vpop.f32.mrf.mxu0
      %v2501 = vadd.f32 %v2412, %v2500
      %v2502 = vpop.f32.mrf.mxu0
      %v2503 = vadd.f32 %v2414, %v2502
      %2504 = vmatmul.bf16.gmra.mxu0 %v1355
      %v2505 = vpop.f32.mrf.mxu0
      %v2506 = vadd.f32 %v2417, %v2505
      %v2507 = vpop.f32.mrf.mxu0
      %v2508 = vadd.f32 %v2419, %v2507
      %2509 = vmatmul.bf16.gmra.mxu0 %v1363
      %v2510 = vpop.f32.mrf.mxu0
      %v2511 = vadd.f32 %v2422, %v2510
      %v2512 = vpop.f32.mrf.mxu0
      %v2513 = vadd.f32 %v2424, %v2512
      %2514 = vmatmul.bf16.gmra.mxu0 %v1371
      %v2515 = vpop.f32.mrf.mxu0
      %v2516 = vadd.f32 %v2427, %v2515
      %v2517 = vpop.f32.mrf.mxu0
      %v2518 = vadd.f32 %v2429, %v2517
      %2519 = vmatmul.bf16.gmra.mxu0 %v1379
      %v2520 = vpop.f32.mrf.mxu0
      %v2521 = vadd.f32 %v2432, %v2520
      %v2522 = vpop.f32.mrf.mxu0
      %v2523 = vadd.f32 %v2434, %v2522
      %2524 = vmatmul.bf16.gmra.mxu0 %v1387
      %v2525 = vpop.f32.mrf.mxu0
      %v2526 = vadd.f32 %v2437, %v2525
      %v2527 = vpop.f32.mrf.mxu0
      %v2528 = vadd.f32 %v2439, %v2527
      %2529 = vmatmul.bf16.gmra.mxu0 %v1395
      %v2530 = vpop.f32.mrf.mxu0
      %v2531 = vadd.f32 %v2442, %v2530
      %v2532 = vpop.f32.mrf.mxu0
      %v2533 = vadd.f32 %v2444, %v2532
      %2534 = vmatmul.bf16.gmra.mxu0 %v1403
      %v2535 = vpop.f32.mrf.mxu0
      %v2536 = vadd.f32 %v2447, %v2535
      %v2537 = vpop.f32.mrf.mxu0
      %v2538 = vadd.f32 %v2449, %v2537
      %2539 = vmatmul.bf16.gmra.mxu0 %v1411
      %v2540 = vpop.f32.mrf.mxu0
      %v2541 = vadd.f32 %v2452, %v2540
      %v2542 = vpop.f32.mrf.mxu0
      %v2543 = vadd.f32 %v2454, %v2542
      %2544 = vmatmul.bf16.gmra.mxu0 %v1419
      %v2545 = vpop.f32.mrf.mxu0
      %v2546 = vadd.f32 %v2457, %v2545
      %v2547 = vpop.f32.mrf.mxu0
      %v2548 = vadd.f32 %v2459, %v2547
      %2549 = vmatmul.bf16.gmra.mxu0 %v1427
      %v2550 = vpop.f32.mrf.mxu0
      %v2551 = vadd.f32 %v2462, %v2550
      %v2552 = vpop.f32.mrf.mxu0
      %v2553 = vadd.f32 %v2464, %v2552
      %2554 = vmatmul.bf16.gmra.mxu0 %v1435
      %v2555 = vpop.f32.mrf.mxu0
      %v2556 = vadd.f32 %v2467, %v2555
      %v2557 = vpop.f32.mrf.mxu0
      %v2558 = vadd.f32 %v2469, %v2557
      %2559 = vmatmul.bf16.gmra.mxu0 %v1443
      %v2560 = vpop.f32.mrf.mxu0
      %v2561 = vadd.f32 %v2472, %v2560
      %v2562 = vpop.f32.mrf.mxu0
      %v2563 = vadd.f32 %v2474, %v2562
      %2564 = vmatmul.bf16.gmra.mxu0 %v1451
      %v2565 = vpop.f32.mrf.mxu0
      %v2566 = vadd.f32 %v2477, %v2565
      %v2567 = vpop.f32.mrf.mxu0
      %v2568 = vadd.f32 %v2479, %v2567
      %2569 = vmatmul.bf16.gmra.mxu0 %v1459
      %v2570 = vpop.f32.mrf.mxu0
      %v2571 = vadd.f32 %v2482, %v2570
      %v2572 = vpop.f32.mrf.mxu0
      %v2573 = vadd.f32 %v2484, %v2572
      %2574 = vmatmul.bf16.gmra.mxu0 %v1467
      %v2575 = vpop.f32.mrf.mxu0
      %v2576 = vadd.f32 %v2487, %v2575
      %v2577 = vpop.f32.mrf.mxu0
      %v2578 = vadd.f32 %v2489, %v2577
      %2579 = vdwg.mxu0
      %2580 = vmatpush.bf16.msra.mxu0 %v768
      %2581 = vmatpush.bf16.msra.mxu0 %v766
      %2582 = vmatpush.bf16.msra.mxu0 %v764
      %2583 = vmatpush.bf16.msra.mxu0 %v762
      %2584 = vmatpush.bf16.msra.mxu0 %v760
      %2585 = vmatpush.bf16.msra.mxu0 %v758
      %2586 = vmatpush.bf16.msra.mxu0 %v756
      %2587 = vmatpush.bf16.msra.mxu0 %v754
      %2588 = vmatmul.bf16.gmra.mxu0 %v1348
      %v2589 = vpop.f32.mrf.mxu0
      %v2590 = vadd.f32 %v2501, %v2589
      %v2591 = vpop.f32.mrf.mxu0
      %v2592 = vadd.f32 %v2503, %v2591
      %2593 = vmatmul.bf16.gmra.mxu0 %v1356
      %v2594 = vpop.f32.mrf.mxu0
      %v2595 = vadd.f32 %v2506, %v2594
      %v2596 = vpop.f32.mrf.mxu0
      %v2597 = vadd.f32 %v2508, %v2596
      %2598 = vmatmul.bf16.gmra.mxu0 %v1364
      %v2599 = vpop.f32.mrf.mxu0
      %v2600 = vadd.f32 %v2511, %v2599
      %v2601 = vpop.f32.mrf.mxu0
      %v2602 = vadd.f32 %v2513, %v2601
      %2603 = vmatmul.bf16.gmra.mxu0 %v1372
      %v2604 = vpop.f32.mrf.mxu0
      %v2605 = vadd.f32 %v2516, %v2604
      %v2606 = vpop.f32.mrf.mxu0
      %v2607 = vadd.f32 %v2518, %v2606
      %2608 = vmatmul.bf16.gmra.mxu0 %v1380
      %v2609 = vpop.f32.mrf.mxu0
      %v2610 = vadd.f32 %v2521, %v2609
      %v2611 = vpop.f32.mrf.mxu0
      %v2612 = vadd.f32 %v2523, %v2611
      %2613 = vmatmul.bf16.gmra.mxu0 %v1388
      %v2614 = vpop.f32.mrf.mxu0
      %v2615 = vadd.f32 %v2526, %v2614
      %v2616 = vpop.f32.mrf.mxu0
      %v2617 = vadd.f32 %v2528, %v2616
      %2618 = vmatmul.bf16.gmra.mxu0 %v1396
      %v2619 = vpop.f32.mrf.mxu0
      %v2620 = vadd.f32 %v2531, %v2619
      %v2621 = vpop.f32.mrf.mxu0
      %v2622 = vadd.f32 %v2533, %v2621
      %2623 = vmatmul.bf16.gmra.mxu0 %v1404
      %v2624 = vpop.f32.mrf.mxu0
      %v2625 = vadd.f32 %v2536, %v2624
      %v2626 = vpop.f32.mrf.mxu0
      %v2627 = vadd.f32 %v2538, %v2626
      %2628 = vmatmul.bf16.gmra.mxu0 %v1412
      %v2629 = vpop.f32.mrf.mxu0
      %v2630 = vadd.f32 %v2541, %v2629
      %v2631 = vpop.f32.mrf.mxu0
      %v2632 = vadd.f32 %v2543, %v2631
      %2633 = vmatmul.bf16.gmra.mxu0 %v1420
      %v2634 = vpop.f32.mrf.mxu0
      %v2635 = vadd.f32 %v2546, %v2634
      %v2636 = vpop.f32.mrf.mxu0
      %v2637 = vadd.f32 %v2548, %v2636
      %2638 = vmatmul.bf16.gmra.mxu0 %v1428
      %v2639 = vpop.f32.mrf.mxu0
      %v2640 = vadd.f32 %v2551, %v2639
      %v2641 = vpop.f32.mrf.mxu0
      %v2642 = vadd.f32 %v2553, %v2641
      %2643 = vmatmul.bf16.gmra.mxu0 %v1436
      %v2644 = vpop.f32.mrf.mxu0
      %v2645 = vadd.f32 %v2556, %v2644
      %v2646 = vpop.f32.mrf.mxu0
      %v2647 = vadd.f32 %v2558, %v2646
      %2648 = vmatmul.bf16.gmra.mxu0 %v1444
      %v2649 = vpop.f32.mrf.mxu0
      %v2650 = vadd.f32 %v2561, %v2649
      %v2651 = vpop.f32.mrf.mxu0
      %v2652 = vadd.f32 %v2563, %v2651
      %2653 = vmatmul.bf16.gmra.mxu0 %v1452
      %v2654 = vpop.f32.mrf.mxu0
      %v2655 = vadd.f32 %v2566, %v2654
      %v2656 = vpop.f32.mrf.mxu0
      %v2657 = vadd.f32 %v2568, %v2656
      %2658 = vmatmul.bf16.gmra.mxu0 %v1460
      %v2659 = vpop.f32.mrf.mxu0
      %v2660 = vadd.f32 %v2571, %v2659
      %v2661 = vpop.f32.mrf.mxu0
      %v2662 = vadd.f32 %v2573, %v2661
      %2663 = vmatmul.bf16.gmra.mxu0 %v1468
      %v2664 = vpop.f32.mrf.mxu0
      %v2665 = vadd.f32 %v2576, %v2664
      %v2666 = vpop.f32.mrf.mxu0
      %v2667 = vadd.f32 %v2578, %v2666
      %2668 = vdwg.mxu0
      %2669 = vmatpush.bf16.msra.mxu0 %v784
      %2670 = vmatpush.bf16.msra.mxu0 %v782
      %2671 = vmatpush.bf16.msra.mxu0 %v780
      %2672 = vmatpush.bf16.msra.mxu0 %v778
      %2673 = vmatpush.bf16.msra.mxu0 %v776
      %2674 = vmatpush.bf16.msra.mxu0 %v774
      %2675 = vmatpush.bf16.msra.mxu0 %v772
      %2676 = vmatpush.bf16.msra.mxu0 %v770
      %2677 = vmatmul.bf16.gmra.mxu0 %v1349
      %v2678 = vpop.f32.mrf.mxu0
      %v2679 = vadd.f32 %v2590, %v2678
      %v2680 = vpop.f32.mrf.mxu0
      %v2681 = vadd.f32 %v2592, %v2680
      %2682 = vmatmul.bf16.gmra.mxu0 %v1357
      %v2683 = vpop.f32.mrf.mxu0
      %v2684 = vadd.f32 %v2595, %v2683
      %v2685 = vpop.f32.mrf.mxu0
      %v2686 = vadd.f32 %v2597, %v2685
      %2687 = vmatmul.bf16.gmra.mxu0 %v1365
      %v2688 = vpop.f32.mrf.mxu0
      %v2689 = vadd.f32 %v2600, %v2688
      %v2690 = vpop.f32.mrf.mxu0
      %v2691 = vadd.f32 %v2602, %v2690
      %2692 = vmatmul.bf16.gmra.mxu0 %v1373
      %v2693 = vpop.f32.mrf.mxu0
      %v2694 = vadd.f32 %v2605, %v2693
      %v2695 = vpop.f32.mrf.mxu0
      %v2696 = vadd.f32 %v2607, %v2695
      %2697 = vmatmul.bf16.gmra.mxu0 %v1381
      %v2698 = vpop.f32.mrf.mxu0
      %v2699 = vadd.f32 %v2610, %v2698
      %v2700 = vpop.f32.mrf.mxu0
      %v2701 = vadd.f32 %v2612, %v2700
      %2702 = vmatmul.bf16.gmra.mxu0 %v1389
      %v2703 = vpop.f32.mrf.mxu0
      %v2704 = vadd.f32 %v2615, %v2703
      %v2705 = vpop.f32.mrf.mxu0
      %v2706 = vadd.f32 %v2617, %v2705
      %2707 = vmatmul.bf16.gmra.mxu0 %v1397
      %v2708 = vpop.f32.mrf.mxu0
      %v2709 = vadd.f32 %v2620, %v2708
      %v2710 = vpop.f32.mrf.mxu0
      %v2711 = vadd.f32 %v2622, %v2710
      %2712 = vmatmul.bf16.gmra.mxu0 %v1405
      %v2713 = vpop.f32.mrf.mxu0
      %v2714 = vadd.f32 %v2625, %v2713
      %v2715 = vpop.f32.mrf.mxu0
      %v2716 = vadd.f32 %v2627, %v2715
      %2717 = vmatmul.bf16.gmra.mxu0 %v1413
      %v2718 = vpop.f32.mrf.mxu0
      %v2719 = vadd.f32 %v2630, %v2718
      %v2720 = vpop.f32.mrf.mxu0
      %v2721 = vadd.f32 %v2632, %v2720
      %2722 = vmatmul.bf16.gmra.mxu0 %v1421
      %v2723 = vpop.f32.mrf.mxu0
      %v2724 = vadd.f32 %v2635, %v2723
      %v2725 = vpop.f32.mrf.mxu0
      %v2726 = vadd.f32 %v2637, %v2725
      %2727 = vmatmul.bf16.gmra.mxu0 %v1429
      %v2728 = vpop.f32.mrf.mxu0
      %v2729 = vadd.f32 %v2640, %v2728
      %v2730 = vpop.f32.mrf.mxu0
      %v2731 = vadd.f32 %v2642, %v2730
      %2732 = vmatmul.bf16.gmra.mxu0 %v1437
      %v2733 = vpop.f32.mrf.mxu0
      %v2734 = vadd.f32 %v2645, %v2733
      %v2735 = vpop.f32.mrf.mxu0
      %v2736 = vadd.f32 %v2647, %v2735
      %2737 = vmatmul.bf16.gmra.mxu0 %v1445
      %v2738 = vpop.f32.mrf.mxu0
      %v2739 = vadd.f32 %v2650, %v2738
      %v2740 = vpop.f32.mrf.mxu0
      %v2741 = vadd.f32 %v2652, %v2740
      %2742 = vmatmul.bf16.gmra.mxu0 %v1453
      %v2743 = vpop.f32.mrf.mxu0
      %v2744 = vadd.f32 %v2655, %v2743
      %v2745 = vpop.f32.mrf.mxu0
      %v2746 = vadd.f32 %v2657, %v2745
      %2747 = vmatmul.bf16.gmra.mxu0 %v1461
      %v2748 = vpop.f32.mrf.mxu0
      %v2749 = vadd.f32 %v2660, %v2748
      %v2750 = vpop.f32.mrf.mxu0
      %v2751 = vadd.f32 %v2662, %v2750
      %2752 = vmatmul.bf16.gmra.mxu0 %v1469
      %v2753 = vpop.f32.mrf.mxu0
      %v2754 = vadd.f32 %v2665, %v2753
      %v2755 = vpop.f32.mrf.mxu0
      %v2756 = vadd.f32 %v2667, %v2755
      %2757 = vdwg.mxu0
      %2758 = vmatpush.bf16.msra.mxu0 %v800
      %2759 = vmatpush.bf16.msra.mxu0 %v798
      %2760 = vmatpush.bf16.msra.mxu0 %v796
      %2761 = vmatpush.bf16.msra.mxu0 %v794
      %2762 = vmatpush.bf16.msra.mxu0 %v792
      %2763 = vmatpush.bf16.msra.mxu0 %v790
      %2764 = vmatpush.bf16.msra.mxu0 %v788
      %2765 = vmatpush.bf16.msra.mxu0 %v786
      %2766 = vmatmul.bf16.gmra.mxu0 %v1350
      %v2767 = vpop.f32.mrf.mxu0
      %v2768 = vadd.f32 %v2679, %v2767
      %v2769 = vpop.f32.mrf.mxu0
      %v2770 = vadd.f32 %v2681, %v2769
      %2771 = vmatmul.bf16.gmra.mxu0 %v1358
      %v2772 = vpop.f32.mrf.mxu0
      %v2773 = vadd.f32 %v2684, %v2772
      %v2774 = vpop.f32.mrf.mxu0
      %v2775 = vadd.f32 %v2686, %v2774
      %2776 = vmatmul.bf16.gmra.mxu0 %v1366
      %v2777 = vpop.f32.mrf.mxu0
      %v2778 = vadd.f32 %v2689, %v2777
      %v2779 = vpop.f32.mrf.mxu0
      %v2780 = vadd.f32 %v2691, %v2779
      %2781 = vmatmul.bf16.gmra.mxu0 %v1374
      %v2782 = vpop.f32.mrf.mxu0
      %v2783 = vadd.f32 %v2694, %v2782
      %v2784 = vpop.f32.mrf.mxu0
      %v2785 = vadd.f32 %v2696, %v2784
      %2786 = vmatmul.bf16.gmra.mxu0 %v1382
      %v2787 = vpop.f32.mrf.mxu0
      %v2788 = vadd.f32 %v2699, %v2787
      %v2789 = vpop.f32.mrf.mxu0
      %v2790 = vadd.f32 %v2701, %v2789
      %2791 = vmatmul.bf16.gmra.mxu0 %v1390
      %v2792 = vpop.f32.mrf.mxu0
      %v2793 = vadd.f32 %v2704, %v2792
      %v2794 = vpop.f32.mrf.mxu0
      %v2795 = vadd.f32 %v2706, %v2794
      %2796 = vmatmul.bf16.gmra.mxu0 %v1398
      %v2797 = vpop.f32.mrf.mxu0
      %v2798 = vadd.f32 %v2709, %v2797
      %v2799 = vpop.f32.mrf.mxu0
      %v2800 = vadd.f32 %v2711, %v2799
      %2801 = vmatmul.bf16.gmra.mxu0 %v1406
      %v2802 = vpop.f32.mrf.mxu0
      %v2803 = vadd.f32 %v2714, %v2802
      %v2804 = vpop.f32.mrf.mxu0
      %v2805 = vadd.f32 %v2716, %v2804
      %2806 = vmatmul.bf16.gmra.mxu0 %v1414
      %v2807 = vpop.f32.mrf.mxu0
      %v2808 = vadd.f32 %v2719, %v2807
      %v2809 = vpop.f32.mrf.mxu0
      %v2810 = vadd.f32 %v2721, %v2809
      %2811 = vmatmul.bf16.gmra.mxu0 %v1422
      %v2812 = vpop.f32.mrf.mxu0
      %v2813 = vadd.f32 %v2724, %v2812
      %v2814 = vpop.f32.mrf.mxu0
      %v2815 = vadd.f32 %v2726, %v2814
      %2816 = vmatmul.bf16.gmra.mxu0 %v1430
      %v2817 = vpop.f32.mrf.mxu0
      %v2818 = vadd.f32 %v2729, %v2817
      %v2819 = vpop.f32.mrf.mxu0
      %v2820 = vadd.f32 %v2731, %v2819
      %2821 = vmatmul.bf16.gmra.mxu0 %v1438
      %v2822 = vpop.f32.mrf.mxu0
      %v2823 = vadd.f32 %v2734, %v2822
      %v2824 = vpop.f32.mrf.mxu0
      %v2825 = vadd.f32 %v2736, %v2824
      %2826 = vmatmul.bf16.gmra.mxu0 %v1446
      %v2827 = vpop.f32.mrf.mxu0
      %v2828 = vadd.f32 %v2739, %v2827
      %v2829 = vpop.f32.mrf.mxu0
      %v2830 = vadd.f32 %v2741, %v2829
      %2831 = vmatmul.bf16.gmra.mxu0 %v1454
      %v2832 = vpop.f32.mrf.mxu0
      %v2833 = vadd.f32 %v2744, %v2832
      %v2834 = vpop.f32.mrf.mxu0
      %v2835 = vadd.f32 %v2746, %v2834
      %2836 = vmatmul.bf16.gmra.mxu0 %v1462
      %v2837 = vpop.f32.mrf.mxu0
      %v2838 = vadd.f32 %v2749, %v2837
      %v2839 = vpop.f32.mrf.mxu0
      %v2840 = vadd.f32 %v2751, %v2839
      %2841 = vmatmul.bf16.gmra.mxu0 %v1470
      %v2842 = vpop.f32.mrf.mxu0
      %v2843 = vadd.f32 %v2754, %v2842
      %v2844 = vpop.f32.mrf.mxu0
      %v2845 = vadd.f32 %v2756, %v2844
      %2846 = vdwg.mxu0
      %2847 = vmatpush.bf16.msra.mxu0 %v816
      %2848 = vmatpush.bf16.msra.mxu0 %v814
      %2849 = vmatpush.bf16.msra.mxu0 %v812
      %2850 = vmatpush.bf16.msra.mxu0 %v810
      %2851 = vmatpush.bf16.msra.mxu0 %v808
      %2852 = vmatpush.bf16.msra.mxu0 %v806
      %2853 = vmatpush.bf16.msra.mxu0 %v804
      %2854 = vmatpush.bf16.msra.mxu0 %v802
      %2855 = vmatmul.bf16.gmra.mxu0 %v1351
      %v2856 = vpop.f32.mrf.mxu0
      %v2857 = vadd.f32 %v2768, %v2856
      %v2858 = vpop.f32.mrf.mxu0
      %v2859 = vadd.f32 %v2770, %v2858
      %2860 = vmatmul.bf16.gmra.mxu0 %v1359
      %v2861 = vpop.f32.mrf.mxu0
      %v2862 = vadd.f32 %v2773, %v2861
      %v2863 = vpop.f32.mrf.mxu0
      %v2864 = vadd.f32 %v2775, %v2863
      %2865 = vmatmul.bf16.gmra.mxu0 %v1367
      %v2866 = vpop.f32.mrf.mxu0
      %v2867 = vadd.f32 %v2778, %v2866
      %v2868 = vpop.f32.mrf.mxu0
      %v2869 = vadd.f32 %v2780, %v2868
      %2870 = vmatmul.bf16.gmra.mxu0 %v1375
      %v2871 = vpop.f32.mrf.mxu0
      %v2872 = vadd.f32 %v2783, %v2871
      %v2873 = vpop.f32.mrf.mxu0
      %v2874 = vadd.f32 %v2785, %v2873
      %2875 = vmatmul.bf16.gmra.mxu0 %v1383
      %v2876 = vpop.f32.mrf.mxu0
      %v2877 = vadd.f32 %v2788, %v2876
      %v2878 = vpop.f32.mrf.mxu0
      %v2879 = vadd.f32 %v2790, %v2878
      %2880 = vmatmul.bf16.gmra.mxu0 %v1391
      %v2881 = vpop.f32.mrf.mxu0
      %v2882 = vadd.f32 %v2793, %v2881
      %v2883 = vpop.f32.mrf.mxu0
      %v2884 = vadd.f32 %v2795, %v2883
      %2885 = vmatmul.bf16.gmra.mxu0 %v1399
      %v2886 = vpop.f32.mrf.mxu0
      %v2887 = vadd.f32 %v2798, %v2886
      %v2888 = vpop.f32.mrf.mxu0
      %v2889 = vadd.f32 %v2800, %v2888
      %2890 = vmatmul.bf16.gmra.mxu0 %v1407
      %v2891 = vpop.f32.mrf.mxu0
      %v2892 = vadd.f32 %v2803, %v2891
      %v2893 = vpop.f32.mrf.mxu0
      %v2894 = vadd.f32 %v2805, %v2893
      %2895 = vmatmul.bf16.gmra.mxu0 %v1415
      %v2896 = vpop.f32.mrf.mxu0
      %v2897 = vadd.f32 %v2808, %v2896
      %v2898 = vpop.f32.mrf.mxu0
      %v2899 = vadd.f32 %v2810, %v2898
      %2900 = vmatmul.bf16.gmra.mxu0 %v1423
      %v2901 = vpop.f32.mrf.mxu0
      %v2902 = vadd.f32 %v2813, %v2901
      %v2903 = vpop.f32.mrf.mxu0
      %v2904 = vadd.f32 %v2815, %v2903
      %2905 = vmatmul.bf16.gmra.mxu0 %v1431
      %v2906 = vpop.f32.mrf.mxu0
      %v2907 = vadd.f32 %v2818, %v2906
      %v2908 = vpop.f32.mrf.mxu0
      %v2909 = vadd.f32 %v2820, %v2908
      %2910 = vmatmul.bf16.gmra.mxu0 %v1439
      %v2911 = vpop.f32.mrf.mxu0
      %v2912 = vadd.f32 %v2823, %v2911
      %v2913 = vpop.f32.mrf.mxu0
      %v2914 = vadd.f32 %v2825, %v2913
      %2915 = vmatmul.bf16.gmra.mxu0 %v1447
      %v2916 = vpop.f32.mrf.mxu0
      %v2917 = vadd.f32 %v2828, %v2916
      %v2918 = vpop.f32.mrf.mxu0
      %v2919 = vadd.f32 %v2830, %v2918
      %2920 = vmatmul.bf16.gmra.mxu0 %v1455
      %v2921 = vpop.f32.mrf.mxu0
      %v2922 = vadd.f32 %v2833, %v2921
      %v2923 = vpop.f32.mrf.mxu0
      %v2924 = vadd.f32 %v2835, %v2923
      %2925 = vmatmul.bf16.gmra.mxu0 %v1463
      %v2926 = vpop.f32.mrf.mxu0
      %v2927 = vadd.f32 %v2838, %v2926
      %v2928 = vpop.f32.mrf.mxu0
      %v2929 = vadd.f32 %v2840, %v2928
      %2930 = vmatmul.bf16.gmra.mxu0 %v1471
      %v2931 = vpop.f32.mrf.mxu0
      %v2932 = vadd.f32 %v2843, %v2931
      %v2933 = vpop.f32.mrf.mxu0
      %v2934 = vadd.f32 %v2845, %v2933
      %2935 = vdwg.mxu0
      %2936 = vmatpush.bf16.msra.mxu0 %v832
      %2937 = vmatpush.bf16.msra.mxu0 %v830
      %2938 = vmatpush.bf16.msra.mxu0 %v828
      %2939 = vmatpush.bf16.msra.mxu0 %v826
      %2940 = vmatpush.bf16.msra.mxu0 %v824
      %2941 = vmatpush.bf16.msra.mxu0 %v822
      %2942 = vmatpush.bf16.msra.mxu0 %v820
      %2943 = vmatpush.bf16.msra.mxu0 %v818
      %2944 = vmatmul.bf16.gmra.mxu0 %v1352
      %v2945 = vpop.f32.mrf.mxu0
      %v2946 = vadd.f32 %v2857, %v2945
      %v2947 = vpop.f32.mrf.mxu0
      %v2948 = vadd.f32 %v2859, %v2947
      %2949 = vmatmul.bf16.gmra.mxu0 %v1360
      %v2950 = vpop.f32.mrf.mxu0
      %v2951 = vadd.f32 %v2862, %v2950
      %v2952 = vpop.f32.mrf.mxu0
      %v2953 = vadd.f32 %v2864, %v2952
      %2954 = vmatmul.bf16.gmra.mxu0 %v1368
      %v2955 = vpop.f32.mrf.mxu0
      %v2956 = vadd.f32 %v2867, %v2955
      %v2957 = vpop.f32.mrf.mxu0
      %v2958 = vadd.f32 %v2869, %v2957
      %2959 = vmatmul.bf16.gmra.mxu0 %v1376
      %v2960 = vpop.f32.mrf.mxu0
      %v2961 = vadd.f32 %v2872, %v2960
      %v2962 = vpop.f32.mrf.mxu0
      %v2963 = vadd.f32 %v2874, %v2962
      %2964 = vmatmul.bf16.gmra.mxu0 %v1384
      %v2965 = vpop.f32.mrf.mxu0
      %v2966 = vadd.f32 %v2877, %v2965
      %v2967 = vpop.f32.mrf.mxu0
      %v2968 = vadd.f32 %v2879, %v2967
      %2969 = vmatmul.bf16.gmra.mxu0 %v1392
      %v2970 = vpop.f32.mrf.mxu0
      %v2971 = vadd.f32 %v2882, %v2970
      %v2972 = vpop.f32.mrf.mxu0
      %v2973 = vadd.f32 %v2884, %v2972
      %2974 = vmatmul.bf16.gmra.mxu0 %v1400
      %v2975 = vpop.f32.mrf.mxu0
      %v2976 = vadd.f32 %v2887, %v2975
      %v2977 = vpop.f32.mrf.mxu0
      %v2978 = vadd.f32 %v2889, %v2977
      %2979 = vmatmul.bf16.gmra.mxu0 %v1408
      %v2980 = vpop.f32.mrf.mxu0
      %v2981 = vadd.f32 %v2892, %v2980
      %v2982 = vpop.f32.mrf.mxu0
      %v2983 = vadd.f32 %v2894, %v2982
      %2984 = vmatmul.bf16.gmra.mxu0 %v1416
      %v2985 = vpop.f32.mrf.mxu0
      %v2986 = vadd.f32 %v2897, %v2985
      %v2987 = vpop.f32.mrf.mxu0
      %v2988 = vadd.f32 %v2899, %v2987
      %2989 = vmatmul.bf16.gmra.mxu0 %v1424
      %v2990 = vpop.f32.mrf.mxu0
      %v2991 = vadd.f32 %v2902, %v2990
      %v2992 = vpop.f32.mrf.mxu0
      %v2993 = vadd.f32 %v2904, %v2992
      %2994 = vmatmul.bf16.gmra.mxu0 %v1432
      %v2995 = vpop.f32.mrf.mxu0
      %v2996 = vadd.f32 %v2907, %v2995
      %v2997 = vpop.f32.mrf.mxu0
      %v2998 = vadd.f32 %v2909, %v2997
      %2999 = vmatmul.bf16.gmra.mxu0 %v1440
      %v3000 = vpop.f32.mrf.mxu0
      %v3001 = vadd.f32 %v2912, %v3000
      %v3002 = vpop.f32.mrf.mxu0
      %v3003 = vadd.f32 %v2914, %v3002
      %3004 = vmatmul.bf16.gmra.mxu0 %v1448
      %v3005 = vpop.f32.mrf.mxu0
      %v3006 = vadd.f32 %v2917, %v3005
      %v3007 = vpop.f32.mrf.mxu0
      %v3008 = vadd.f32 %v2919, %v3007
      %3009 = vmatmul.bf16.gmra.mxu0 %v1456
      %v3010 = vpop.f32.mrf.mxu0
      %v3011 = vadd.f32 %v2922, %v3010
      %v3012 = vpop.f32.mrf.mxu0
      %v3013 = vadd.f32 %v2924, %v3012
      %3014 = vmatmul.bf16.gmra.mxu0 %v1464
      %v3015 = vpop.f32.mrf.mxu0
      %v3016 = vadd.f32 %v2927, %v3015
      %v3017 = vpop.f32.mrf.mxu0
      %v3018 = vadd.f32 %v2929, %v3017
      %3019 = vmatmul.bf16.gmra.mxu0 %v1472
      %v3020 = vpop.f32.mrf.mxu0
      %v3021 = vadd.f32 %v2932, %v3020
      %v3022 = vpop.f32.mrf.mxu0
      %v3023 = vadd.f32 %v2934, %v3022
      %3024 = vdwg.mxu0
      %3025 = vst [vmem:[%s192] sm:$0xff] %v2234
      %vm3026 = vcmask 556032
      %3027 = vst.msk [vmem:[%s192 + $0x8] sm:$0xff] %vm3026, %v2946
      %3028 = vst [vmem:[%s192 + $0x10] sm:$0xff] %v2236
      %3029 = vst.msk [vmem:[%s192 + $0x18] sm:$0xff] %vm3026, %v2948
      %3030 = vst [vmem:[%s192 + $0x20] sm:$0xff] %v2239
      %3031 = vst.msk [vmem:[%s192 + $0x28] sm:$0xff] %vm3026, %v2951
      %3032 = vst [vmem:[%s192 + $0x30] sm:$0xff] %v2241
      %3033 = vst.msk [vmem:[%s192 + $0x38] sm:$0xff] %vm3026, %v2953
      %3034 = vst [vmem:[%s192 + $0x40] sm:$0xff] %v2244
      %3035 = vst.msk [vmem:[%s192 + $0x48] sm:$0xff] %vm3026, %v2956
      %3036 = vst [vmem:[%s192 + $0x50] sm:$0xff] %v2246
      %3037 = vst.msk [vmem:[%s192 + $0x58] sm:$0xff] %vm3026, %v2958
      %3038 = vst [vmem:[%s192 + $0x60] sm:$0xff] %v2249
      %3039 = vst.msk [vmem:[%s192 + $0x68] sm:$0xff] %vm3026, %v2961
      %3040 = vst [vmem:[%s192 + $0x70] sm:$0xff] %v2251
      %3041 = vst.msk [vmem:[%s192 + $0x78] sm:$0xff] %vm3026, %v2963
      %3042 = vst [vmem:[%s192 + $0x80] sm:$0xff] %v2254
      %3043 = vst.msk [vmem:[%s192 + $0x88] sm:$0xff] %vm3026, %v2966
      %3044 = vst [vmem:[%s192 + $0x90] sm:$0xff] %v2256
      %3045 = vst.msk [vmem:[%s192 + $0x98] sm:$0xff] %vm3026, %v2968
      %3046 = vst [vmem:[%s192 + $0xa0] sm:$0xff] %v2259
      %3047 = vst.msk [vmem:[%s192 + $0xa8] sm:$0xff] %vm3026, %v2971
      %3048 = vst [vmem:[%s192 + $0xb0] sm:$0xff] %v2261
      %3049 = vst.msk [vmem:[%s192 + $0xb8] sm:$0xff] %vm3026, %v2973
      %3050 = vst [vmem:[%s192 + $0xc0] sm:$0xff] %v2264
      %3051 = vst.msk [vmem:[%s192 + $0xc8] sm:$0xff] %vm3026, %v2976
      %3052 = vst [vmem:[%s192 + $0xd0] sm:$0xff] %v2266
      %3053 = vst.msk [vmem:[%s192 + $0xd8] sm:$0xff] %vm3026, %v2978
      %3054 = vst [vmem:[%s192 + $0xe0] sm:$0xff] %v2269
      %3055 = vst.msk [vmem:[%s192 + $0xe8] sm:$0xff] %vm3026, %v2981
      %3056 = vst [vmem:[%s192 + $0xf0] sm:$0xff] %v2271
      %3057 = vst.msk [vmem:[%s192 + $0xf8] sm:$0xff] %vm3026, %v2983
      %3058 = vst [vmem:[%s192 + $0x100] sm:$0xff] %v2274
      %3059 = vst.msk [vmem:[%s192 + $0x108] sm:$0xff] %vm3026, %v2986
      %3060 = vst [vmem:[%s192 + $0x110] sm:$0xff] %v2276
      %3061 = vst.msk [vmem:[%s192 + $0x118] sm:$0xff] %vm3026, %v2988
      %3062 = vst [vmem:[%s192 + $0x120] sm:$0xff] %v2279
      %3063 = vst.msk [vmem:[%s192 + $0x128] sm:$0xff] %vm3026, %v2991
      %3064 = vst [vmem:[%s192 + $0x130] sm:$0xff] %v2281
      %3065 = vst.msk [vmem:[%s192 + $0x138] sm:$0xff] %vm3026, %v2993
      %3066 = vst [vmem:[%s192 + $0x140] sm:$0xff] %v2284
      %3067 = vst.msk [vmem:[%s192 + $0x148] sm:$0xff] %vm3026, %v2996
      %3068 = vst [vmem:[%s192 + $0x150] sm:$0xff] %v2286
      %3069 = vst.msk [vmem:[%s192 + $0x158] sm:$0xff] %vm3026, %v2998
      %3070 = vst [vmem:[%s192 + $0x160] sm:$0xff] %v2289
      %3071 = vst.msk [vmem:[%s192 + $0x168] sm:$0xff] %vm3026, %v3001
      %3072 = vst [vmem:[%s192 + $0x170] sm:$0xff] %v2291
      %3073 = vst.msk [vmem:[%s192 + $0x178] sm:$0xff] %vm3026, %v3003
      %3074 = vst [vmem:[%s192 + $0x180] sm:$0xff] %v2294
      %3075 = vst.msk [vmem:[%s192 + $0x188] sm:$0xff] %vm3026, %v3006
      %3076 = vst [vmem:[%s192 + $0x190] sm:$0xff] %v2296
      %3077 = vst.msk [vmem:[%s192 + $0x198] sm:$0xff] %vm3026, %v3008
      %3078 = vst [vmem:[%s192 + $0x1a0] sm:$0xff] %v2299
      %3079 = vst.msk [vmem:[%s192 + $0x1a8] sm:$0xff] %vm3026, %v3011
      %3080 = vst [vmem:[%s192 + $0x1b0] sm:$0xff] %v2301
      %3081 = vst.msk [vmem:[%s192 + $0x1b8] sm:$0xff] %vm3026, %v3013
      %3082 = vst [vmem:[%s192 + $0x1c0] sm:$0xff] %v2304
      %3083 = vst.msk [vmem:[%s192 + $0x1c8] sm:$0xff] %vm3026, %v3016
      %3084 = vst [vmem:[%s192 + $0x1d0] sm:$0xff] %v2306
      %3085 = vst.msk [vmem:[%s192 + $0x1d8] sm:$0xff] %vm3026, %v3018
      %3086 = vst [vmem:[%s192 + $0x1e0] sm:$0xff] %v2309
      %3087 = vst.msk [vmem:[%s192 + $0x1e8] sm:$0xff] %vm3026, %v3021
      %3088 = vst [vmem:[%s192 + $0x1f0] sm:$0xff] %v2311
      %3089 = vst.msk [vmem:[%s192 + $0x1f8] sm:$0xff] %vm3026, %v3023
      %p3090 = scmp.eq.s32.totalorder %s16, 0
      // Predicated region
      $region29: #{tpu_custom_call.1} parent=27 // pred_check
        %p3091 = pneg %p3090
      $region30: #{tpu_custom_call.1} parent=27 // pred_check_branch
        %3093 = sbr.rel (%p3091) target = $region32
      $region31: #{tpu_custom_call.1} parent=27 // pred_region
        %vm3094 = vcmask 7168
        %3095 = vst.msk [vmem:[%s3] sm:$0xff] %vm3094, 0.0
        %3096 = vst.msk [vmem:[%s3 + $0x8] sm:$0xff] %vm3094, 0.0
        %3097 = vst.msk [vmem:[%s3 + $0x10] sm:$0xff] %vm3094, 0.0
        %3098 = vst.msk [vmem:[%s3 + $0x18] sm:$0xff] %vm3094, 0.0
        %3099 = vst.msk [vmem:[%s3 + $0x20] sm:$0xff] %vm3094, 0.0
        %3100 = vst.msk [vmem:[%s3 + $0x28] sm:$0xff] %vm3094, 0.0
        %3101 = vst.msk [vmem:[%s3 + $0x30] sm:$0xff] %vm3094, 0.0
        %3102 = vst.msk [vmem:[%s3 + $0x38] sm:$0xff] %vm3094, 0.0
        %3103 = vst.msk [vmem:[%s3 + $0x40] sm:$0xff] %vm3094, 0.0
        %3104 = vst.msk [vmem:[%s3 + $0x48] sm:$0xff] %vm3094, 0.0
        %3105 = vst.msk [vmem:[%s3 + $0x50] sm:$0xff] %vm3094, 0.0
        %3106 = vst.msk [vmem:[%s3 + $0x58] sm:$0xff] %vm3094, 0.0
        %3107 = vst.msk [vmem:[%s3 + $0x60] sm:$0xff] %vm3094, 0.0
        %3108 = vst.msk [vmem:[%s3 + $0x68] sm:$0xff] %vm3094, 0.0
        %3109 = vst.msk [vmem:[%s3 + $0x70] sm:$0xff] %vm3094, 0.0
        %3110 = vst.msk [vmem:[%s3 + $0x78] sm:$0xff] %vm3094, 0.0
        %3111 = vst.msk [vmem:[%s3 + $0x80] sm:$0xff] %vm3094, 0.0
        %3112 = vst.msk [vmem:[%s3 + $0x88] sm:$0xff] %vm3094, 0.0
        %3113 = vst.msk [vmem:[%s3 + $0x90] sm:$0xff] %vm3094, 0.0
        %3114 = vst.msk [vmem:[%s3 + $0x98] sm:$0xff] %vm3094, 0.0
        %3115 = vst.msk [vmem:[%s3 + $0xa0] sm:$0xff] %vm3094, 0.0
        %3116 = vst.msk [vmem:[%s3 + $0xa8] sm:$0xff] %vm3094, 0.0
        %3117 = vst.msk [vmem:[%s3 + $0xb0] sm:$0xff] %vm3094, 0.0
        %3118 = vst.msk [vmem:[%s3 + $0xb8] sm:$0xff] %vm3094, 0.0
        %3119 = vst.msk [vmem:[%s3 + $0xc0] sm:$0xff] %vm3094, 0.0
        %3120 = vst.msk [vmem:[%s3 + $0xc8] sm:$0xff] %vm3094, 0.0
        %3121 = vst.msk [vmem:[%s3 + $0xd0] sm:$0xff] %vm3094, 0.0
        %3122 = vst.msk [vmem:[%s3 + $0xd8] sm:$0xff] %vm3094, 0.0
        %3123 = vst.msk [vmem:[%s3 + $0xe0] sm:$0xff] %vm3094, 0.0
        %3124 = vst.msk [vmem:[%s3 + $0xe8] sm:$0xff] %vm3094, 0.0
        %3125 = vst.msk [vmem:[%s3 + $0xf0] sm:$0xff] %vm3094, 0.0
        %3126 = vst.msk [vmem:[%s3 + $0xf8] sm:$0xff] %vm3094, 0.0
        %3127 = vst.msk [vmem:[%s4] sm:$0xff] %vm3094, 0.0
        %3128 = vst.msk [vmem:[%s4 + $0x8] sm:$0xff] %vm3094, 0.0
        %3129 = vst.msk [vmem:[%s4 + $0x10] sm:$0xff] %vm3094, 0.0
        %3130 = vst.msk [vmem:[%s4 + $0x18] sm:$0xff] %vm3094, 0.0
        %3131 = vst.msk [vmem:[%s4 + $0x20] sm:$0xff] %vm3094, 0.0
        %3132 = vst.msk [vmem:[%s4 + $0x28] sm:$0xff] %vm3094, 0.0
        %3133 = vst.msk [vmem:[%s4 + $0x30] sm:$0xff] %vm3094, 0.0
        %3134 = vst.msk [vmem:[%s4 + $0x38] sm:$0xff] %vm3094, 0.0
        %3135 = vst.msk [vmem:[%s4 + $0x40] sm:$0xff] %vm3094, 0.0
        %3136 = vst.msk [vmem:[%s4 + $0x48] sm:$0xff] %vm3094, 0.0
        %3137 = vst.msk [vmem:[%s4 + $0x50] sm:$0xff] %vm3094, 0.0
        %3138 = vst.msk [vmem:[%s4 + $0x58] sm:$0xff] %vm3094, 0.0
        %3139 = vst.msk [vmem:[%s4 + $0x60] sm:$0xff] %vm3094, 0.0
        %3140 = vst.msk [vmem:[%s4 + $0x68] sm:$0xff] %vm3094, 0.0
        %3141 = vst.msk [vmem:[%s4 + $0x70] sm:$0xff] %vm3094, 0.0
        %3142 = vst.msk [vmem:[%s4 + $0x78] sm:$0xff] %vm3094, 0.0
        %3143 = vst.msk [vmem:[%s4 + $0x80] sm:$0xff] %vm3094, 0.0
        %3144 = vst.msk [vmem:[%s4 + $0x88] sm:$0xff] %vm3094, 0.0
        %3145 = vst.msk [vmem:[%s4 + $0x90] sm:$0xff] %vm3094, 0.0
        %3146 = vst.msk [vmem:[%s4 + $0x98] sm:$0xff] %vm3094, 0.0
        %3147 = vst.msk [vmem:[%s4 + $0xa0] sm:$0xff] %vm3094, 0.0
        %3148 = vst.msk [vmem:[%s4 + $0xa8] sm:$0xff] %vm3094, 0.0
        %3149 = vst.msk [vmem:[%s4 + $0xb0] sm:$0xff] %vm3094, 0.0
        %3150 = vst.msk [vmem:[%s4 + $0xb8] sm:$0xff] %vm3094, 0.0
        %3151 = vst.msk [vmem:[%s4 + $0xc0] sm:$0xff] %vm3094, 0.0
        %3152 = vst.msk [vmem:[%s4 + $0xc8] sm:$0xff] %vm3094, 0.0
        %3153 = vst.msk [vmem:[%s4 + $0xd0] sm:$0xff] %vm3094, 0.0
        %3154 = vst.msk [vmem:[%s4 + $0xd8] sm:$0xff] %vm3094, 0.0
        %3155 = vst.msk [vmem:[%s4 + $0xe0] sm:$0xff] %vm3094, 0.0
        %3156 = vst.msk [vmem:[%s4 + $0xe8] sm:$0xff] %vm3094, 0.0
        %3157 = vst.msk [vmem:[%s4 + $0xf0] sm:$0xff] %vm3094, 0.0
        %3158 = vst.msk [vmem:[%s4 + $0xf8] sm:$0xff] %vm3094, 0.0
      $region32: #{tpu_custom_call.1} parent=27 // pred_fallthru
        _
      %v3159 = vld [vmem:[%s3] sm:$0xff]
      %v3160 = vld [vmem:[%s3 + $0x8] sm:$0xff]
      %v3161 = vld [vmem:[%s3 + $0x10] sm:$0xff]
      %v3162 = vld [vmem:[%s3 + $0x18] sm:$0xff]
      %v3163 = vld [vmem:[%s3 + $0x20] sm:$0xff]
      %v3164 = vld [vmem:[%s3 + $0x28] sm:$0xff]
      %v3165 = vld [vmem:[%s3 + $0x30] sm:$0xff]
      %v3166 = vld [vmem:[%s3 + $0x38] sm:$0xff]
      %v3167 = vld [vmem:[%s3 + $0x40] sm:$0xff]
      %v3168 = vld [vmem:[%s3 + $0x48] sm:$0xff]
      %v3169 = vld [vmem:[%s3 + $0x50] sm:$0xff]
      %v3170 = vld [vmem:[%s3 + $0x58] sm:$0xff]
      %v3171 = vld [vmem:[%s3 + $0x60] sm:$0xff]
      %v3172 = vld [vmem:[%s3 + $0x68] sm:$0xff]
      %v3173 = vld [vmem:[%s3 + $0x70] sm:$0xff]
      %v3174 = vld [vmem:[%s3 + $0x78] sm:$0xff]
      %v3175 = vld [vmem:[%s3 + $0x80] sm:$0xff]
      %v3176 = vld [vmem:[%s3 + $0x88] sm:$0xff]
      %v3177 = vld [vmem:[%s3 + $0x90] sm:$0xff]
      %v3178 = vld [vmem:[%s3 + $0x98] sm:$0xff]
      %v3179 = vld [vmem:[%s3 + $0xa0] sm:$0xff]
      %v3180 = vld [vmem:[%s3 + $0xa8] sm:$0xff]
      %v3181 = vld [vmem:[%s3 + $0xb0] sm:$0xff]
      %v3182 = vld [vmem:[%s3 + $0xb8] sm:$0xff]
      %v3183 = vld [vmem:[%s3 + $0xc0] sm:$0xff]
      %v3184 = vld [vmem:[%s3 + $0xc8] sm:$0xff]
      %v3185 = vld [vmem:[%s3 + $0xd0] sm:$0xff]
      %v3186 = vld [vmem:[%s3 + $0xd8] sm:$0xff]
      %v3187 = vld [vmem:[%s3 + $0xe0] sm:$0xff]
      %v3188 = vld [vmem:[%s3 + $0xe8] sm:$0xff]
      %v3189 = vld [vmem:[%s3 + $0xf0] sm:$0xff]
      %v3190 = vld [vmem:[%s3 + $0xf8] sm:$0xff]
      %v3191 = vsel %vm3026, %v2946, 0.0
      %v3192 = vadd.f32 %v2234, %v3191
      %3193 = vadd.xlane.f32.xlu0 %v3192
      %v3194 = vpop.xlane.xlu0 %3193
      %v3195 = vsel %vm3026, %v2948, 0.0
      %v3196 = vadd.f32 %v2236, %v3195
      %3197 = vadd.xlane.f32.xlu0 %v3196
      %v3198 = vpop.xlane.xlu0 %3197
      %v3199 = vsel %vm3026, %v2951, 0.0
      %v3200 = vadd.f32 %v2239, %v3199
      %3201 = vadd.xlane.f32.xlu0 %v3200
      %v3202 = vpop.xlane.xlu0 %3201
      %v3203 = vsel %vm3026, %v2953, 0.0
      %v3204 = vadd.f32 %v2241, %v3203
      %3205 = vadd.xlane.f32.xlu0 %v3204
      %v3206 = vpop.xlane.xlu0 %3205
      %v3207 = vsel %vm3026, %v2956, 0.0
      %v3208 = vadd.f32 %v2244, %v3207
      %3209 = vadd.xlane.f32.xlu0 %v3208
      %v3210 = vpop.xlane.xlu0 %3209
      %v3211 = vsel %vm3026, %v2958, 0.0
      %v3212 = vadd.f32 %v2246, %v3211
      %3213 = vadd.xlane.f32.xlu0 %v3212
      %v3214 = vpop.xlane.xlu0 %3213
      %v3215 = vsel %vm3026, %v2961, 0.0
      %v3216 = vadd.f32 %v2249, %v3215
      %3217 = vadd.xlane.f32.xlu0 %v3216
      %v3218 = vpop.xlane.xlu0 %3217
      %v3219 = vsel %vm3026, %v2963, 0.0
      %v3220 = vadd.f32 %v2251, %v3219
      %3221 = vadd.xlane.f32.xlu0 %v3220
      %v3222 = vpop.xlane.xlu0 %3221
      %v3223 = vsel %vm3026, %v2966, 0.0
      %v3224 = vadd.f32 %v2254, %v3223
      %3225 = vadd.xlane.f32.xlu0 %v3224
      %v3226 = vpop.xlane.xlu0 %3225
      %v3227 = vsel %vm3026, %v2968, 0.0
      %v3228 = vadd.f32 %v2256, %v3227
      %3229 = vadd.xlane.f32.xlu0 %v3228
      %v3230 = vpop.xlane.xlu0 %3229
      %v3231 = vsel %vm3026, %v2971, 0.0
      %v3232 = vadd.f32 %v2259, %v3231
      %3233 = vadd.xlane.f32.xlu0 %v3232
      %v3234 = vpop.xlane.xlu0 %3233
      %v3235 = vsel %vm3026, %v2973, 0.0
      %v3236 = vadd.f32 %v2261, %v3235
      %3237 = vadd.xlane.f32.xlu0 %v3236
      %v3238 = vpop.xlane.xlu0 %3237
      %v3239 = vsel %vm3026, %v2976, 0.0
      %v3240 = vadd.f32 %v2264, %v3239
      %3241 = vadd.xlane.f32.xlu0 %v3240
      %v3242 = vpop.xlane.xlu0 %3241
      %v3243 = vsel %vm3026, %v2978, 0.0
      %v3244 = vadd.f32 %v2266, %v3243
      %3245 = vadd.xlane.f32.xlu0 %v3244
      %v3246 = vpop.xlane.xlu0 %3245
      %v3247 = vsel %vm3026, %v2981, 0.0
      %v3248 = vadd.f32 %v2269, %v3247
      %3249 = vadd.xlane.f32.xlu0 %v3248
      %v3250 = vpop.xlane.xlu0 %3249
      %v3251 = vsel %vm3026, %v2983, 0.0
      %v3252 = vadd.f32 %v2271, %v3251
      %3253 = vadd.xlane.f32.xlu0 %v3252
      %v3254 = vpop.xlane.xlu0 %3253
      %v3255 = vsel %vm3026, %v2986, 0.0
      %v3256 = vadd.f32 %v2274, %v3255
      %3257 = vadd.xlane.f32.xlu0 %v3256
      %v3258 = vpop.xlane.xlu0 %3257
      %v3259 = vsel %vm3026, %v2988, 0.0
      %v3260 = vadd.f32 %v2276, %v3259
      %3261 = vadd.xlane.f32.xlu0 %v3260
      %v3262 = vpop.xlane.xlu0 %3261
      %v3263 = vsel %vm3026, %v2991, 0.0
      %v3264 = vadd.f32 %v2279, %v3263
      %3265 = vadd.xlane.f32.xlu0 %v3264
      %v3266 = vpop.xlane.xlu0 %3265
      %v3267 = vsel %vm3026, %v2993, 0.0
      %v3268 = vadd.f32 %v2281, %v3267
      %3269 = vadd.xlane.f32.xlu0 %v3268
      %v3270 = vpop.xlane.xlu0 %3269
      %v3271 = vsel %vm3026, %v2996, 0.0
      %v3272 = vadd.f32 %v2284, %v3271
      %3273 = vadd.xlane.f32.xlu0 %v3272
      %v3274 = vpop.xlane.xlu0 %3273
      %v3275 = vsel %vm3026, %v2998, 0.0
      %v3276 = vadd.f32 %v2286, %v3275
      %3277 = vadd.xlane.f32.xlu0 %v3276
      %v3278 = vpop.xlane.xlu0 %3277
      %v3279 = vsel %vm3026, %v3001, 0.0
      %v3280 = vadd.f32 %v2289, %v3279
      %3281 = vadd.xlane.f32.xlu0 %v3280
      %v3282 = vpop.xlane.xlu0 %3281
      %v3283 = vsel %vm3026, %v3003, 0.0
      %v3284 = vadd.f32 %v2291, %v3283
      %3285 = vadd.xlane.f32.xlu0 %v3284
      %v3286 = vpop.xlane.xlu0 %3285
      %v3287 = vsel %vm3026, %v3006, 0.0
      %v3288 = vadd.f32 %v2294, %v3287
      %3289 = vadd.xlane.f32.xlu0 %v3288
      %v3290 = vpop.xlane.xlu0 %3289
      %v3291 = vsel %vm3026, %v3008, 0.0
      %v3292 = vadd.f32 %v2296, %v3291
      %3293 = vadd.xlane.f32.xlu0 %v3292
      %v3294 = vpop.xlane.xlu0 %3293
      %v3295 = vsel %vm3026, %v3011, 0.0
      %v3296 = vadd.f32 %v2299, %v3295
      %3297 = vadd.xlane.f32.xlu0 %v3296
      %v3298 = vpop.xlane.xlu0 %3297
      %v3299 = vsel %vm3026, %v3013, 0.0
      %v3300 = vadd.f32 %v2301, %v3299
      %3301 = vadd.xlane.f32.xlu0 %v3300
      %v3302 = vpop.xlane.xlu0 %3301
      %v3303 = vsel %vm3026, %v3016, 0.0
      %v3304 = vadd.f32 %v2304, %v3303
      %3305 = vadd.xlane.f32.xlu0 %v3304
      %v3306 = vpop.xlane.xlu0 %3305
      %v3307 = vsel %vm3026, %v3018, 0.0
      %v3308 = vadd.f32 %v2306, %v3307
      %3309 = vadd.xlane.f32.xlu0 %v3308
      %v3310 = vpop.xlane.xlu0 %3309
      %v3311 = vsel %vm3026, %v3021, 0.0
      %v3312 = vadd.f32 %v2309, %v3311
      %3313 = vadd.xlane.f32.xlu0 %v3312
      %v3314 = vpop.xlane.xlu0 %3313
      %v3315 = vsel %vm3026, %v3023, 0.0
      %v3316 = vadd.f32 %v2311, %v3315
      %3317 = vadd.xlane.f32.xlu0 %v3316
      %v3318 = vpop.xlane.xlu0 %3317
      %v3319 = vadd.f32 %v3159, %v3194
      %v3320 = vadd.f32 %v3160, %v3198
      %v3321 = vadd.f32 %v3161, %v3202
      %v3322 = vadd.f32 %v3162, %v3206
      %v3323 = vadd.f32 %v3163, %v3210
      %v3324 = vadd.f32 %v3164, %v3214
      %v3325 = vadd.f32 %v3165, %v3218
      %v3326 = vadd.f32 %v3166, %v3222
      %v3327 = vadd.f32 %v3167, %v3226
      %v3328 = vadd.f32 %v3168, %v3230
      %v3329 = vadd.f32 %v3169, %v3234
      %v3330 = vadd.f32 %v3170, %v3238
      %v3331 = vadd.f32 %v3171, %v3242
      %v3332 = vadd.f32 %v3172, %v3246
      %v3333 = vadd.f32 %v3173, %v3250
      %v3334 = vadd.f32 %v3174, %v3254
      %v3335 = vadd.f32 %v3175, %v3258
      %v3336 = vadd.f32 %v3176, %v3262
      %v3337 = vadd.f32 %v3177, %v3266
      %v3338 = vadd.f32 %v3178, %v3270
      %v3339 = vadd.f32 %v3179, %v3274
      %v3340 = vadd.f32 %v3180, %v3278
      %v3341 = vadd.f32 %v3181, %v3282
      %v3342 = vadd.f32 %v3182, %v3286
      %v3343 = vadd.f32 %v3183, %v3290
      %v3344 = vadd.f32 %v3184, %v3294
      %v3345 = vadd.f32 %v3185, %v3298
      %v3346 = vadd.f32 %v3186, %v3302
      %v3347 = vadd.f32 %v3187, %v3306
      %v3348 = vadd.f32 %v3188, %v3310
      %v3349 = vadd.f32 %v3189, %v3314
      %v3350 = vadd.f32 %v3190, %v3318
      %vm3351 = vcmask 7168
      %3352 = vst.msk [vmem:[%s3] sm:$0xff] %vm3351, %v3319
      %3353 = vst.msk [vmem:[%s3 + $0x8] sm:$0xff] %vm3351, %v3320
      %3354 = vst.msk [vmem:[%s3 + $0x10] sm:$0xff] %vm3351, %v3321
      %3355 = vst.msk [vmem:[%s3 + $0x18] sm:$0xff] %vm3351, %v3322
      %3356 = vst.msk [vmem:[%s3 + $0x20] sm:$0xff] %vm3351, %v3323
      %3357 = vst.msk [vmem:[%s3 + $0x28] sm:$0xff] %vm3351, %v3324
      %3358 = vst.msk [vmem:[%s3 + $0x30] sm:$0xff] %vm3351, %v3325
      %3359 = vst.msk [vmem:[%s3 + $0x38] sm:$0xff] %vm3351, %v3326
      %3360 = vst.msk [vmem:[%s3 + $0x40] sm:$0xff] %vm3351, %v3327
      %3361 = vst.msk [vmem:[%s3 + $0x48] sm:$0xff] %vm3351, %v3328
      %3362 = vst.msk [vmem:[%s3 + $0x50] sm:$0xff] %vm3351, %v3329
      %3363 = vst.msk [vmem:[%s3 + $0x58] sm:$0xff] %vm3351, %v3330
      %3364 = vst.msk [vmem:[%s3 + $0x60] sm:$0xff] %vm3351, %v3331
      %3365 = vst.msk [vmem:[%s3 + $0x68] sm:$0xff] %vm3351, %v3332
      %3366 = vst.msk [vmem:[%s3 + $0x70] sm:$0xff] %vm3351, %v3333
      %3367 = vst.msk [vmem:[%s3 + $0x78] sm:$0xff] %vm3351, %v3334
      %3368 = vst.msk [vmem:[%s3 + $0x80] sm:$0xff] %vm3351, %v3335
      %3369 = vst.msk [vmem:[%s3 + $0x88] sm:$0xff] %vm3351, %v3336
      %3370 = vst.msk [vmem:[%s3 + $0x90] sm:$0xff] %vm3351, %v3337
      %3371 = vst.msk [vmem:[%s3 + $0x98] sm:$0xff] %vm3351, %v3338
      %3372 = vst.msk [vmem:[%s3 + $0xa0] sm:$0xff] %vm3351, %v3339
      %3373 = vst.msk [vmem:[%s3 + $0xa8] sm:$0xff] %vm3351, %v3340
      %3374 = vst.msk [vmem:[%s3 + $0xb0] sm:$0xff] %vm3351, %v3341
      %3375 = vst.msk [vmem:[%s3 + $0xb8] sm:$0xff] %vm3351, %v3342
      %3376 = vst.msk [vmem:[%s3 + $0xc0] sm:$0xff] %vm3351, %v3343
      %3377 = vst.msk [vmem:[%s3 + $0xc8] sm:$0xff] %vm3351, %v3344
      %3378 = vst.msk [vmem:[%s3 + $0xd0] sm:$0xff] %vm3351, %v3345
      %3379 = vst.msk [vmem:[%s3 + $0xd8] sm:$0xff] %vm3351, %v3346
      %3380 = vst.msk [vmem:[%s3 + $0xe0] sm:$0xff] %vm3351, %v3347
      %3381 = vst.msk [vmem:[%s3 + $0xe8] sm:$0xff] %vm3351, %v3348
      %3382 = vst.msk [vmem:[%s3 + $0xf0] sm:$0xff] %vm3351, %v3349
      %3383 = vst.msk [vmem:[%s3 + $0xf8] sm:$0xff] %vm3351, %v3350
      %v3384 = vld [vmem:[%s4] sm:$0xff]
      %v3385 = vld [vmem:[%s4 + $0x8] sm:$0xff]
      %v3386 = vld [vmem:[%s4 + $0x10] sm:$0xff]
      %v3387 = vld [vmem:[%s4 + $0x18] sm:$0xff]
      %v3388 = vld [vmem:[%s4 + $0x20] sm:$0xff]
      %v3389 = vld [vmem:[%s4 + $0x28] sm:$0xff]
      %v3390 = vld [vmem:[%s4 + $0x30] sm:$0xff]
      %v3391 = vld [vmem:[%s4 + $0x38] sm:$0xff]
      %v3392 = vld [vmem:[%s4 + $0x40] sm:$0xff]
      %v3393 = vld [vmem:[%s4 + $0x48] sm:$0xff]
      %v3394 = vld [vmem:[%s4 + $0x50] sm:$0xff]
      %v3395 = vld [vmem:[%s4 + $0x58] sm:$0xff]
      %v3396 = vld [vmem:[%s4 + $0x60] sm:$0xff]
      %v3397 = vld [vmem:[%s4 + $0x68] sm:$0xff]
      %v3398 = vld [vmem:[%s4 + $0x70] sm:$0xff]
      %v3399 = vld [vmem:[%s4 + $0x78] sm:$0xff]
      %v3400 = vld [vmem:[%s4 + $0x80] sm:$0xff]
      %v3401 = vld [vmem:[%s4 + $0x88] sm:$0xff]
      %v3402 = vld [vmem:[%s4 + $0x90] sm:$0xff]
      %v3403 = vld [vmem:[%s4 + $0x98] sm:$0xff]
      %v3404 = vld [vmem:[%s4 + $0xa0] sm:$0xff]
      %v3405 = vld [vmem:[%s4 + $0xa8] sm:$0xff]
      %v3406 = vld [vmem:[%s4 + $0xb0] sm:$0xff]
      %v3407 = vld [vmem:[%s4 + $0xb8] sm:$0xff]
      %v3408 = vld [vmem:[%s4 + $0xc0] sm:$0xff]
      %v3409 = vld [vmem:[%s4 + $0xc8] sm:$0xff]
      %v3410 = vld [vmem:[%s4 + $0xd0] sm:$0xff]
      %v3411 = vld [vmem:[%s4 + $0xd8] sm:$0xff]
      %v3412 = vld [vmem:[%s4 + $0xe0] sm:$0xff]
      %v3413 = vld [vmem:[%s4 + $0xe8] sm:$0xff]
      %v3414 = vld [vmem:[%s4 + $0xf0] sm:$0xff]
      %v3415 = vld [vmem:[%s4 + $0xf8] sm:$0xff]
      %v3416 = vmul.f32 %v2234, %v2234
      %v3417 = vmul.f32 %v2946, %v2946
      %v3418 = vmul.f32 %v2236, %v2236
      %v3419 = vmul.f32 %v2948, %v2948
      %v3420 = vmul.f32 %v2239, %v2239
      %v3421 = vmul.f32 %v2951, %v2951
      %v3422 = vmul.f32 %v2241, %v2241
      %v3423 = vmul.f32 %v2953, %v2953
      %v3424 = vmul.f32 %v2244, %v2244
      %v3425 = vmul.f32 %v2956, %v2956
      %v3426 = vmul.f32 %v2246, %v2246
      %v3427 = vmul.f32 %v2958, %v2958
      %v3428 = vmul.f32 %v2249, %v2249
      %v3429 = vmul.f32 %v2961, %v2961
      %v3430 = vmul.f32 %v2251, %v2251
      %v3431 = vmul.f32 %v2963, %v2963
      %v3432 = vmul.f32 %v2254, %v2254
      %v3433 = vmul.f32 %v2966, %v2966
      %v3434 = vmul.f32 %v2256, %v2256
      %v3435 = vmul.f32 %v2968, %v2968
      %v3436 = vmul.f32 %v2259, %v2259
      %v3437 = vmul.f32 %v2971, %v2971
      %v3438 = vmul.f32 %v2261, %v2261
      %v3439 = vmul.f32 %v2973, %v2973
      %v3440 = vmul.f32 %v2264, %v2264
      %v3441 = vmul.f32 %v2976, %v2976
      %v3442 = vmul.f32 %v2266, %v2266
      %v3443 = vmul.f32 %v2978, %v2978
      %v3444 = vmul.f32 %v2269, %v2269
      %v3445 = vmul.f32 %v2981, %v2981
      %v3446 = vmul.f32 %v2271, %v2271
      %v3447 = vmul.f32 %v2983, %v2983
      %v3448 = vmul.f32 %v2274, %v2274
      %v3449 = vmul.f32 %v2986, %v2986
      %v3450 = vmul.f32 %v2276, %v2276
      %v3451 = vmul.f32 %v2988, %v2988
      %v3452 = vmul.f32 %v2279, %v2279
      %v3453 = vmul.f32 %v2991, %v2991
      %v3454 = vmul.f32 %v2281, %v2281
      %v3455 = vmul.f32 %v2993, %v2993
      %v3456 = vmul.f32 %v2284, %v2284
      %v3457 = vmul.f32 %v2996, %v2996
      %v3458 = vmul.f32 %v2286, %v2286
      %v3459 = vmul.f32 %v2998, %v2998
      %v3460 = vmul.f32 %v2289, %v2289
      %v3461 = vmul.f32 %v3001, %v3001
      %v3462 = vmul.f32 %v2291, %v2291
      %v3463 = vmul.f32 %v3003, %v3003
      %v3464 = vmul.f32 %v2294, %v2294
      %v3465 = vmul.f32 %v3006, %v3006
      %v3466 = vmul.f32 %v2296, %v2296
      %v3467 = vmul.f32 %v3008, %v3008
      %v3468 = vmul.f32 %v2299, %v2299
      %v3469 = vmul.f32 %v3011, %v3011
      %v3470 = vmul.f32 %v2301, %v2301
      %v3471 = vmul.f32 %v3013, %v3013
      %v3472 = vmul.f32 %v2304, %v2304
      %v3473 = vmul.f32 %v3016, %v3016
      %v3474 = vmul.f32 %v2306, %v2306
      %v3475 = vmul.f32 %v3018, %v3018
      %v3476 = vmul.f32 %v2309, %v2309
      %v3477 = vmul.f32 %v3021, %v3021
      %v3478 = vmul.f32 %v2311, %v2311
      %v3479 = vmul.f32 %v3023, %v3023
      %v3480 = vsel %vm3026, %v3417, 0.0
      %v3481 = vadd.f32 %v3416, %v3480
      %3482 = vadd.xlane.f32.xlu0 %v3481
      %v3483 = vpop.xlane.xlu0 %3482
      %v3484 = vsel %vm3026, %v3419, 0.0
      %v3485 = vadd.f32 %v3418, %v3484
      %3486 = vadd.xlane.f32.xlu0 %v3485
      %v3487 = vpop.xlane.xlu0 %3486
      %v3488 = vsel %vm3026, %v3421, 0.0
      %v3489 = vadd.f32 %v3420, %v3488
      %3490 = vadd.xlane.f32.xlu0 %v3489
      %v3491 = vpop.xlane.xlu0 %3490
      %v3492 = vsel %vm3026, %v3423, 0.0
      %v3493 = vadd.f32 %v3422, %v3492
      %3494 = vadd.xlane.f32.xlu0 %v3493
      %v3495 = vpop.xlane.xlu0 %3494
      %v3496 = vsel %vm3026, %v3425, 0.0
      %v3497 = vadd.f32 %v3424, %v3496
      %3498 = vadd.xlane.f32.xlu0 %v3497
      %v3499 = vpop.xlane.xlu0 %3498
      %v3500 = vsel %vm3026, %v3427, 0.0
      %v3501 = vadd.f32 %v3426, %v3500
      %3502 = vadd.xlane.f32.xlu0 %v3501
      %v3503 = vpop.xlane.xlu0 %3502
      %v3504 = vsel %vm3026, %v3429, 0.0
      %v3505 = vadd.f32 %v3428, %v3504
      %3506 = vadd.xlane.f32.xlu0 %v3505
      %v3507 = vpop.xlane.xlu0 %3506
      %v3508 = vsel %vm3026, %v3431, 0.0
      %v3509 = vadd.f32 %v3430, %v3508
      %3510 = vadd.xlane.f32.xlu0 %v3509
      %v3511 = vpop.xlane.xlu0 %3510
      %v3512 = vsel %vm3026, %v3433, 0.0
      %v3513 = vadd.f32 %v3432, %v3512
      %3514 = vadd.xlane.f32.xlu0 %v3513
      %v3515 = vpop.xlane.xlu0 %3514
      %v3516 = vsel %vm3026, %v3435, 0.0
      %v3517 = vadd.f32 %v3434, %v3516
      %3518 = vadd.xlane.f32.xlu0 %v3517
      %v3519 = vpop.xlane.xlu0 %3518
      %v3520 = vsel %vm3026, %v3437, 0.0
      %v3521 = vadd.f32 %v3436, %v3520
      %3522 = vadd.xlane.f32.xlu0 %v3521
      %v3523 = vpop.xlane.xlu0 %3522
      %v3524 = vsel %vm3026, %v3439, 0.0
      %v3525 = vadd.f32 %v3438, %v3524
      %3526 = vadd.xlane.f32.xlu0 %v3525
      %v3527 = vpop.xlane.xlu0 %3526
      %v3528 = vsel %vm3026, %v3441, 0.0
      %v3529 = vadd.f32 %v3440, %v3528
      %3530 = vadd.xlane.f32.xlu0 %v3529
      %v3531 = vpop.xlane.xlu0 %3530
      %v3532 = vsel %vm3026, %v3443, 0.0
      %v3533 = vadd.f32 %v3442, %v3532
      %3534 = vadd.xlane.f32.xlu0 %v3533
      %v3535 = vpop.xlane.xlu0 %3534
      %v3536 = vsel %vm3026, %v3445, 0.0
      %v3537 = vadd.f32 %v3444, %v3536
      %3538 = vadd.xlane.f32.xlu0 %v3537
      %v3539 = vpop.xlane.xlu0 %3538
      %v3540 = vsel %vm3026, %v3447, 0.0
      %v3541 = vadd.f32 %v3446, %v3540
      %3542 = vadd.xlane.f32.xlu0 %v3541
      %v3543 = vpop.xlane.xlu0 %3542
      %v3544 = vsel %vm3026, %v3449, 0.0
      %v3545 = vadd.f32 %v3448, %v3544
      %3546 = vadd.xlane.f32.xlu0 %v3545
      %v3547 = vpop.xlane.xlu0 %3546
      %v3548 = vsel %vm3026, %v3451, 0.0
      %v3549 = vadd.f32 %v3450, %v3548
      %3550 = vadd.xlane.f32.xlu0 %v3549
      %v3551 = vpop.xlane.xlu0 %3550
      %v3552 = vsel %vm3026, %v3453, 0.0
      %v3553 = vadd.f32 %v3452, %v3552
      %3554 = vadd.xlane.f32.xlu0 %v3553
      %v3555 = vpop.xlane.xlu0 %3554
      %v3556 = vsel %vm3026, %v3455, 0.0
      %v3557 = vadd.f32 %v3454, %v3556
      %3558 = vadd.xlane.f32.xlu0 %v3557
      %v3559 = vpop.xlane.xlu0 %3558
      %v3560 = vsel %vm3026, %v3457, 0.0
      %v3561 = vadd.f32 %v3456, %v3560
      %3562 = vadd.xlane.f32.xlu0 %v3561
      %v3563 = vpop.xlane.xlu0 %3562
      %v3564 = vsel %vm3026, %v3459, 0.0
      %v3565 = vadd.f32 %v3458, %v3564
      %3566 = vadd.xlane.f32.xlu0 %v3565
      %v3567 = vpop.xlane.xlu0 %3566
      %v3568 = vsel %vm3026, %v3461, 0.0
      %v3569 = vadd.f32 %v3460, %v3568
      %3570 = vadd.xlane.f32.xlu0 %v3569
      %v3571 = vpop.xlane.xlu0 %3570
      %v3572 = vsel %vm3026, %v3463, 0.0
      %v3573 = vadd.f32 %v3462, %v3572
      %3574 = vadd.xlane.f32.xlu0 %v3573
      %v3575 = vpop.xlane.xlu0 %3574
      %v3576 = vsel %vm3026, %v3465, 0.0
      %v3577 = vadd.f32 %v3464, %v3576
      %3578 = vadd.xlane.f32.xlu0 %v3577
      %v3579 = vpop.xlane.xlu0 %3578
      %v3580 = vsel %vm3026, %v3467, 0.0
      %v3581 = vadd.f32 %v3466, %v3580
      %3582 = vadd.xlane.f32.xlu0 %v3581
      %v3583 = vpop.xlane.xlu0 %3582
      %v3584 = vsel %vm3026, %v3469, 0.0
      %v3585 = vadd.f32 %v3468, %v3584
      %3586 = vadd.xlane.f32.xlu0 %v3585
      %v3587 = vpop.xlane.xlu0 %3586
      %v3588 = vsel %vm3026, %v3471, 0.0
      %v3589 = vadd.f32 %v3470, %v3588
      %3590 = vadd.xlane.f32.xlu0 %v3589
      %v3591 = vpop.xlane.xlu0 %3590
      %v3592 = vsel %vm3026, %v3473, 0.0
      %v3593 = vadd.f32 %v3472, %v3592
      %3594 = vadd.xlane.f32.xlu0 %v3593
      %v3595 = vpop.xlane.xlu0 %3594
      %v3596 = vsel %vm3026, %v3475, 0.0
      %v3597 = vadd.f32 %v3474, %v3596
      %3598 = vadd.xlane.f32.xlu0 %v3597
      %v3599 = vpop.xlane.xlu0 %3598
      %v3600 = vsel %vm3026, %v3477, 0.0
      %v3601 = vadd.f32 %v3476, %v3600
      %3602 = vadd.xlane.f32.xlu0 %v3601
      %v3603 = vpop.xlane.xlu0 %3602
      %v3604 = vsel %vm3026, %v3479, 0.0
      %v3605 = vadd.f32 %v3478, %v3604
      %3606 = vadd.xlane.f32.xlu0 %v3605
      %v3607 = vpop.xlane.xlu0 %3606
      %v3608 = vadd.f32 %v3384, %v3483
      %v3609 = vadd.f32 %v3385, %v3487
      %v3610 = vadd.f32 %v3386, %v3491
      %v3611 = vadd.f32 %v3387, %v3495
      %v3612 = vadd.f32 %v3388, %v3499
      %v3613 = vadd.f32 %v3389, %v3503
      %v3614 = vadd.f32 %v3390, %v3507
      %v3615 = vadd.f32 %v3391, %v3511
      %v3616 = vadd.f32 %v3392, %v3515
      %v3617 = vadd.f32 %v3393, %v3519
      %v3618 = vadd.f32 %v3394, %v3523
      %v3619 = vadd.f32 %v3395, %v3527
      %v3620 = vadd.f32 %v3396, %v3531
      %v3621 = vadd.f32 %v3397, %v3535
      %v3622 = vadd.f32 %v3398, %v3539
      %v3623 = vadd.f32 %v3399, %v3543
      %v3624 = vadd.f32 %v3400, %v3547
      %v3625 = vadd.f32 %v3401, %v3551
      %v3626 = vadd.f32 %v3402, %v3555
      %v3627 = vadd.f32 %v3403, %v3559
      %v3628 = vadd.f32 %v3404, %v3563
      %v3629 = vadd.f32 %v3405, %v3567
      %v3630 = vadd.f32 %v3406, %v3571
      %v3631 = vadd.f32 %v3407, %v3575
      %v3632 = vadd.f32 %v3408, %v3579
      %v3633 = vadd.f32 %v3409, %v3583
      %v3634 = vadd.f32 %v3410, %v3587
      %v3635 = vadd.f32 %v3411, %v3591
      %v3636 = vadd.f32 %v3412, %v3595
      %v3637 = vadd.f32 %v3413, %v3599
      %v3638 = vadd.f32 %v3414, %v3603
      %v3639 = vadd.f32 %v3415, %v3607
      %3640 = vst.msk [vmem:[%s4] sm:$0xff] %vm3351, %v3608
      %3641 = vst.msk [vmem:[%s4 + $0x8] sm:$0xff] %vm3351, %v3609
      %3642 = vst.msk [vmem:[%s4 + $0x10] sm:$0xff] %vm3351, %v3610
      %3643 = vst.msk [vmem:[%s4 + $0x18] sm:$0xff] %vm3351, %v3611
      %3644 = vst.msk [vmem:[%s4 + $0x20] sm:$0xff] %vm3351, %v3612
      %3645 = vst.msk [vmem:[%s4 + $0x28] sm:$0xff] %vm3351, %v3613
      %3646 = vst.msk [vmem:[%s4 + $0x30] sm:$0xff] %vm3351, %v3614
      %3647 = vst.msk [vmem:[%s4 + $0x38] sm:$0xff] %vm3351, %v3615
      %3648 = vst.msk [vmem:[%s4 + $0x40] sm:$0xff] %vm3351, %v3616
      %3649 = vst.msk [vmem:[%s4 + $0x48] sm:$0xff] %vm3351, %v3617
      %3650 = vst.msk [vmem:[%s4 + $0x50] sm:$0xff] %vm3351, %v3618
      %3651 = vst.msk [vmem:[%s4 + $0x58] sm:$0xff] %vm3351, %v3619
      %3652 = vst.msk [vmem:[%s4 + $0x60] sm:$0xff] %vm3351, %v3620
      %3653 = vst.msk [vmem:[%s4 + $0x68] sm:$0xff] %vm3351, %v3621
      %3654 = vst.msk [vmem:[%s4 + $0x70] sm:$0xff] %vm3351, %v3622
      %3655 = vst.msk [vmem:[%s4 + $0x78] sm:$0xff] %vm3351, %v3623
      %3656 = vst.msk [vmem:[%s4 + $0x80] sm:$0xff] %vm3351, %v3624
      %3657 = vst.msk [vmem:[%s4 + $0x88] sm:$0xff] %vm3351, %v3625
      %3658 = vst.msk [vmem:[%s4 + $0x90] sm:$0xff] %vm3351, %v3626
      %3659 = vst.msk [vmem:[%s4 + $0x98] sm:$0xff] %vm3351, %v3627
      %3660 = vst.msk [vmem:[%s4 + $0xa0] sm:$0xff] %vm3351, %v3628
      %3661 = vst.msk [vmem:[%s4 + $0xa8] sm:$0xff] %vm3351, %v3629
      %3662 = vst.msk [vmem:[%s4 + $0xb0] sm:$0xff] %vm3351, %v3630
      %3663 = vst.msk [vmem:[%s4 + $0xb8] sm:$0xff] %vm3351, %v3631
      %3664 = vst.msk [vmem:[%s4 + $0xc0] sm:$0xff] %vm3351, %v3632
      %3665 = vst.msk [vmem:[%s4 + $0xc8] sm:$0xff] %vm3351, %v3633
      %3666 = vst.msk [vmem:[%s4 + $0xd0] sm:$0xff] %vm3351, %v3634
      %3667 = vst.msk [vmem:[%s4 + $0xd8] sm:$0xff] %vm3351, %v3635
      %3668 = vst.msk [vmem:[%s4 + $0xe0] sm:$0xff] %vm3351, %v3636
      %3669 = vst.msk [vmem:[%s4 + $0xe8] sm:$0xff] %vm3351, %v3637
      %3670 = vst.msk [vmem:[%s4 + $0xf0] sm:$0xff] %vm3351, %v3638
      %3671 = vst.msk [vmem:[%s4 + $0xf8] sm:$0xff] %vm3351, %v3639
      %p3672 = scmp.lt.s32.totalorder %s16, 1
      %s3673 = scalar_select %p3672, %s16, 1
      %s3674 = smul.addr %s3673, 64
      %s3675 = smul.addr %s3674, 8
      %s3676 = scalar_lea.vmem %s2, %s3675
      // Predicated region
      $region33: #{tpu_custom_call.1} parent=27 // pred_check
        %p3677 = pneg %p81
      $region34: #{tpu_custom_call.1} parent=27 // pred_check_branch
        %3679 = sbr.rel (%p3677) target = $region36
      $region35: #{tpu_custom_call.1} parent=27 // pred_region
        _
      $region36: #{tpu_custom_call.1} parent=27 // pred_fallthru
        _
      // Predicated region
      $region37: #{tpu_custom_call.1} parent=27 // pred_check
        %p3680 = pneg %p102
      $region38: #{tpu_custom_call.1} parent=27 // pred_check_branch
        %3682 = sbr.rel (%p3680) target = $region40
      $region39: #{tpu_custom_call.1} parent=27 // pred_region
        _
      $region40: #{tpu_custom_call.1} parent=27 // pred_fallthru
        _
      // Predicated region
      $region41: #{tpu_custom_call.1} parent=27 // pred_check
        %p3683 = pneg %p123
      $region42: #{tpu_custom_call.1} parent=27 // pred_check_branch
        %3685 = sbr.rel (%p3683) target = $region44
      $region43: #{tpu_custom_call.1} parent=27 // pred_region
        _
      $region44: #{tpu_custom_call.1} parent=27 // pred_fallthru
        _
      // Predicated region
      $region45: #{tpu_custom_call.1} parent=27 // pred_check
        %p3686 = pneg %p102
      $region46: #{tpu_custom_call.1} parent=27 // pred_check_branch
        %3688 = sbr.rel (%p3686) target = $region48
      $region47: #{tpu_custom_call.1} parent=27 // pred_region
        _
      $region48: #{tpu_custom_call.1} parent=27 // pred_fallthru
        _
      // Predicated region
      $region49: #{tpu_custom_call.1} parent=27 // pred_check
        %p3689 = pneg %p123
      $region50: #{tpu_custom_call.1} parent=27 // pred_check_branch
        %3691 = sbr.rel (%p3689) target = $region52
      $region51: #{tpu_custom_call.1} parent=27 // pred_region
        _
      $region52: #{tpu_custom_call.1} parent=27 // pred_fallthru
        _
    $region28: #{tpu_custom_call.1} parent=5 // pred_fallthru
      _
    %p3692 = scmp.le.s32.totalorder 2, %s11
    // Predicated region
    $region53: #{tpu_custom_call.1} parent=5 // pred_check
      %p3693 = pneg %p3692
    $region54: #{tpu_custom_call.1} parent=5 // pred_check_branch
      %3695 = sbr.rel (%p3693) target = $region56
    $region55: #{tpu_custom_call.1} parent=5 // pred_region
      %s3696 = ssub.s32 %s11, 2
      // Predicated region
      $region57: #{tpu_custom_call.1} parent=55 // pred_check
        %p3697 = pneg %p87
      $region58: #{tpu_custom_call.1} parent=55 // pred_check_branch
        %3699 = sbr.rel (%p3697) target = $region60
      $region59: #{tpu_custom_call.1} parent=55 // pred_region
        %p3700 = scmp.lt.s32.totalorder %s17, 1
        %s3701 = scalar_select %p3700, %s17, 1
        %s3702 = smul.addr %s3701, 64
        %s3703 = smul.addr %s3702, 8
        %s3704 = scalar_lea.vmem %s2, %s3703
      $region60: #{tpu_custom_call.1} parent=55 // pred_fallthru
        _
    $region56: #{tpu_custom_call.1} parent=5 // pred_fallthru
      _
  $region6: #{tpu_custom_call.1} parent=0 // loop_footer
    %s15 = sadd.s32 1, %s11
  $region7: #{tpu_custom_call.1} parent=0 // loop_footer_branch
    %10 = sbr.rel target = $region3
  $region8: #{tpu_custom_call.1} parent=0 // loop_exit
    _

</llo_original>
